<compile_context>
chip_gen: v5e
topology: v5e:2x2
jax: 0.10.0
libtpu: 0.0.40
codegen_flags: <defaults>
</compile_context>

<pallas_src>
import numpy as np
import jax
import jax.numpy as jnp
from jax import lax
from jax.experimental import pallas as pl
from jax.experimental.pallas import tpu as pltpu


# --------------------------------------------------------------------------
# Fused decoder kernel (bidirectional multi-layer LSTM + Linear)
# --------------------------------------------------------------------------
def make_decoder_kernel(num_layers, T, Bp, H):
    G = 8 * H  # packed gate width: 2 directions x 4 gates x H

    def kernel(*refs):
        x_ref = refs[0]                              # (T*Bp, D0)
        layer_refs = refs[1:1 + 3 * num_layers]
        fc_w_ref = refs[1 + 3 * num_layers]          # (2H, H)
        fc_b_ref = refs[2 + 3 * num_layers]          # (1, H)
        out_ref = refs[3 + 3 * num_layers]           # (T*Bp, H)
        hs_ref = refs[4 + 3 * num_layers]            # scratch (T, Bp, 2H): [fwd|bwd] hiddens
        gxs_ref = refs[5 + 3 * num_layers]           # scratch (T, Bp, 8H): dir-selected proj

        # ---- lane masks & affine constants, hoisted out of all loops ----
        lane = lax.broadcasted_iota(jnp.int32, (Bp, G), 1)
        fwd_lane = lane < H                          # forward-direction lanes
        for g in range(1, 4):
            fwd_lane = fwd_lane | ((lane >= 2 * g * H) & (lane < (2 * g + 1) * H))
        g_lane = (lane >= 4 * H) & (lane < 6 * H)    # "g" (cell candidate) lanes
        # sigmoid(x) = 0.5*tanh(x/2) + 0.5 ; tanh lanes use scale 1 / offset 0
        scale = jnp.where(g_lane, 1.0, 0.5).astype(jnp.float32)
        offset = jnp.where(g_lane, 0.0, 0.5).astype(jnp.float32)

        for l in range(num_layers):
            wih = layer_refs[3 * l][...]             # (D_l, 8H)
            whh = layer_refs[3 * l + 1][...]         # (2H, 8H) block-diag per direction
            bias = layer_refs[3 * l + 2][...]        # (1, 8H)

            # Hoisted input projection: one matmul per layer covering the
            # whole sequence and both directions, bias folded in.
            if l == 0:
                src = x_ref[...]                     # (T*Bp, D0)
            else:
                src = hs_ref[...].reshape(T * Bp, 2 * H)
            gx = jnp.dot(src, wih, preferred_element_type=jnp.float32) + bias

            # Direction select hoisted off the recurrence: forward lanes take
            # timestep t, backward lanes take timestep T-1-t.  Tile-aligned
            # (Bp=8) slices, full-width unmasked scratch stores.
            for t in range(T):
                tb = T - 1 - t
                gxs_ref[t] = jnp.where(fwd_lane,
                                       gx[t * Bp:(t + 1) * Bp, :],
                                       gx[tb * Bp:(tb + 1) * Bp, :])

            h = jnp.zeros((Bp, 2 * H), jnp.float32)  # [h_fwd | h_bwd]
            c = jnp.zeros((Bp, 2 * H), jnp.float32)
            for t in range(T):                       # static -> fully unrolled
                gates = gxs_ref[t] + jnp.dot(h, whh,
                                             preferred_element_type=jnp.float32)
                # single transcendental pass (tanh) for all four gates
                act = jnp.tanh(gates * scale) * scale + offset
                i_g = act[:, 0:2 * H]
                f_g = act[:, 2 * H:4 * H]
                g_g = act[:, 4 * H:6 * H]
                o_g = act[:, 6 * H:8 * H]

                c = f_g * c + i_g * g_g              # both directions at once
                h = o_g * jnp.tanh(c)

                hs_ref[t, :, 0:H] = h[:, 0:H]        # fwd hidden -> time t
                hs_ref[T - 1 - t, :, H:2 * H] = h[:, H:2 * H]  # bwd -> time T-1-t

        # Fused FC over the flattened hidden-state scratch: one matmul.
        prev = hs_ref[...].reshape(T * Bp, 2 * H)
        y = (jnp.dot(prev, fc_w_ref[...], preferred_element_type=jnp.float32)
             + fc_b_ref[...])                        # (T*Bp, H)
        out_ref[...] = y

    return kernel


# --------------------------------------------------------------------------
# Weight packing: interleaved-per-gate column layout + block-diagonal W_hh
# --------------------------------------------------------------------------
def pack_bilstm_layer(p_f, p_b, H):
    """p_f/p_b: dicts with 'wih' (4H, D), 'whh' (4H, H), 'bias' (4H,) (=b_ih+b_hh)."""
    wih_fT = np.asarray(p_f["wih"]).T            # (D, 4H), columns [i f g o]
    wih_bT = np.asarray(p_b["wih"]).T
    whh_fT = np.asarray(p_f["whh"]).T            # (H, 4H)
    whh_bT = np.asarray(p_b["whh"]).T
    b_f = np.asarray(p_f["bias"])
    b_b = np.asarray(p_b["bias"])

    wih_cols, bias_cols = [], []
    whh_packed = np.zeros((2 * H, 8 * H), np.float32)
    for g in range(4):
        wih_cols.append(wih_fT[:, g * H:(g + 1) * H])
        wih_cols.append(wih_bT[:, g * H:(g + 1) * H])
        bias_cols.append(b_f[g * H:(g + 1) * H])
        bias_cols.append(b_b[g * H:(g + 1) * H])
        whh_packed[0:H, (2 * g) * H:(2 * g + 1) * H] = whh_fT[:, g * H:(g + 1) * H]
        whh_packed[H:2 * H, (2 * g + 1) * H:(2 * g + 2) * H] = whh_bT[:, g * H:(g + 1) * H]

    wih_packed = np.concatenate(wih_cols, axis=1).astype(np.float32)   # (D, 8H)
    bias_packed = np.concatenate(bias_cols).reshape(1, 8 * H).astype(np.float32)
    return (jnp.asarray(wih_packed), jnp.asarray(whh_packed), jnp.asarray(bias_packed))


# --------------------------------------------------------------------------
# Parameter init (deterministic; mirrors Decoder.__init__ shapes)
# --------------------------------------------------------------------------
def init_decoder_params(key, hidden_size, output_size, num_layers):
    H = output_size
    in0 = hidden_size * 2
    raw_layers = []
    for layer in range(num_layers):
        d_in = in0 if layer == 0 else 2 * H
        dirs = []
        for _direction in range(2):
            key, k1, k2, k3, k4 = jax.random.split(key, 5)
            if layer == 0:
                std_ih = np.sqrt(2.0) * np.sqrt(2.0 / (4 * H + d_in))  # xavier, gain sqrt(2)
                std_hh = np.sqrt(2.0) * np.sqrt(2.0 / (4 * H + H))
            else:
                std_ih = 1.0 / np.sqrt(H)
                std_hh = 1.0 / np.sqrt(H)
            wih = jax.random.normal(k1, (4 * H, d_in), jnp.float32) * std_ih
            whh = jax.random.normal(k2, (4 * H, H), jnp.float32) * std_hh
            bih = jax.random.normal(k3, (4 * H,), jnp.float32) * 0.1
            bhh = jax.random.normal(k4, (4 * H,), jnp.float32) * 0.1
            dirs.append({"wih": wih, "whh": whh, "bias": bih + bhh})
        raw_layers.append(dirs)
    key, kw, kb = jax.random.split(key, 3)
    fc_w = jax.random.normal(kw, (H, 2 * H), jnp.float32) * (1.0 / np.sqrt(2 * H))
    fc_b = jax.random.normal(kb, (H,), jnp.float32) * 0.1
    packed = [pack_bilstm_layer(d[0], d[1], H) for d in raw_layers]
    return {
        "raw": raw_layers,                      # per-direction weights (reference path)
        "packed": packed,                       # packed weights (Pallas kernel)
        "fc_w_t": fc_w.T,                       # (2H, H)
        "fc_b": fc_b.reshape(1, H),
    }


# --------------------------------------------------------------------------
# Pallas forward (single fused kernel) and pure-JAX reference
# --------------------------------------------------------------------------
def decoder_forward_pallas(x_btf, params, output_size):
    B, T, D0 = x_btf.shape
    H = output_size
    packed = params["packed"]
    num_layers = len(packed)

    # Pad batch to a full f32 sublane tile; all layout plumbing done in XLA.
    Bp = max(8, ((B + 7) // 8) * 8)
    x_p = jnp.zeros((Bp, T, D0), jnp.float32).at[:B].set(x_btf)
    x_flat = jnp.transpose(x_p, (1, 0, 2)).reshape(T * Bp, D0)   # (T*Bp, D0)

    kernel = make_decoder_kernel(num_layers, T, Bp, H)

    inputs = [x_flat]
    in_specs = [pl.BlockSpec((T * Bp, D0), lambda i: (0, 0))]
    for (wih_p, whh_p, b_p) in packed:
        inputs += [wih_p, whh_p, b_p]
        in_specs += [
            pl.BlockSpec(wih_p.shape, lambda i: (0, 0)),
            pl.BlockSpec(whh_p.shape, lambda i: (0, 0)),
            pl.BlockSpec(b_p.shape, lambda i: (0, 0)),
        ]
    inputs += [params["fc_w_t"], params["fc_b"]]
    in_specs += [
        pl.BlockSpec(params["fc_w_t"].shape, lambda i: (0, 0)),
        pl.BlockSpec(params["fc_b"].shape, lambda i: (0, 0)),
    ]

    # Advisory cost estimate (tiny, latency-dominated kernel).
    flops = 0
    for l in range(num_layers):
        d_in = D0 if l == 0 else 2 * H
        flops += 2 * T * Bp * d_in * 8 * H          # hoisted input projection
        flops += 2 * T * Bp * 2 * H * 8 * H         # recurrent matmuls
    flops += 2 * T * Bp * 2 * H * H                 # fused FC
    transcendentals = num_layers * T * (Bp * 8 * H + Bp * 2 * H)
    bytes_accessed = sum(int(np.prod(a.shape)) * 4 for a in inputs) + T * Bp * H * 4
    cost = pl.CostEstimate(flops=flops, transcendentals=transcendentals,
                           bytes_accessed=bytes_accessed)

    out_flat = pl.pallas_call(
        kernel,
        out_shape=jax.ShapeDtypeStruct((T * Bp, H), jnp.float32),
        grid=(1,),
        in_specs=in_specs,
        out_specs=pl.BlockSpec((T * Bp, H), lambda i: (0, 0)),
        scratch_shapes=[
            pltpu.VMEM((T, Bp, 2 * H), jnp.float32),   # hidden-state scratch
            pltpu.VMEM((T, Bp, 8 * H), jnp.float32),   # direction-selected projections
        ],
        compiler_params=pltpu.CompilerParams(dimension_semantics=("arbitrary",)),
        cost_estimate=cost,
    )(*inputs)

    out = out_flat.reshape(T, Bp, H)[:, :B, :]       # drop batch padding
    return jnp.transpose(out, (1, 0, 2))             # back to (B, T, H)


def _ref_lstm_dir(x_tmajor, wih, whh, bias, H):
    T, B, _ = x_tmajor.shape
    wih_t, whh_t, b2 = wih.T, whh.T, bias.reshape(1, -1)

    def step(carry, x_t):
        h, c = carry
        gates = x_t @ wih_t + h @ whh_t + b2
        i_g = jax.nn.sigmoid(gates[:, 0:H])
        f_g = jax.nn.sigmoid(gates[:, H:2 * H])
        g_g = jnp.tanh(gates[:, 2 * H:3 * H])
        o_g = jax.nn.sigmoid(gates[:, 3 * H:4 * H])
        c = f_g * c + i_g * g_g
        h = o_g * jnp.tanh(c)
        return (h, c), h

    init = (jnp.zeros((B, H), jnp.float32), jnp.zeros((B, H), jnp.float32))
    _, hs = lax.scan(step, init, x_tmajor)
    return hs


def decoder_forward_ref(x_btf, params, output_size):
    B, T, _ = x_btf.shape
    H = output_size
    h = jnp.transpose(x_btf, (1, 0, 2))
    for p_f, p_b in params["raw"]:
        fwd = _ref_lstm_dir(h, p_f["wih"], p_f["whh"], p_f["bias"], H)
        bwd = _ref_lstm_dir(h[::-1], p_b["wih"], p_b["whh"], p_b["bias"], H)[::-1]
        h = jnp.concatenate([fwd, bwd], axis=-1)
    y = h.reshape(T * B, 2 * H) @ params["fc_w_t"] + params["fc_b"]
    return jnp.transpose(y.reshape(T, B, H), (1, 0, 2))


# --------------------------------------------------------------------------
if __name__ == "__main__":
    hidden_size = 16     # LSTM input feature dim = hidden_size * 2 = 32
    output_size = 32     # LSTM hidden size / fc output size
    num_layers = 2
    B, T = 4, 8

    key = jax.random.PRNGKey(0)
    key, kx = jax.random.split(key)
    encoded_input = jax.random.normal(kx, (B, T, hidden_size * 2), jnp.float32)

    params = init_decoder_params(key, hidden_size, output_size, num_layers)

    fwd_fn = jax.jit(lambda x, p: decoder_forward_pallas(x, p, output_size))
    out = jax.block_until_ready(fwd_fn(encoded_input, params))
    assert out.shape == (B, T, output_size), out.shape

    ref = decoder_forward_ref(encoded_input, params, output_size)
    np.testing.assert_allclose(np.asarray(out), np.asarray(ref), rtol=2e-3, atol=2e-3)

    print("KERNEL_OK")
</pallas_src>

<mosaic_0001>
module attributes {stable_mosaic.version = 11 : i64} {
  func.func @kernel(%arg0: i32, %arg1: memref<64x32xf32, #tpu.memory_space<vmem>>, %arg2: memref<32x256xf32, #tpu.memory_space<vmem>>, %arg3: memref<64x256xf32, #tpu.memory_space<vmem>>, %arg4: memref<1x256xf32, #tpu.memory_space<vmem>>, %arg5: memref<64x256xf32, #tpu.memory_space<vmem>>, %arg6: memref<64x256xf32, #tpu.memory_space<vmem>>, %arg7: memref<1x256xf32, #tpu.memory_space<vmem>>, %arg8: memref<64x32xf32, #tpu.memory_space<vmem>>, %arg9: memref<1x32xf32, #tpu.memory_space<vmem>>, %arg10: memref<64x32xf32, #tpu.memory_space<vmem>>, %arg11: memref<8x8x64xf32, #tpu.memory_space<vmem>>, %arg12: memref<8x8x256xf32, #tpu.memory_space<vmem>>) attributes {dimension_semantics = [#tpu.dimension_semantics<arbitrary>], iteration_bounds = array<i64: 1>, scalar_prefetch = 0 : i64, scratch_operands = 2 : i64, tpu.core_type = #tpu.core_type<tc>, window_params = [{pipeline_mode = #tpu.pipeline_mode<synchronous>, transform_indices = @transform_0, window_bounds = array<i64: 64, 32>}, {pipeline_mode = #tpu.pipeline_mode<synchronous>, transform_indices = @transform_1, window_bounds = array<i64: 32, 256>}, {pipeline_mode = #tpu.pipeline_mode<synchronous>, transform_indices = @transform_2, window_bounds = array<i64: 64, 256>}, {pipeline_mode = #tpu.pipeline_mode<synchronous>, transform_indices = @transform_3, window_bounds = array<i64: 1, 256>}, {pipeline_mode = #tpu.pipeline_mode<synchronous>, transform_indices = @transform_4, window_bounds = array<i64: 64, 256>}, {pipeline_mode = #tpu.pipeline_mode<synchronous>, transform_indices = @transform_5, window_bounds = array<i64: 64, 256>}, {pipeline_mode = #tpu.pipeline_mode<synchronous>, transform_indices = @transform_6, window_bounds = array<i64: 1, 256>}, {pipeline_mode = #tpu.pipeline_mode<synchronous>, transform_indices = @transform_7, window_bounds = array<i64: 64, 32>}, {pipeline_mode = #tpu.pipeline_mode<synchronous>, transform_indices = @transform_8, window_bounds = array<i64: 1, 32>}, {pipeline_mode = #tpu.pipeline_mode<synchronous>, transform_indices = @transform_9, window_bounds = array<i64: 64, 32>}]} {
    %0 = tpu.iota {dimensions = array<i32: 1>} : vector<8x256xi32>
    %c32_i32 = arith.constant 32 : i32
    %1 = vector.broadcast %c32_i32 : i32 to vector<8x256xi32>
    %2 = arith.cmpi slt, %0, %1 : vector<8x256xi32>
    %c64_i32 = arith.constant 64 : i32
    %3 = vector.broadcast %c64_i32 : i32 to vector<8x256xi32>
    %4 = arith.cmpi sge, %0, %3 : vector<8x256xi32>
    %c96_i32 = arith.constant 96 : i32
    %5 = vector.broadcast %c96_i32 : i32 to vector<8x256xi32>
    %6 = arith.cmpi slt, %0, %5 : vector<8x256xi32>
    %7 = arith.andi %4, %6 : vector<8x256xi1>
    %8 = arith.ori %2, %7 : vector<8x256xi1>
    %c128_i32 = arith.constant 128 : i32
    %9 = vector.broadcast %c128_i32 : i32 to vector<8x256xi32>
    %10 = arith.cmpi sge, %0, %9 : vector<8x256xi32>
    %c160_i32 = arith.constant 160 : i32
    %11 = vector.broadcast %c160_i32 : i32 to vector<8x256xi32>
    %12 = arith.cmpi slt, %0, %11 : vector<8x256xi32>
    %13 = arith.andi %10, %12 : vector<8x256xi1>
    %14 = arith.ori %8, %13 : vector<8x256xi1>
    %c192_i32 = arith.constant 192 : i32
    %15 = vector.broadcast %c192_i32 : i32 to vector<8x256xi32>
    %16 = arith.cmpi sge, %0, %15 : vector<8x256xi32>
    %c224_i32 = arith.constant 224 : i32
    %17 = vector.broadcast %c224_i32 : i32 to vector<8x256xi32>
    %18 = arith.cmpi slt, %0, %17 : vector<8x256xi32>
    %19 = arith.andi %16, %18 : vector<8x256xi1>
    %20 = arith.ori %14, %19 : vector<8x256xi1>
    %c128_i32_0 = arith.constant 128 : i32
    %21 = vector.broadcast %c128_i32_0 : i32 to vector<8x256xi32>
    %22 = arith.cmpi sge, %0, %21 : vector<8x256xi32>
    %c192_i32_1 = arith.constant 192 : i32
    %23 = vector.broadcast %c192_i32_1 : i32 to vector<8x256xi32>
    %24 = arith.cmpi slt, %0, %23 : vector<8x256xi32>
    %25 = arith.andi %22, %24 : vector<8x256xi1>
    %cst = arith.constant 1.000000e+00 : f32
    %cst_2 = arith.constant 5.000000e-01 : f32
    %26 = vector.broadcast %cst : f32 to vector<8x256xf32>
    %27 = vector.broadcast %cst_2 : f32 to vector<8x256xf32>
    %28 = arith.select %25, %26, %27 : vector<8x256xi1>, vector<8x256xf32>
    %cst_3 = arith.constant 0.000000e+00 : f32
    %cst_4 = arith.constant 5.000000e-01 : f32
    %29 = vector.broadcast %cst_3 : f32 to vector<8x256xf32>
    %30 = vector.broadcast %cst_4 : f32 to vector<8x256xf32>
    %31 = arith.select %25, %29, %30 : vector<8x256xi1>, vector<8x256xf32>
    %c0 = arith.constant 0 : index
    %c0_5 = arith.constant 0 : index
    %32 = vector.load %arg2[%c0, %c0_5] : memref<32x256xf32, #tpu.memory_space<vmem>>, vector<32x256xf32>
    %c0_6 = arith.constant 0 : index
    %c0_7 = arith.constant 0 : index
    %33 = vector.load %arg3[%c0_6, %c0_7] : memref<64x256xf32, #tpu.memory_space<vmem>>, vector<64x256xf32>
    %c0_8 = arith.constant 0 : index
    %c0_9 = arith.constant 0 : index
    %34 = vector.load %arg4[%c0_8, %c0_9] : memref<1x256xf32, #tpu.memory_space<vmem>>, vector<1x256xf32>
    %c0_10 = arith.constant 0 : index
    %c0_11 = arith.constant 0 : index
    %35 = vector.load %arg1[%c0_10, %c0_11] : memref<64x32xf32, #tpu.memory_space<vmem>>, vector<64x32xf32>
    %cst_12 = arith.constant dense<0.000000e+00> : vector<64x256xf32>
    %36 = tpu.matmul %35, %32, %cst_12 {dimension_numbers = #tpu.dot_dimension_numbers<[1], [0], [0], [1], [0, 0, 1, 1], [], []>} : vector<64x32xf32>, vector<32x256xf32>, vector<64x256xf32> -> vector<64x256xf32>
    %37 = vector.broadcast %34 : vector<1x256xf32> to vector<64x256xf32>
    %38 = arith.addf %36, %37 : vector<64x256xf32>
    %39 = vector.extract_strided_slice %38 {offsets = [0, 0], sizes = [8, 256], strides = [1, 1]} : vector<64x256xf32> to vector<8x256xf32>
    %40 = vector.extract_strided_slice %38 {offsets = [56, 0], sizes = [8, 256], strides = [1, 1]} : vector<64x256xf32> to vector<8x256xf32>
    %41 = arith.select %20, %39, %40 : vector<8x256xi1>, vector<8x256xf32>
    %c0_13 = arith.constant 0 : index
    %c0_14 = arith.constant 0 : index
    %c0_15 = arith.constant 0 : index
    %42 = vector.load %arg12[%c0_13, %c0_14, %c0_15] : memref<8x8x256xf32, #tpu.memory_space<vmem>>, vector<1x8x256xf32>
    %43 = vector.shape_cast %42 : vector<1x8x256xf32> to vector<8x256xf32>
    %44 = vector.shape_cast %41 : vector<8x256xf32> to vector<1x8x256xf32>
    tpu.vector_store %arg12[%c0_13, %c0_14, %c0_15], %44 {strides = array<i32>} : memref<8x8x256xf32, #tpu.memory_space<vmem>>, vector<1x8x256xf32>,
    %45 = vector.extract_strided_slice %38 {offsets = [8, 0], sizes = [8, 256], strides = [1, 1]} : vector<64x256xf32> to vector<8x256xf32>
    %46 = vector.extract_strided_slice %38 {offsets = [48, 0], sizes = [8, 256], strides = [1, 1]} : vector<64x256xf32> to vector<8x256xf32>
    %47 = arith.select %20, %45, %46 : vector<8x256xi1>, vector<8x256xf32>
    %c1 = arith.constant 1 : index
    %c0_16 = arith.constant 0 : index
    %c0_17 = arith.constant 0 : index
    %48 = vector.load %arg12[%c1, %c0_16, %c0_17] : memref<8x8x256xf32, #tpu.memory_space<vmem>>, vector<1x8x256xf32>
    %49 = vector.shape_cast %48 : vector<1x8x256xf32> to vector<8x256xf32>
    %50 = vector.shape_cast %47 : vector<8x256xf32> to vector<1x8x256xf32>
    tpu.vector_store %arg12[%c1, %c0_16, %c0_17], %50 {strides = array<i32>} : memref<8x8x256xf32, #tpu.memory_space<vmem>>, vector<1x8x256xf32>,
    %51 = vector.extract_strided_slice %38 {offsets = [16, 0], sizes = [8, 256], strides = [1, 1]} : vector<64x256xf32> to vector<8x256xf32>
    %52 = vector.extract_strided_slice %38 {offsets = [40, 0], sizes = [8, 256], strides = [1, 1]} : vector<64x256xf32> to vector<8x256xf32>
    %53 = arith.select %20, %51, %52 : vector<8x256xi1>, vector<8x256xf32>
    %c2 = arith.constant 2 : index
    %c0_18 = arith.constant 0 : index
    %c0_19 = arith.constant 0 : index
    %54 = vector.load %arg12[%c2, %c0_18, %c0_19] : memref<8x8x256xf32, #tpu.memory_space<vmem>>, vector<1x8x256xf32>
    %55 = vector.shape_cast %54 : vector<1x8x256xf32> to vector<8x256xf32>
    %56 = vector.shape_cast %53 : vector<8x256xf32> to vector<1x8x256xf32>
    tpu.vector_store %arg12[%c2, %c0_18, %c0_19], %56 {strides = array<i32>} : memref<8x8x256xf32, #tpu.memory_space<vmem>>, vector<1x8x256xf32>,
    %57 = vector.extract_strided_slice %38 {offsets = [24, 0], sizes = [8, 256], strides = [1, 1]} : vector<64x256xf32> to vector<8x256xf32>
    %58 = vector.extract_strided_slice %38 {offsets = [32, 0], sizes = [8, 256], strides = [1, 1]} : vector<64x256xf32> to vector<8x256xf32>
    %59 = arith.select %20, %57, %58 : vector<8x256xi1>, vector<8x256xf32>
    %c3 = arith.constant 3 : index
    %c0_20 = arith.constant 0 : index
    %c0_21 = arith.constant 0 : index
    %60 = vector.load %arg12[%c3, %c0_20, %c0_21] : memref<8x8x256xf32, #tpu.memory_space<vmem>>, vector<1x8x256xf32>
    %61 = vector.shape_cast %60 : vector<1x8x256xf32> to vector<8x256xf32>
    %62 = vector.shape_cast %59 : vector<8x256xf32> to vector<1x8x256xf32>
    tpu.vector_store %arg12[%c3, %c0_20, %c0_21], %62 {strides = array<i32>} : memref<8x8x256xf32, #tpu.memory_space<vmem>>, vector<1x8x256xf32>,
    %63 = vector.extract_strided_slice %38 {offsets = [32, 0], sizes = [8, 256], strides = [1, 1]} : vector<64x256xf32> to vector<8x256xf32>
    %64 = vector.extract_strided_slice %38 {offsets = [24, 0], sizes = [8, 256], strides = [1, 1]} : vector<64x256xf32> to vector<8x256xf32>
    %65 = arith.select %20, %63, %64 : vector<8x256xi1>, vector<8x256xf32>
    %c4 = arith.constant 4 : index
    %c0_22 = arith.constant 0 : index
    %c0_23 = arith.constant 0 : index
    %66 = vector.load %arg12[%c4, %c0_22, %c0_23] : memref<8x8x256xf32, #tpu.memory_space<vmem>>, vector<1x8x256xf32>
    %67 = vector.shape_cast %66 : vector<1x8x256xf32> to vector<8x256xf32>
    %68 = vector.shape_cast %65 : vector<8x256xf32> to vector<1x8x256xf32>
    tpu.vector_store %arg12[%c4, %c0_22, %c0_23], %68 {strides = array<i32>} : memref<8x8x256xf32, #tpu.memory_space<vmem>>, vector<1x8x256xf32>,
    %69 = vector.extract_strided_slice %38 {offsets = [40, 0], sizes = [8, 256], strides = [1, 1]} : vector<64x256xf32> to vector<8x256xf32>
    %70 = vector.extract_strided_slice %38 {offsets = [16, 0], sizes = [8, 256], strides = [1, 1]} : vector<64x256xf32> to vector<8x256xf32>
    %71 = arith.select %20, %69, %70 : vector<8x256xi1>, vector<8x256xf32>
    %c5 = arith.constant 5 : index
    %c0_24 = arith.constant 0 : index
    %c0_25 = arith.constant 0 : index
    %72 = vector.load %arg12[%c5, %c0_24, %c0_25] : memref<8x8x256xf32, #tpu.memory_space<vmem>>, vector<1x8x256xf32>
    %73 = vector.shape_cast %72 : vector<1x8x256xf32> to vector<8x256xf32>
    %74 = vector.shape_cast %71 : vector<8x256xf32> to vector<1x8x256xf32>
    tpu.vector_store %arg12[%c5, %c0_24, %c0_25], %74 {strides = array<i32>} : memref<8x8x256xf32, #tpu.memory_space<vmem>>, vector<1x8x256xf32>,
    %75 = vector.extract_strided_slice %38 {offsets = [48, 0], sizes = [8, 256], strides = [1, 1]} : vector<64x256xf32> to vector<8x256xf32>
    %76 = vector.extract_strided_slice %38 {offsets = [8, 0], sizes = [8, 256], strides = [1, 1]} : vector<64x256xf32> to vector<8x256xf32>
    %77 = arith.select %20, %75, %76 : vector<8x256xi1>, vector<8x256xf32>
    %c6 = arith.constant 6 : index
    %c0_26 = arith.constant 0 : index
    %c0_27 = arith.constant 0 : index
    %78 = vector.load %arg12[%c6, %c0_26, %c0_27] : memref<8x8x256xf32, #tpu.memory_space<vmem>>, vector<1x8x256xf32>
    %79 = vector.shape_cast %78 : vector<1x8x256xf32> to vector<8x256xf32>
    %80 = vector.shape_cast %77 : vector<8x256xf32> to vector<1x8x256xf32>
    tpu.vector_store %arg12[%c6, %c0_26, %c0_27], %80 {strides = array<i32>} : memref<8x8x256xf32, #tpu.memory_space<vmem>>, vector<1x8x256xf32>,
    %81 = vector.extract_strided_slice %38 {offsets = [56, 0], sizes = [8, 256], strides = [1, 1]} : vector<64x256xf32> to vector<8x256xf32>
    %82 = vector.extract_strided_slice %38 {offsets = [0, 0], sizes = [8, 256], strides = [1, 1]} : vector<64x256xf32> to vector<8x256xf32>
    %83 = arith.select %20, %81, %82 : vector<8x256xi1>, vector<8x256xf32>
    %c7 = arith.constant 7 : index
    %c0_28 = arith.constant 0 : index
    %c0_29 = arith.constant 0 : index
    %84 = vector.load %arg12[%c7, %c0_28, %c0_29] : memref<8x8x256xf32, #tpu.memory_space<vmem>>, vector<1x8x256xf32>
    %85 = vector.shape_cast %84 : vector<1x8x256xf32> to vector<8x256xf32>
    %86 = vector.shape_cast %83 : vector<8x256xf32> to vector<1x8x256xf32>
    tpu.vector_store %arg12[%c7, %c0_28, %c0_29], %86 {strides = array<i32>} : memref<8x8x256xf32, #tpu.memory_space<vmem>>, vector<1x8x256xf32>,
    %cst_30 = arith.constant 0.000000e+00 : f32
    %87 = vector.broadcast %cst_30 : f32 to vector<8x64xf32>
    %cst_31 = arith.constant 0.000000e+00 : f32
    %88 = vector.broadcast %cst_31 : f32 to vector<8x64xf32>
    %c0_32 = arith.constant 0 : index
    %c0_33 = arith.constant 0 : index
    %c0_34 = arith.constant 0 : index
    %89 = vector.load %arg12[%c0_32, %c0_33, %c0_34] : memref<8x8x256xf32, #tpu.memory_space<vmem>>, vector<1x8x256xf32>
    %90 = vector.shape_cast %89 : vector<1x8x256xf32> to vector<8x256xf32>
    %cst_35 = arith.constant dense<0.000000e+00> : vector<8x256xf32>
    %91 = tpu.matmul %87, %33, %cst_35 {dimension_numbers = #tpu.dot_dimension_numbers<[1], [0], [0], [1], [0, 0, 1, 1], [], []>} : vector<8x64xf32>, vector<64x256xf32>, vector<8x256xf32> -> vector<8x256xf32>
    %92 = arith.addf %90, %91 : vector<8x256xf32>
    %93 = arith.mulf %92, %28 : vector<8x256xf32>
    %94 = math.tanh %93 : vector<8x256xf32>
    %95 = arith.mulf %94, %28 : vector<8x256xf32>
    %96 = arith.addf %95, %31 : vector<8x256xf32>
    %97 = vector.extract_strided_slice %96 {offsets = [0, 0], sizes = [8, 64], strides = [1, 1]} : vector<8x256xf32> to vector<8x64xf32>
    %98 = vector.extract_strided_slice %96 {offsets = [0, 64], sizes = [8, 64], strides = [1, 1]} : vector<8x256xf32> to vector<8x64xf32>
    %99 = vector.extract_strided_slice %96 {offsets = [0, 128], sizes = [8, 64], strides = [1, 1]} : vector<8x256xf32> to vector<8x64xf32>
    %100 = vector.extract_strided_slice %96 {offsets = [0, 192], sizes = [8, 64], strides = [1, 1]} : vector<8x256xf32> to vector<8x64xf32>
    %101 = arith.mulf %98, %88 : vector<8x64xf32>
    %102 = arith.mulf %97, %99 : vector<8x64xf32>
    %103 = arith.addf %101, %102 : vector<8x64xf32>
    %104 = math.tanh %103 : vector<8x64xf32>
    %105 = arith.mulf %100, %104 : vector<8x64xf32>
    %106 = vector.extract_strided_slice %105 {offsets = [0, 0], sizes = [8, 32], strides = [1, 1]} : vector<8x64xf32> to vector<8x32xf32>
    %c0_36 = arith.constant 0 : index
    %c0_37 = arith.constant 0 : index
    %c0_38 = arith.constant 0 : index
    %107 = vector.load %arg11[%c0_36, %c0_37, %c0_38] : memref<8x8x64xf32, #tpu.memory_space<vmem>>, vector<1x8x32xf32>
    %108 = vector.shape_cast %107 : vector<1x8x32xf32> to vector<8x32xf32>
    %109 = vector.shape_cast %106 : vector<8x32xf32> to vector<1x8x32xf32>
    tpu.vector_store %arg11[%c0_36, %c0_37, %c0_38], %109 {strides = array<i32>} : memref<8x8x64xf32, #tpu.memory_space<vmem>>, vector<1x8x32xf32>,
    %110 = vector.extract_strided_slice %105 {offsets = [0, 32], sizes = [8, 32], strides = [1, 1]} : vector<8x64xf32> to vector<8x32xf32>
    %c7_39 = arith.constant 7 : index
    %c0_40 = arith.constant 0 : index
    %c32 = arith.constant 32 : index
    %111 = vector.load %arg11[%c7_39, %c0_40, %c32] : memref<8x8x64xf32, #tpu.memory_space<vmem>>, vector<1x8x32xf32>
    %112 = vector.shape_cast %111 : vector<1x8x32xf32> to vector<8x32xf32>
    %113 = vector.shape_cast %110 : vector<8x32xf32> to vector<1x8x32xf32>
    tpu.vector_store %arg11[%c7_39, %c0_40, %c32], %113 {strides = array<i32>} : memref<8x8x64xf32, #tpu.memory_space<vmem>>, vector<1x8x32xf32>,
    %c1_41 = arith.constant 1 : index
    %c0_42 = arith.constant 0 : index
    %c0_43 = arith.constant 0 : index
    %114 = vector.load %arg12[%c1_41, %c0_42, %c0_43] : memref<8x8x256xf32, #tpu.memory_space<vmem>>, vector<1x8x256xf32>
    %115 = vector.shape_cast %114 : vector<1x8x256xf32> to vector<8x256xf32>
    %cst_44 = arith.constant dense<0.000000e+00> : vector<8x256xf32>
    %116 = tpu.matmul %105, %33, %cst_44 {dimension_numbers = #tpu.dot_dimension_numbers<[1], [0], [0], [1], [0, 0, 1, 1], [], []>} : vector<8x64xf32>, vector<64x256xf32>, vector<8x256xf32> -> vector<8x256xf32>
    %117 = arith.addf %115, %116 : vector<8x256xf32>
    %118 = arith.mulf %117, %28 : vector<8x256xf32>
    %119 = math.tanh %118 : vector<8x256xf32>
    %120 = arith.mulf %119, %28 : vector<8x256xf32>
    %121 = arith.addf %120, %31 : vector<8x256xf32>
    %122 = vector.extract_strided_slice %121 {offsets = [0, 0], sizes = [8, 64], strides = [1, 1]} : vector<8x256xf32> to vector<8x64xf32>
    %123 = vector.extract_strided_slice %121 {offsets = [0, 64], sizes = [8, 64], strides = [1, 1]} : vector<8x256xf32> to vector<8x64xf32>
    %124 = vector.extract_strided_slice %121 {offsets = [0, 128], sizes = [8, 64], strides = [1, 1]} : vector<8x256xf32> to vector<8x64xf32>
    %125 = vector.extract_strided_slice %121 {offsets = [0, 192], sizes = [8, 64], strides = [1, 1]} : vector<8x256xf32> to vector<8x64xf32>
    %126 = arith.mulf %123, %103 : vector<8x64xf32>
    %127 = arith.mulf %122, %124 : vector<8x64xf32>
    %128 = arith.addf %126, %127 : vector<8x64xf32>
    %129 = math.tanh %128 : vector<8x64xf32>
    %130 = arith.mulf %125, %129 : vector<8x64xf32>
    %131 = vector.extract_strided_slice %130 {offsets = [0, 0], sizes = [8, 32], strides = [1, 1]} : vector<8x64xf32> to vector<8x32xf32>
    %c1_45 = arith.constant 1 : index
    %c0_46 = arith.constant 0 : index
    %c0_47 = arith.constant 0 : index
    %132 = vector.load %arg11[%c1_45, %c0_46, %c0_47] : memref<8x8x64xf32, #tpu.memory_space<vmem>>, vector<1x8x32xf32>
    %133 = vector.shape_cast %132 : vector<1x8x32xf32> to vector<8x32xf32>
    %134 = vector.shape_cast %131 : vector<8x32xf32> to vector<1x8x32xf32>
    tpu.vector_store %arg11[%c1_45, %c0_46, %c0_47], %134 {strides = array<i32>} : memref<8x8x64xf32, #tpu.memory_space<vmem>>, vector<1x8x32xf32>,
    %135 = vector.extract_strided_slice %130 {offsets = [0, 32], sizes = [8, 32], strides = [1, 1]} : vector<8x64xf32> to vector<8x32xf32>
    %c6_48 = arith.constant 6 : index
    %c0_49 = arith.constant 0 : index
    %c32_50 = arith.constant 32 : index
    %136 = vector.load %arg11[%c6_48, %c0_49, %c32_50] : memref<8x8x64xf32, #tpu.memory_space<vmem>>, vector<1x8x32xf32>
    %137 = vector.shape_cast %136 : vector<1x8x32xf32> to vector<8x32xf32>
    %138 = vector.shape_cast %135 : vector<8x32xf32> to vector<1x8x32xf32>
    tpu.vector_store %arg11[%c6_48, %c0_49, %c32_50], %138 {strides = array<i32>} : memref<8x8x64xf32, #tpu.memory_space<vmem>>, vector<1x8x32xf32>,
    %c2_51 = arith.constant 2 : index
    %c0_52 = arith.constant 0 : index
    %c0_53 = arith.constant 0 : index
    %139 = vector.load %arg12[%c2_51, %c0_52, %c0_53] : memref<8x8x256xf32, #tpu.memory_space<vmem>>, vector<1x8x256xf32>
    %140 = vector.shape_cast %139 : vector<1x8x256xf32> to vector<8x256xf32>
    %cst_54 = arith.constant dense<0.000000e+00> : vector<8x256xf32>
    %141 = tpu.matmul %130, %33, %cst_54 {dimension_numbers = #tpu.dot_dimension_numbers<[1], [0], [0], [1], [0, 0, 1, 1], [], []>} : vector<8x64xf32>, vector<64x256xf32>, vector<8x256xf32> -> vector<8x256xf32>
    %142 = arith.addf %140, %141 : vector<8x256xf32>
    %143 = arith.mulf %142, %28 : vector<8x256xf32>
    %144 = math.tanh %143 : vector<8x256xf32>
    %145 = arith.mulf %144, %28 : vector<8x256xf32>
    %146 = arith.addf %145, %31 : vector<8x256xf32>
    %147 = vector.extract_strided_slice %146 {offsets = [0, 0], sizes = [8, 64], strides = [1, 1]} : vector<8x256xf32> to vector<8x64xf32>
    %148 = vector.extract_strided_slice %146 {offsets = [0, 64], sizes = [8, 64], strides = [1, 1]} : vector<8x256xf32> to vector<8x64xf32>
    %149 = vector.extract_strided_slice %146 {offsets = [0, 128], sizes = [8, 64], strides = [1, 1]} : vector<8x256xf32> to vector<8x64xf32>
    %150 = vector.extract_strided_slice %146 {offsets = [0, 192], sizes = [8, 64], strides = [1, 1]} : vector<8x256xf32> to vector<8x64xf32>
    %151 = arith.mulf %148, %128 : vector<8x64xf32>
    %152 = arith.mulf %147, %149 : vector<8x64xf32>
    %153 = arith.addf %151, %152 : vector<8x64xf32>
    %154 = math.tanh %153 : vector<8x64xf32>
    %155 = arith.mulf %150, %154 : vector<8x64xf32>
    %156 = vector.extract_strided_slice %155 {offsets = [0, 0], sizes = [8, 32], strides = [1, 1]} : vector<8x64xf32> to vector<8x32xf32>
    %c2_55 = arith.constant 2 : index
    %c0_56 = arith.constant 0 : index
    %c0_57 = arith.constant 0 : index
    %157 = vector.load %arg11[%c2_55, %c0_56, %c0_57] : memref<8x8x64xf32, #tpu.memory_space<vmem>>, vector<1x8x32xf32>
    %158 = vector.shape_cast %157 : vector<1x8x32xf32> to vector<8x32xf32>
    %159 = vector.shape_cast %156 : vector<8x32xf32> to vector<1x8x32xf32>
    tpu.vector_store %arg11[%c2_55, %c0_56, %c0_57], %159 {strides = array<i32>} : memref<8x8x64xf32, #tpu.memory_space<vmem>>, vector<1x8x32xf32>,
    %160 = vector.extract_strided_slice %155 {offsets = [0, 32], sizes = [8, 32], strides = [1, 1]} : vector<8x64xf32> to vector<8x32xf32>
    %c5_58 = arith.constant 5 : index
    %c0_59 = arith.constant 0 : index
    %c32_60 = arith.constant 32 : index
    %161 = vector.load %arg11[%c5_58, %c0_59, %c32_60] : memref<8x8x64xf32, #tpu.memory_space<vmem>>, vector<1x8x32xf32>
    %162 = vector.shape_cast %161 : vector<1x8x32xf32> to vector<8x32xf32>
    %163 = vector.shape_cast %160 : vector<8x32xf32> to vector<1x8x32xf32>
    tpu.vector_store %arg11[%c5_58, %c0_59, %c32_60], %163 {strides = array<i32>} : memref<8x8x64xf32, #tpu.memory_space<vmem>>, vector<1x8x32xf32>,
    %c3_61 = arith.constant 3 : index
    %c0_62 = arith.constant 0 : index
    %c0_63 = arith.constant 0 : index
    %164 = vector.load %arg12[%c3_61, %c0_62, %c0_63] : memref<8x8x256xf32, #tpu.memory_space<vmem>>, vector<1x8x256xf32>
    %165 = vector.shape_cast %164 : vector<1x8x256xf32> to vector<8x256xf32>
    %cst_64 = arith.constant dense<0.000000e+00> : vector<8x256xf32>
    %166 = tpu.matmul %155, %33, %cst_64 {dimension_numbers = #tpu.dot_dimension_numbers<[1], [0], [0], [1], [0, 0, 1, 1], [], []>} : vector<8x64xf32>, vector<64x256xf32>, vector<8x256xf32> -> vector<8x256xf32>
    %167 = arith.addf %165, %166 : vector<8x256xf32>
    %168 = arith.mulf %167, %28 : vector<8x256xf32>
    %169 = math.tanh %168 : vector<8x256xf32>
    %170 = arith.mulf %169, %28 : vector<8x256xf32>
    %171 = arith.addf %170, %31 : vector<8x256xf32>
    %172 = vector.extract_strided_slice %171 {offsets = [0, 0], sizes = [8, 64], strides = [1, 1]} : vector<8x256xf32> to vector<8x64xf32>
    %173 = vector.extract_strided_slice %171 {offsets = [0, 64], sizes = [8, 64], strides = [1, 1]} : vector<8x256xf32> to vector<8x64xf32>
    %174 = vector.extract_strided_slice %171 {offsets = [0, 128], sizes = [8, 64], strides = [1, 1]} : vector<8x256xf32> to vector<8x64xf32>
    %175 = vector.extract_strided_slice %171 {offsets = [0, 192], sizes = [8, 64], strides = [1, 1]} : vector<8x256xf32> to vector<8x64xf32>
    %176 = arith.mulf %173, %153 : vector<8x64xf32>
    %177 = arith.mulf %172, %174 : vector<8x64xf32>
    %178 = arith.addf %176, %177 : vector<8x64xf32>
    %179 = math.tanh %178 : vector<8x64xf32>
    %180 = arith.mulf %175, %179 : vector<8x64xf32>
    %181 = vector.extract_strided_slice %180 {offsets = [0, 0], sizes = [8, 32], strides = [1, 1]} : vector<8x64xf32> to vector<8x32xf32>
    %c3_65 = arith.constant 3 : index
    %c0_66 = arith.constant 0 : index
    %c0_67 = arith.constant 0 : index
    %182 = vector.load %arg11[%c3_65, %c0_66, %c0_67] : memref<8x8x64xf32, #tpu.memory_space<vmem>>, vector<1x8x32xf32>
    %183 = vector.shape_cast %182 : vector<1x8x32xf32> to vector<8x32xf32>
    %184 = vector.shape_cast %181 : vector<8x32xf32> to vector<1x8x32xf32>
    tpu.vector_store %arg11[%c3_65, %c0_66, %c0_67], %184 {strides = array<i32>} : memref<8x8x64xf32, #tpu.memory_space<vmem>>, vector<1x8x32xf32>,
    %185 = vector.extract_strided_slice %180 {offsets = [0, 32], sizes = [8, 32], strides = [1, 1]} : vector<8x64xf32> to vector<8x32xf32>
    %c4_68 = arith.constant 4 : index
    %c0_69 = arith.constant 0 : index
    %c32_70 = arith.constant 32 : index
    %186 = vector.load %arg11[%c4_68, %c0_69, %c32_70] : memref<8x8x64xf32, #tpu.memory_space<vmem>>, vector<1x8x32xf32>
    %187 = vector.shape_cast %186 : vector<1x8x32xf32> to vector<8x32xf32>
    %188 = vector.shape_cast %185 : vector<8x32xf32> to vector<1x8x32xf32>
    tpu.vector_store %arg11[%c4_68, %c0_69, %c32_70], %188 {strides = array<i32>} : memref<8x8x64xf32, #tpu.memory_space<vmem>>, vector<1x8x32xf32>,
    %c4_71 = arith.constant 4 : index
    %c0_72 = arith.constant 0 : index
    %c0_73 = arith.constant 0 : index
    %189 = vector.load %arg12[%c4_71, %c0_72, %c0_73] : memref<8x8x256xf32, #tpu.memory_space<vmem>>, vector<1x8x256xf32>
    %190 = vector.shape_cast %189 : vector<1x8x256xf32> to vector<8x256xf32>
    %cst_74 = arith.constant dense<0.000000e+00> : vector<8x256xf32>
    %191 = tpu.matmul %180, %33, %cst_74 {dimension_numbers = #tpu.dot_dimension_numbers<[1], [0], [0], [1], [0, 0, 1, 1], [], []>} : vector<8x64xf32>, vector<64x256xf32>, vector<8x256xf32> -> vector<8x256xf32>
    %192 = arith.addf %190, %191 : vector<8x256xf32>
    %193 = arith.mulf %192, %28 : vector<8x256xf32>
    %194 = math.tanh %193 : vector<8x256xf32>
    %195 = arith.mulf %194, %28 : vector<8x256xf32>
    %196 = arith.addf %195, %31 : vector<8x256xf32>
    %197 = vector.extract_strided_slice %196 {offsets = [0, 0], sizes = [8, 64], strides = [1, 1]} : vector<8x256xf32> to vector<8x64xf32>
    %198 = vector.extract_strided_slice %196 {offsets = [0, 64], sizes = [8, 64], strides = [1, 1]} : vector<8x256xf32> to vector<8x64xf32>
    %199 = vector.extract_strided_slice %196 {offsets = [0, 128], sizes = [8, 64], strides = [1, 1]} : vector<8x256xf32> to vector<8x64xf32>
    %200 = vector.extract_strided_slice %196 {offsets = [0, 192], sizes = [8, 64], strides = [1, 1]} : vector<8x256xf32> to vector<8x64xf32>
    %201 = arith.mulf %198, %178 : vector<8x64xf32>
    %202 = arith.mulf %197, %199 : vector<8x64xf32>
    %203 = arith.addf %201, %202 : vector<8x64xf32>
    %204 = math.tanh %203 : vector<8x64xf32>
    %205 = arith.mulf %200, %204 : vector<8x64xf32>
    %206 = vector.extract_strided_slice %205 {offsets = [0, 0], sizes = [8, 32], strides = [1, 1]} : vector<8x64xf32> to vector<8x32xf32>
    %c4_75 = arith.constant 4 : index
    %c0_76 = arith.constant 0 : index
    %c0_77 = arith.constant 0 : index
    %207 = vector.load %arg11[%c4_75, %c0_76, %c0_77] : memref<8x8x64xf32, #tpu.memory_space<vmem>>, vector<1x8x32xf32>
    %208 = vector.shape_cast %207 : vector<1x8x32xf32> to vector<8x32xf32>
    %209 = vector.shape_cast %206 : vector<8x32xf32> to vector<1x8x32xf32>
    tpu.vector_store %arg11[%c4_75, %c0_76, %c0_77], %209 {strides = array<i32>} : memref<8x8x64xf32, #tpu.memory_space<vmem>>, vector<1x8x32xf32>,
    %210 = vector.extract_strided_slice %205 {offsets = [0, 32], sizes = [8, 32], strides = [1, 1]} : vector<8x64xf32> to vector<8x32xf32>
    %c3_78 = arith.constant 3 : index
    %c0_79 = arith.constant 0 : index
    %c32_80 = arith.constant 32 : index
    %211 = vector.load %arg11[%c3_78, %c0_79, %c32_80] : memref<8x8x64xf32, #tpu.memory_space<vmem>>, vector<1x8x32xf32>
    %212 = vector.shape_cast %211 : vector<1x8x32xf32> to vector<8x32xf32>
    %213 = vector.shape_cast %210 : vector<8x32xf32> to vector<1x8x32xf32>
    tpu.vector_store %arg11[%c3_78, %c0_79, %c32_80], %213 {strides = array<i32>} : memref<8x8x64xf32, #tpu.memory_space<vmem>>, vector<1x8x32xf32>,
    %c5_81 = arith.constant 5 : index
    %c0_82 = arith.constant 0 : index
    %c0_83 = arith.constant 0 : index
    %214 = vector.load %arg12[%c5_81, %c0_82, %c0_83] : memref<8x8x256xf32, #tpu.memory_space<vmem>>, vector<1x8x256xf32>
    %215 = vector.shape_cast %214 : vector<1x8x256xf32> to vector<8x256xf32>
    %cst_84 = arith.constant dense<0.000000e+00> : vector<8x256xf32>
    %216 = tpu.matmul %205, %33, %cst_84 {dimension_numbers = #tpu.dot_dimension_numbers<[1], [0], [0], [1], [0, 0, 1, 1], [], []>} : vector<8x64xf32>, vector<64x256xf32>, vector<8x256xf32> -> vector<8x256xf32>
    %217 = arith.addf %215, %216 : vector<8x256xf32>
    %218 = arith.mulf %217, %28 : vector<8x256xf32>
    %219 = math.tanh %218 : vector<8x256xf32>
    %220 = arith.mulf %219, %28 : vector<8x256xf32>
    %221 = arith.addf %220, %31 : vector<8x256xf32>
    %222 = vector.extract_strided_slice %221 {offsets = [0, 0], sizes = [8, 64], strides = [1, 1]} : vector<8x256xf32> to vector<8x64xf32>
    %223 = vector.extract_strided_slice %221 {offsets = [0, 64], sizes = [8, 64], strides = [1, 1]} : vector<8x256xf32> to vector<8x64xf32>
    %224 = vector.extract_strided_slice %221 {offsets = [0, 128], sizes = [8, 64], strides = [1, 1]} : vector<8x256xf32> to vector<8x64xf32>
    %225 = vector.extract_strided_slice %221 {offsets = [0, 192], sizes = [8, 64], strides = [1, 1]} : vector<8x256xf32> to vector<8x64xf32>
    %226 = arith.mulf %223, %203 : vector<8x64xf32>
    %227 = arith.mulf %222, %224 : vector<8x64xf32>
    %228 = arith.addf %226, %227 : vector<8x64xf32>
    %229 = math.tanh %228 : vector<8x64xf32>
    %230 = arith.mulf %225, %229 : vector<8x64xf32>
    %231 = vector.extract_strided_slice %230 {offsets = [0, 0], sizes = [8, 32], strides = [1, 1]} : vector<8x64xf32> to vector<8x32xf32>
    %c5_85 = arith.constant 5 : index
    %c0_86 = arith.constant 0 : index
    %c0_87 = arith.constant 0 : index
    %232 = vector.load %arg11[%c5_85, %c0_86, %c0_87] : memref<8x8x64xf32, #tpu.memory_space<vmem>>, vector<1x8x32xf32>
    %233 = vector.shape_cast %232 : vector<1x8x32xf32> to vector<8x32xf32>
    %234 = vector.shape_cast %231 : vector<8x32xf32> to vector<1x8x32xf32>
    tpu.vector_store %arg11[%c5_85, %c0_86, %c0_87], %234 {strides = array<i32>} : memref<8x8x64xf32, #tpu.memory_space<vmem>>, vector<1x8x32xf32>,
    %235 = vector.extract_strided_slice %230 {offsets = [0, 32], sizes = [8, 32], strides = [1, 1]} : vector<8x64xf32> to vector<8x32xf32>
    %c2_88 = arith.constant 2 : index
    %c0_89 = arith.constant 0 : index
    %c32_90 = arith.constant 32 : index
    %236 = vector.load %arg11[%c2_88, %c0_89, %c32_90] : memref<8x8x64xf32, #tpu.memory_space<vmem>>, vector<1x8x32xf32>
    %237 = vector.shape_cast %236 : vector<1x8x32xf32> to vector<8x32xf32>
    %238 = vector.shape_cast %235 : vector<8x32xf32> to vector<1x8x32xf32>
    tpu.vector_store %arg11[%c2_88, %c0_89, %c32_90], %238 {strides = array<i32>} : memref<8x8x64xf32, #tpu.memory_space<vmem>>, vector<1x8x32xf32>,
    %c6_91 = arith.constant 6 : index
    %c0_92 = arith.constant 0 : index
    %c0_93 = arith.constant 0 : index
    %239 = vector.load %arg12[%c6_91, %c0_92, %c0_93] : memref<8x8x256xf32, #tpu.memory_space<vmem>>, vector<1x8x256xf32>
    %240 = vector.shape_cast %239 : vector<1x8x256xf32> to vector<8x256xf32>
    %cst_94 = arith.constant dense<0.000000e+00> : vector<8x256xf32>
    %241 = tpu.matmul %230, %33, %cst_94 {dimension_numbers = #tpu.dot_dimension_numbers<[1], [0], [0], [1], [0, 0, 1, 1], [], []>} : vector<8x64xf32>, vector<64x256xf32>, vector<8x256xf32> -> vector<8x256xf32>
    %242 = arith.addf %240, %241 : vector<8x256xf32>
    %243 = arith.mulf %242, %28 : vector<8x256xf32>
    %244 = math.tanh %243 : vector<8x256xf32>
    %245 = arith.mulf %244, %28 : vector<8x256xf32>
    %246 = arith.addf %245, %31 : vector<8x256xf32>
    %247 = vector.extract_strided_slice %246 {offsets = [0, 0], sizes = [8, 64], strides = [1, 1]} : vector<8x256xf32> to vector<8x64xf32>
    %248 = vector.extract_strided_slice %246 {offsets = [0, 64], sizes = [8, 64], strides = [1, 1]} : vector<8x256xf32> to vector<8x64xf32>
    %249 = vector.extract_strided_slice %246 {offsets = [0, 128], sizes = [8, 64], strides = [1, 1]} : vector<8x256xf32> to vector<8x64xf32>
    %250 = vector.extract_strided_slice %246 {offsets = [0, 192], sizes = [8, 64], strides = [1, 1]} : vector<8x256xf32> to vector<8x64xf32>
    %251 = arith.mulf %248, %228 : vector<8x64xf32>
    %252 = arith.mulf %247, %249 : vector<8x64xf32>
    %253 = arith.addf %251, %252 : vector<8x64xf32>
    %254 = math.tanh %253 : vector<8x64xf32>
    %255 = arith.mulf %250, %254 : vector<8x64xf32>
    %256 = vector.extract_strided_slice %255 {offsets = [0, 0], sizes = [8, 32], strides = [1, 1]} : vector<8x64xf32> to vector<8x32xf32>
    %c6_95 = arith.constant 6 : index
    %c0_96 = arith.constant 0 : index
    %c0_97 = arith.constant 0 : index
    %257 = vector.load %arg11[%c6_95, %c0_96, %c0_97] : memref<8x8x64xf32, #tpu.memory_space<vmem>>, vector<1x8x32xf32>
    %258 = vector.shape_cast %257 : vector<1x8x32xf32> to vector<8x32xf32>
    %259 = vector.shape_cast %256 : vector<8x32xf32> to vector<1x8x32xf32>
    tpu.vector_store %arg11[%c6_95, %c0_96, %c0_97], %259 {strides = array<i32>} : memref<8x8x64xf32, #tpu.memory_space<vmem>>, vector<1x8x32xf32>,
    %260 = vector.extract_strided_slice %255 {offsets = [0, 32], sizes = [8, 32], strides = [1, 1]} : vector<8x64xf32> to vector<8x32xf32>
    %c1_98 = arith.constant 1 : index
    %c0_99 = arith.constant 0 : index
    %c32_100 = arith.constant 32 : index
    %261 = vector.load %arg11[%c1_98, %c0_99, %c32_100] : memref<8x8x64xf32, #tpu.memory_space<vmem>>, vector<1x8x32xf32>
    %262 = vector.shape_cast %261 : vector<1x8x32xf32> to vector<8x32xf32>
    %263 = vector.shape_cast %260 : vector<8x32xf32> to vector<1x8x32xf32>
    tpu.vector_store %arg11[%c1_98, %c0_99, %c32_100], %263 {strides = array<i32>} : memref<8x8x64xf32, #tpu.memory_space<vmem>>, vector<1x8x32xf32>,
    %c7_101 = arith.constant 7 : index
    %c0_102 = arith.constant 0 : index
    %c0_103 = arith.constant 0 : index
    %264 = vector.load %arg12[%c7_101, %c0_102, %c0_103] : memref<8x8x256xf32, #tpu.memory_space<vmem>>, vector<1x8x256xf32>
    %265 = vector.shape_cast %264 : vector<1x8x256xf32> to vector<8x256xf32>
    %cst_104 = arith.constant dense<0.000000e+00> : vector<8x256xf32>
    %266 = tpu.matmul %255, %33, %cst_104 {dimension_numbers = #tpu.dot_dimension_numbers<[1], [0], [0], [1], [0, 0, 1, 1], [], []>} : vector<8x64xf32>, vector<64x256xf32>, vector<8x256xf32> -> vector<8x256xf32>
    %267 = arith.addf %265, %266 : vector<8x256xf32>
    %268 = arith.mulf %267, %28 : vector<8x256xf32>
    %269 = math.tanh %268 : vector<8x256xf32>
    %270 = arith.mulf %269, %28 : vector<8x256xf32>
    %271 = arith.addf %270, %31 : vector<8x256xf32>
    %272 = vector.extract_strided_slice %271 {offsets = [0, 0], sizes = [8, 64], strides = [1, 1]} : vector<8x256xf32> to vector<8x64xf32>
    %273 = vector.extract_strided_slice %271 {offsets = [0, 64], sizes = [8, 64], strides = [1, 1]} : vector<8x256xf32> to vector<8x64xf32>
    %274 = vector.extract_strided_slice %271 {offsets = [0, 128], sizes = [8, 64], strides = [1, 1]} : vector<8x256xf32> to vector<8x64xf32>
    %275 = vector.extract_strided_slice %271 {offsets = [0, 192], sizes = [8, 64], strides = [1, 1]} : vector<8x256xf32> to vector<8x64xf32>
    %276 = arith.mulf %273, %253 : vector<8x64xf32>
    %277 = arith.mulf %272, %274 : vector<8x64xf32>
    %278 = arith.addf %276, %277 : vector<8x64xf32>
    %279 = math.tanh %278 : vector<8x64xf32>
    %280 = arith.mulf %275, %279 : vector<8x64xf32>
    %281 = vector.extract_strided_slice %280 {offsets = [0, 0], sizes = [8, 32], strides = [1, 1]} : vector<8x64xf32> to vector<8x32xf32>
    %c7_105 = arith.constant 7 : index
    %c0_106 = arith.constant 0 : index
    %c0_107 = arith.constant 0 : index
    %282 = vector.load %arg11[%c7_105, %c0_106, %c0_107] : memref<8x8x64xf32, #tpu.memory_space<vmem>>, vector<1x8x32xf32>
    %283 = vector.shape_cast %282 : vector<1x8x32xf32> to vector<8x32xf32>
    %284 = vector.shape_cast %281 : vector<8x32xf32> to vector<1x8x32xf32>
    tpu.vector_store %arg11[%c7_105, %c0_106, %c0_107], %284 {strides = array<i32>} : memref<8x8x64xf32, #tpu.memory_space<vmem>>, vector<1x8x32xf32>,
    %285 = vector.extract_strided_slice %280 {offsets = [0, 32], sizes = [8, 32], strides = [1, 1]} : vector<8x64xf32> to vector<8x32xf32>
    %c0_108 = arith.constant 0 : index
    %c0_109 = arith.constant 0 : index
    %c32_110 = arith.constant 32 : index
    %286 = vector.load %arg11[%c0_108, %c0_109, %c32_110] : memref<8x8x64xf32, #tpu.memory_space<vmem>>, vector<1x8x32xf32>
    %287 = vector.shape_cast %286 : vector<1x8x32xf32> to vector<8x32xf32>
    %288 = vector.shape_cast %285 : vector<8x32xf32> to vector<1x8x32xf32>
    tpu.vector_store %arg11[%c0_108, %c0_109, %c32_110], %288 {strides = array<i32>} : memref<8x8x64xf32, #tpu.memory_space<vmem>>, vector<1x8x32xf32>,
    %c0_111 = arith.constant 0 : index
    %c0_112 = arith.constant 0 : index
    %289 = vector.load %arg5[%c0_111, %c0_112] : memref<64x256xf32, #tpu.memory_space<vmem>>, vector<64x256xf32>
    %c0_113 = arith.constant 0 : index
    %c0_114 = arith.constant 0 : index
    %290 = vector.load %arg6[%c0_113, %c0_114] : memref<64x256xf32, #tpu.memory_space<vmem>>, vector<64x256xf32>
    %c0_115 = arith.constant 0 : index
    %c0_116 = arith.constant 0 : index
    %291 = vector.load %arg7[%c0_115, %c0_116] : memref<1x256xf32, #tpu.memory_space<vmem>>, vector<1x256xf32>
    %c0_117 = arith.constant 0 : index
    %c0_118 = arith.constant 0 : index
    %c0_119 = arith.constant 0 : index
    %292 = vector.load %arg11[%c0_117, %c0_118, %c0_119] : memref<8x8x64xf32, #tpu.memory_space<vmem>>, vector<8x8x64xf32>
    %293 = vector.shape_cast %292 : vector<8x8x64xf32> to vector<64x64xf32>
    %cst_120 = arith.constant dense<0.000000e+00> : vector<64x256xf32>
    %294 = tpu.matmul %293, %289, %cst_120 {dimension_numbers = #tpu.dot_dimension_numbers<[1], [0], [0], [1], [0, 0, 1, 1], [], []>} : vector<64x64xf32>, vector<64x256xf32>, vector<64x256xf32> -> vector<64x256xf32>
    %295 = vector.broadcast %291 : vector<1x256xf32> to vector<64x256xf32>
    %296 = arith.addf %294, %295 : vector<64x256xf32>
    %297 = vector.extract_strided_slice %296 {offsets = [0, 0], sizes = [8, 256], strides = [1, 1]} : vector<64x256xf32> to vector<8x256xf32>
    %298 = vector.extract_strided_slice %296 {offsets = [56, 0], sizes = [8, 256], strides = [1, 1]} : vector<64x256xf32> to vector<8x256xf32>
    %299 = arith.select %20, %297, %298 : vector<8x256xi1>, vector<8x256xf32>
    %c0_121 = arith.constant 0 : index
    %c0_122 = arith.constant 0 : index
    %c0_123 = arith.constant 0 : index
    %300 = vector.load %arg12[%c0_121, %c0_122, %c0_123] : memref<8x8x256xf32, #tpu.memory_space<vmem>>, vector<1x8x256xf32>
    %301 = vector.shape_cast %300 : vector<1x8x256xf32> to vector<8x256xf32>
    %302 = vector.shape_cast %299 : vector<8x256xf32> to vector<1x8x256xf32>
    tpu.vector_store %arg12[%c0_121, %c0_122, %c0_123], %302 {strides = array<i32>} : memref<8x8x256xf32, #tpu.memory_space<vmem>>, vector<1x8x256xf32>,
    %303 = vector.extract_strided_slice %296 {offsets = [8, 0], sizes = [8, 256], strides = [1, 1]} : vector<64x256xf32> to vector<8x256xf32>
    %304 = vector.extract_strided_slice %296 {offsets = [48, 0], sizes = [8, 256], strides = [1, 1]} : vector<64x256xf32> to vector<8x256xf32>
    %305 = arith.select %20, %303, %304 : vector<8x256xi1>, vector<8x256xf32>
    %c1_124 = arith.constant 1 : index
    %c0_125 = arith.constant 0 : index
    %c0_126 = arith.constant 0 : index
    %306 = vector.load %arg12[%c1_124, %c0_125, %c0_126] : memref<8x8x256xf32, #tpu.memory_space<vmem>>, vector<1x8x256xf32>
    %307 = vector.shape_cast %306 : vector<1x8x256xf32> to vector<8x256xf32>
    %308 = vector.shape_cast %305 : vector<8x256xf32> to vector<1x8x256xf32>
    tpu.vector_store %arg12[%c1_124, %c0_125, %c0_126], %308 {strides = array<i32>} : memref<8x8x256xf32, #tpu.memory_space<vmem>>, vector<1x8x256xf32>,
    %309 = vector.extract_strided_slice %296 {offsets = [16, 0], sizes = [8, 256], strides = [1, 1]} : vector<64x256xf32> to vector<8x256xf32>
    %310 = vector.extract_strided_slice %296 {offsets = [40, 0], sizes = [8, 256], strides = [1, 1]} : vector<64x256xf32> to vector<8x256xf32>
    %311 = arith.select %20, %309, %310 : vector<8x256xi1>, vector<8x256xf32>
    %c2_127 = arith.constant 2 : index
    %c0_128 = arith.constant 0 : index
    %c0_129 = arith.constant 0 : index
    %312 = vector.load %arg12[%c2_127, %c0_128, %c0_129] : memref<8x8x256xf32, #tpu.memory_space<vmem>>, vector<1x8x256xf32>
    %313 = vector.shape_cast %312 : vector<1x8x256xf32> to vector<8x256xf32>
    %314 = vector.shape_cast %311 : vector<8x256xf32> to vector<1x8x256xf32>
    tpu.vector_store %arg12[%c2_127, %c0_128, %c0_129], %314 {strides = array<i32>} : memref<8x8x256xf32, #tpu.memory_space<vmem>>, vector<1x8x256xf32>,
    %315 = vector.extract_strided_slice %296 {offsets = [24, 0], sizes = [8, 256], strides = [1, 1]} : vector<64x256xf32> to vector<8x256xf32>
    %316 = vector.extract_strided_slice %296 {offsets = [32, 0], sizes = [8, 256], strides = [1, 1]} : vector<64x256xf32> to vector<8x256xf32>
    %317 = arith.select %20, %315, %316 : vector<8x256xi1>, vector<8x256xf32>
    %c3_130 = arith.constant 3 : index
    %c0_131 = arith.constant 0 : index
    %c0_132 = arith.constant 0 : index
    %318 = vector.load %arg12[%c3_130, %c0_131, %c0_132] : memref<8x8x256xf32, #tpu.memory_space<vmem>>, vector<1x8x256xf32>
    %319 = vector.shape_cast %318 : vector<1x8x256xf32> to vector<8x256xf32>
    %320 = vector.shape_cast %317 : vector<8x256xf32> to vector<1x8x256xf32>
    tpu.vector_store %arg12[%c3_130, %c0_131, %c0_132], %320 {strides = array<i32>} : memref<8x8x256xf32, #tpu.memory_space<vmem>>, vector<1x8x256xf32>,
    %321 = vector.extract_strided_slice %296 {offsets = [32, 0], sizes = [8, 256], strides = [1, 1]} : vector<64x256xf32> to vector<8x256xf32>
    %322 = vector.extract_strided_slice %296 {offsets = [24, 0], sizes = [8, 256], strides = [1, 1]} : vector<64x256xf32> to vector<8x256xf32>
    %323 = arith.select %20, %321, %322 : vector<8x256xi1>, vector<8x256xf32>
    %c4_133 = arith.constant 4 : index
    %c0_134 = arith.constant 0 : index
    %c0_135 = arith.constant 0 : index
    %324 = vector.load %arg12[%c4_133, %c0_134, %c0_135] : memref<8x8x256xf32, #tpu.memory_space<vmem>>, vector<1x8x256xf32>
    %325 = vector.shape_cast %324 : vector<1x8x256xf32> to vector<8x256xf32>
    %326 = vector.shape_cast %323 : vector<8x256xf32> to vector<1x8x256xf32>
    tpu.vector_store %arg12[%c4_133, %c0_134, %c0_135], %326 {strides = array<i32>} : memref<8x8x256xf32, #tpu.memory_space<vmem>>, vector<1x8x256xf32>,
    %327 = vector.extract_strided_slice %296 {offsets = [40, 0], sizes = [8, 256], strides = [1, 1]} : vector<64x256xf32> to vector<8x256xf32>
    %328 = vector.extract_strided_slice %296 {offsets = [16, 0], sizes = [8, 256], strides = [1, 1]} : vector<64x256xf32> to vector<8x256xf32>
    %329 = arith.select %20, %327, %328 : vector<8x256xi1>, vector<8x256xf32>
    %c5_136 = arith.constant 5 : index
    %c0_137 = arith.constant 0 : index
    %c0_138 = arith.constant 0 : index
    %330 = vector.load %arg12[%c5_136, %c0_137, %c0_138] : memref<8x8x256xf32, #tpu.memory_space<vmem>>, vector<1x8x256xf32>
    %331 = vector.shape_cast %330 : vector<1x8x256xf32> to vector<8x256xf32>
    %332 = vector.shape_cast %329 : vector<8x256xf32> to vector<1x8x256xf32>
    tpu.vector_store %arg12[%c5_136, %c0_137, %c0_138], %332 {strides = array<i32>} : memref<8x8x256xf32, #tpu.memory_space<vmem>>, vector<1x8x256xf32>,
    %333 = vector.extract_strided_slice %296 {offsets = [48, 0], sizes = [8, 256], strides = [1, 1]} : vector<64x256xf32> to vector<8x256xf32>
    %334 = vector.extract_strided_slice %296 {offsets = [8, 0], sizes = [8, 256], strides = [1, 1]} : vector<64x256xf32> to vector<8x256xf32>
    %335 = arith.select %20, %333, %334 : vector<8x256xi1>, vector<8x256xf32>
    %c6_139 = arith.constant 6 : index
    %c0_140 = arith.constant 0 : index
    %c0_141 = arith.constant 0 : index
    %336 = vector.load %arg12[%c6_139, %c0_140, %c0_141] : memref<8x8x256xf32, #tpu.memory_space<vmem>>, vector<1x8x256xf32>
    %337 = vector.shape_cast %336 : vector<1x8x256xf32> to vector<8x256xf32>
    %338 = vector.shape_cast %335 : vector<8x256xf32> to vector<1x8x256xf32>
    tpu.vector_store %arg12[%c6_139, %c0_140, %c0_141], %338 {strides = array<i32>} : memref<8x8x256xf32, #tpu.memory_space<vmem>>, vector<1x8x256xf32>,
    %339 = vector.extract_strided_slice %296 {offsets = [56, 0], sizes = [8, 256], strides = [1, 1]} : vector<64x256xf32> to vector<8x256xf32>
    %340 = vector.extract_strided_slice %296 {offsets = [0, 0], sizes = [8, 256], strides = [1, 1]} : vector<64x256xf32> to vector<8x256xf32>
    %341 = arith.select %20, %339, %340 : vector<8x256xi1>, vector<8x256xf32>
    %c7_142 = arith.constant 7 : index
    %c0_143 = arith.constant 0 : index
    %c0_144 = arith.constant 0 : index
    %342 = vector.load %arg12[%c7_142, %c0_143, %c0_144] : memref<8x8x256xf32, #tpu.memory_space<vmem>>, vector<1x8x256xf32>
    %343 = vector.shape_cast %342 : vector<1x8x256xf32> to vector<8x256xf32>
    %344 = vector.shape_cast %341 : vector<8x256xf32> to vector<1x8x256xf32>
    tpu.vector_store %arg12[%c7_142, %c0_143, %c0_144], %344 {strides = array<i32>} : memref<8x8x256xf32, #tpu.memory_space<vmem>>, vector<1x8x256xf32>,
    %cst_145 = arith.constant 0.000000e+00 : f32
    %345 = vector.broadcast %cst_145 : f32 to vector<8x64xf32>
    %cst_146 = arith.constant 0.000000e+00 : f32
    %346 = vector.broadcast %cst_146 : f32 to vector<8x64xf32>
    %c0_147 = arith.constant 0 : index
    %c0_148 = arith.constant 0 : index
    %c0_149 = arith.constant 0 : index
    %347 = vector.load %arg12[%c0_147, %c0_148, %c0_149] : memref<8x8x256xf32, #tpu.memory_space<vmem>>, vector<1x8x256xf32>
    %348 = vector.shape_cast %347 : vector<1x8x256xf32> to vector<8x256xf32>
    %cst_150 = arith.constant dense<0.000000e+00> : vector<8x256xf32>
    %349 = tpu.matmul %345, %290, %cst_150 {dimension_numbers = #tpu.dot_dimension_numbers<[1], [0], [0], [1], [0, 0, 1, 1], [], []>} : vector<8x64xf32>, vector<64x256xf32>, vector<8x256xf32> -> vector<8x256xf32>
    %350 = arith.addf %348, %349 : vector<8x256xf32>
    %351 = arith.mulf %350, %28 : vector<8x256xf32>
    %352 = math.tanh %351 : vector<8x256xf32>
    %353 = arith.mulf %352, %28 : vector<8x256xf32>
    %354 = arith.addf %353, %31 : vector<8x256xf32>
    %355 = vector.extract_strided_slice %354 {offsets = [0, 0], sizes = [8, 64], strides = [1, 1]} : vector<8x256xf32> to vector<8x64xf32>
    %356 = vector.extract_strided_slice %354 {offsets = [0, 64], sizes = [8, 64], strides = [1, 1]} : vector<8x256xf32> to vector<8x64xf32>
    %357 = vector.extract_strided_slice %354 {offsets = [0, 128], sizes = [8, 64], strides = [1, 1]} : vector<8x256xf32> to vector<8x64xf32>
    %358 = vector.extract_strided_slice %354 {offsets = [0, 192], sizes = [8, 64], strides = [1, 1]} : vector<8x256xf32> to vector<8x64xf32>
    %359 = arith.mulf %356, %346 : vector<8x64xf32>
    %360 = arith.mulf %355, %357 : vector<8x64xf32>
    %361 = arith.addf %359, %360 : vector<8x64xf32>
    %362 = math.tanh %361 : vector<8x64xf32>
    %363 = arith.mulf %358, %362 : vector<8x64xf32>
    %364 = vector.extract_strided_slice %363 {offsets = [0, 0], sizes = [8, 32], strides = [1, 1]} : vector<8x64xf32> to vector<8x32xf32>
    %c0_151 = arith.constant 0 : index
    %c0_152 = arith.constant 0 : index
    %c0_153 = arith.constant 0 : index
    %365 = vector.load %arg11[%c0_151, %c0_152, %c0_153] : memref<8x8x64xf32, #tpu.memory_space<vmem>>, vector<1x8x32xf32>
    %366 = vector.shape_cast %365 : vector<1x8x32xf32> to vector<8x32xf32>
    %367 = vector.shape_cast %364 : vector<8x32xf32> to vector<1x8x32xf32>
    tpu.vector_store %arg11[%c0_151, %c0_152, %c0_153], %367 {strides = array<i32>} : memref<8x8x64xf32, #tpu.memory_space<vmem>>, vector<1x8x32xf32>,
    %368 = vector.extract_strided_slice %363 {offsets = [0, 32], sizes = [8, 32], strides = [1, 1]} : vector<8x64xf32> to vector<8x32xf32>
    %c7_154 = arith.constant 7 : index
    %c0_155 = arith.constant 0 : index
    %c32_156 = arith.constant 32 : index
    %369 = vector.load %arg11[%c7_154, %c0_155, %c32_156] : memref<8x8x64xf32, #tpu.memory_space<vmem>>, vector<1x8x32xf32>
    %370 = vector.shape_cast %369 : vector<1x8x32xf32> to vector<8x32xf32>
    %371 = vector.shape_cast %368 : vector<8x32xf32> to vector<1x8x32xf32>
    tpu.vector_store %arg11[%c7_154, %c0_155, %c32_156], %371 {strides = array<i32>} : memref<8x8x64xf32, #tpu.memory_space<vmem>>, vector<1x8x32xf32>,
    %c1_157 = arith.constant 1 : index
    %c0_158 = arith.constant 0 : index
    %c0_159 = arith.constant 0 : index
    %372 = vector.load %arg12[%c1_157, %c0_158, %c0_159] : memref<8x8x256xf32, #tpu.memory_space<vmem>>, vector<1x8x256xf32>
    %373 = vector.shape_cast %372 : vector<1x8x256xf32> to vector<8x256xf32>
    %cst_160 = arith.constant dense<0.000000e+00> : vector<8x256xf32>
    %374 = tpu.matmul %363, %290, %cst_160 {dimension_numbers = #tpu.dot_dimension_numbers<[1], [0], [0], [1], [0, 0, 1, 1], [], []>} : vector<8x64xf32>, vector<64x256xf32>, vector<8x256xf32> -> vector<8x256xf32>
    %375 = arith.addf %373, %374 : vector<8x256xf32>
    %376 = arith.mulf %375, %28 : vector<8x256xf32>
    %377 = math.tanh %376 : vector<8x256xf32>
    %378 = arith.mulf %377, %28 : vector<8x256xf32>
    %379 = arith.addf %378, %31 : vector<8x256xf32>
    %380 = vector.extract_strided_slice %379 {offsets = [0, 0], sizes = [8, 64], strides = [1, 1]} : vector<8x256xf32> to vector<8x64xf32>
    %381 = vector.extract_strided_slice %379 {offsets = [0, 64], sizes = [8, 64], strides = [1, 1]} : vector<8x256xf32> to vector<8x64xf32>
    %382 = vector.extract_strided_slice %379 {offsets = [0, 128], sizes = [8, 64], strides = [1, 1]} : vector<8x256xf32> to vector<8x64xf32>
    %383 = vector.extract_strided_slice %379 {offsets = [0, 192], sizes = [8, 64], strides = [1, 1]} : vector<8x256xf32> to vector<8x64xf32>
    %384 = arith.mulf %381, %361 : vector<8x64xf32>
    %385 = arith.mulf %380, %382 : vector<8x64xf32>
    %386 = arith.addf %384, %385 : vector<8x64xf32>
    %387 = math.tanh %386 : vector<8x64xf32>
    %388 = arith.mulf %383, %387 : vector<8x64xf32>
    %389 = vector.extract_strided_slice %388 {offsets = [0, 0], sizes = [8, 32], strides = [1, 1]} : vector<8x64xf32> to vector<8x32xf32>
    %c1_161 = arith.constant 1 : index
    %c0_162 = arith.constant 0 : index
    %c0_163 = arith.constant 0 : index
    %390 = vector.load %arg11[%c1_161, %c0_162, %c0_163] : memref<8x8x64xf32, #tpu.memory_space<vmem>>, vector<1x8x32xf32>
    %391 = vector.shape_cast %390 : vector<1x8x32xf32> to vector<8x32xf32>
    %392 = vector.shape_cast %389 : vector<8x32xf32> to vector<1x8x32xf32>
    tpu.vector_store %arg11[%c1_161, %c0_162, %c0_163], %392 {strides = array<i32>} : memref<8x8x64xf32, #tpu.memory_space<vmem>>, vector<1x8x32xf32>,
    %393 = vector.extract_strided_slice %388 {offsets = [0, 32], sizes = [8, 32], strides = [1, 1]} : vector<8x64xf32> to vector<8x32xf32>
    %c6_164 = arith.constant 6 : index
    %c0_165 = arith.constant 0 : index
    %c32_166 = arith.constant 32 : index
    %394 = vector.load %arg11[%c6_164, %c0_165, %c32_166] : memref<8x8x64xf32, #tpu.memory_space<vmem>>, vector<1x8x32xf32>
    %395 = vector.shape_cast %394 : vector<1x8x32xf32> to vector<8x32xf32>
    %396 = vector.shape_cast %393 : vector<8x32xf32> to vector<1x8x32xf32>
    tpu.vector_store %arg11[%c6_164, %c0_165, %c32_166], %396 {strides = array<i32>} : memref<8x8x64xf32, #tpu.memory_space<vmem>>, vector<1x8x32xf32>,
    %c2_167 = arith.constant 2 : index
    %c0_168 = arith.constant 0 : index
    %c0_169 = arith.constant 0 : index
    %397 = vector.load %arg12[%c2_167, %c0_168, %c0_169] : memref<8x8x256xf32, #tpu.memory_space<vmem>>, vector<1x8x256xf32>
    %398 = vector.shape_cast %397 : vector<1x8x256xf32> to vector<8x256xf32>
    %cst_170 = arith.constant dense<0.000000e+00> : vector<8x256xf32>
    %399 = tpu.matmul %388, %290, %cst_170 {dimension_numbers = #tpu.dot_dimension_numbers<[1], [0], [0], [1], [0, 0, 1, 1], [], []>} : vector<8x64xf32>, vector<64x256xf32>, vector<8x256xf32> -> vector<8x256xf32>
    %400 = arith.addf %398, %399 : vector<8x256xf32>
    %401 = arith.mulf %400, %28 : vector<8x256xf32>
    %402 = math.tanh %401 : vector<8x256xf32>
    %403 = arith.mulf %402, %28 : vector<8x256xf32>
    %404 = arith.addf %403, %31 : vector<8x256xf32>
    %405 = vector.extract_strided_slice %404 {offsets = [0, 0], sizes = [8, 64], strides = [1, 1]} : vector<8x256xf32> to vector<8x64xf32>
    %406 = vector.extract_strided_slice %404 {offsets = [0, 64], sizes = [8, 64], strides = [1, 1]} : vector<8x256xf32> to vector<8x64xf32>
    %407 = vector.extract_strided_slice %404 {offsets = [0, 128], sizes = [8, 64], strides = [1, 1]} : vector<8x256xf32> to vector<8x64xf32>
    %408 = vector.extract_strided_slice %404 {offsets = [0, 192], sizes = [8, 64], strides = [1, 1]} : vector<8x256xf32> to vector<8x64xf32>
    %409 = arith.mulf %406, %386 : vector<8x64xf32>
    %410 = arith.mulf %405, %407 : vector<8x64xf32>
    %411 = arith.addf %409, %410 : vector<8x64xf32>
    %412 = math.tanh %411 : vector<8x64xf32>
    %413 = arith.mulf %408, %412 : vector<8x64xf32>
    %414 = vector.extract_strided_slice %413 {offsets = [0, 0], sizes = [8, 32], strides = [1, 1]} : vector<8x64xf32> to vector<8x32xf32>
    %c2_171 = arith.constant 2 : index
    %c0_172 = arith.constant 0 : index
    %c0_173 = arith.constant 0 : index
    %415 = vector.load %arg11[%c2_171, %c0_172, %c0_173] : memref<8x8x64xf32, #tpu.memory_space<vmem>>, vector<1x8x32xf32>
    %416 = vector.shape_cast %415 : vector<1x8x32xf32> to vector<8x32xf32>
    %417 = vector.shape_cast %414 : vector<8x32xf32> to vector<1x8x32xf32>
    tpu.vector_store %arg11[%c2_171, %c0_172, %c0_173], %417 {strides = array<i32>} : memref<8x8x64xf32, #tpu.memory_space<vmem>>, vector<1x8x32xf32>,
    %418 = vector.extract_strided_slice %413 {offsets = [0, 32], sizes = [8, 32], strides = [1, 1]} : vector<8x64xf32> to vector<8x32xf32>
    %c5_174 = arith.constant 5 : index
    %c0_175 = arith.constant 0 : index
    %c32_176 = arith.constant 32 : index
    %419 = vector.load %arg11[%c5_174, %c0_175, %c32_176] : memref<8x8x64xf32, #tpu.memory_space<vmem>>, vector<1x8x32xf32>
    %420 = vector.shape_cast %419 : vector<1x8x32xf32> to vector<8x32xf32>
    %421 = vector.shape_cast %418 : vector<8x32xf32> to vector<1x8x32xf32>
    tpu.vector_store %arg11[%c5_174, %c0_175, %c32_176], %421 {strides = array<i32>} : memref<8x8x64xf32, #tpu.memory_space<vmem>>, vector<1x8x32xf32>,
    %c3_177 = arith.constant 3 : index
    %c0_178 = arith.constant 0 : index
    %c0_179 = arith.constant 0 : index
    %422 = vector.load %arg12[%c3_177, %c0_178, %c0_179] : memref<8x8x256xf32, #tpu.memory_space<vmem>>, vector<1x8x256xf32>
    %423 = vector.shape_cast %422 : vector<1x8x256xf32> to vector<8x256xf32>
    %cst_180 = arith.constant dense<0.000000e+00> : vector<8x256xf32>
    %424 = tpu.matmul %413, %290, %cst_180 {dimension_numbers = #tpu.dot_dimension_numbers<[1], [0], [0], [1], [0, 0, 1, 1], [], []>} : vector<8x64xf32>, vector<64x256xf32>, vector<8x256xf32> -> vector<8x256xf32>
    %425 = arith.addf %423, %424 : vector<8x256xf32>
    %426 = arith.mulf %425, %28 : vector<8x256xf32>
    %427 = math.tanh %426 : vector<8x256xf32>
    %428 = arith.mulf %427, %28 : vector<8x256xf32>
    %429 = arith.addf %428, %31 : vector<8x256xf32>
    %430 = vector.extract_strided_slice %429 {offsets = [0, 0], sizes = [8, 64], strides = [1, 1]} : vector<8x256xf32> to vector<8x64xf32>
    %431 = vector.extract_strided_slice %429 {offsets = [0, 64], sizes = [8, 64], strides = [1, 1]} : vector<8x256xf32> to vector<8x64xf32>
    %432 = vector.extract_strided_slice %429 {offsets = [0, 128], sizes = [8, 64], strides = [1, 1]} : vector<8x256xf32> to vector<8x64xf32>
    %433 = vector.extract_strided_slice %429 {offsets = [0, 192], sizes = [8, 64], strides = [1, 1]} : vector<8x256xf32> to vector<8x64xf32>
    %434 = arith.mulf %431, %411 : vector<8x64xf32>
    %435 = arith.mulf %430, %432 : vector<8x64xf32>
    %436 = arith.addf %434, %435 : vector<8x64xf32>
    %437 = math.tanh %436 : vector<8x64xf32>
    %438 = arith.mulf %433, %437 : vector<8x64xf32>
    %439 = vector.extract_strided_slice %438 {offsets = [0, 0], sizes = [8, 32], strides = [1, 1]} : vector<8x64xf32> to vector<8x32xf32>
    %c3_181 = arith.constant 3 : index
    %c0_182 = arith.constant 0 : index
    %c0_183 = arith.constant 0 : index
    %440 = vector.load %arg11[%c3_181, %c0_182, %c0_183] : memref<8x8x64xf32, #tpu.memory_space<vmem>>, vector<1x8x32xf32>
    %441 = vector.shape_cast %440 : vector<1x8x32xf32> to vector<8x32xf32>
    %442 = vector.shape_cast %439 : vector<8x32xf32> to vector<1x8x32xf32>
    tpu.vector_store %arg11[%c3_181, %c0_182, %c0_183], %442 {strides = array<i32>} : memref<8x8x64xf32, #tpu.memory_space<vmem>>, vector<1x8x32xf32>,
    %443 = vector.extract_strided_slice %438 {offsets = [0, 32], sizes = [8, 32], strides = [1, 1]} : vector<8x64xf32> to vector<8x32xf32>
    %c4_184 = arith.constant 4 : index
    %c0_185 = arith.constant 0 : index
    %c32_186 = arith.constant 32 : index
    %444 = vector.load %arg11[%c4_184, %c0_185, %c32_186] : memref<8x8x64xf32, #tpu.memory_space<vmem>>, vector<1x8x32xf32>
    %445 = vector.shape_cast %444 : vector<1x8x32xf32> to vector<8x32xf32>
    %446 = vector.shape_cast %443 : vector<8x32xf32> to vector<1x8x32xf32>
    tpu.vector_store %arg11[%c4_184, %c0_185, %c32_186], %446 {strides = array<i32>} : memref<8x8x64xf32, #tpu.memory_space<vmem>>, vector<1x8x32xf32>,
    %c4_187 = arith.constant 4 : index
    %c0_188 = arith.constant 0 : index
    %c0_189 = arith.constant 0 : index
    %447 = vector.load %arg12[%c4_187, %c0_188, %c0_189] : memref<8x8x256xf32, #tpu.memory_space<vmem>>, vector<1x8x256xf32>
    %448 = vector.shape_cast %447 : vector<1x8x256xf32> to vector<8x256xf32>
    %cst_190 = arith.constant dense<0.000000e+00> : vector<8x256xf32>
    %449 = tpu.matmul %438, %290, %cst_190 {dimension_numbers = #tpu.dot_dimension_numbers<[1], [0], [0], [1], [0, 0, 1, 1], [], []>} : vector<8x64xf32>, vector<64x256xf32>, vector<8x256xf32> -> vector<8x256xf32>
    %450 = arith.addf %448, %449 : vector<8x256xf32>
    %451 = arith.mulf %450, %28 : vector<8x256xf32>
    %452 = math.tanh %451 : vector<8x256xf32>
    %453 = arith.mulf %452, %28 : vector<8x256xf32>
    %454 = arith.addf %453, %31 : vector<8x256xf32>
    %455 = vector.extract_strided_slice %454 {offsets = [0, 0], sizes = [8, 64], strides = [1, 1]} : vector<8x256xf32> to vector<8x64xf32>
    %456 = vector.extract_strided_slice %454 {offsets = [0, 64], sizes = [8, 64], strides = [1, 1]} : vector<8x256xf32> to vector<8x64xf32>
    %457 = vector.extract_strided_slice %454 {offsets = [0, 128], sizes = [8, 64], strides = [1, 1]} : vector<8x256xf32> to vector<8x64xf32>
    %458 = vector.extract_strided_slice %454 {offsets = [0, 192], sizes = [8, 64], strides = [1, 1]} : vector<8x256xf32> to vector<8x64xf32>
    %459 = arith.mulf %456, %436 : vector<8x64xf32>
    %460 = arith.mulf %455, %457 : vector<8x64xf32>
    %461 = arith.addf %459, %460 : vector<8x64xf32>
    %462 = math.tanh %461 : vector<8x64xf32>
    %463 = arith.mulf %458, %462 : vector<8x64xf32>
    %464 = vector.extract_strided_slice %463 {offsets = [0, 0], sizes = [8, 32], strides = [1, 1]} : vector<8x64xf32> to vector<8x32xf32>
    %c4_191 = arith.constant 4 : index
    %c0_192 = arith.constant 0 : index
    %c0_193 = arith.constant 0 : index
    %465 = vector.load %arg11[%c4_191, %c0_192, %c0_193] : memref<8x8x64xf32, #tpu.memory_space<vmem>>, vector<1x8x32xf32>
    %466 = vector.shape_cast %465 : vector<1x8x32xf32> to vector<8x32xf32>
    %467 = vector.shape_cast %464 : vector<8x32xf32> to vector<1x8x32xf32>
    tpu.vector_store %arg11[%c4_191, %c0_192, %c0_193], %467 {strides = array<i32>} : memref<8x8x64xf32, #tpu.memory_space<vmem>>, vector<1x8x32xf32>,
    %468 = vector.extract_strided_slice %463 {offsets = [0, 32], sizes = [8, 32], strides = [1, 1]} : vector<8x64xf32> to vector<8x32xf32>
    %c3_194 = arith.constant 3 : index
    %c0_195 = arith.constant 0 : index
    %c32_196 = arith.constant 32 : index
    %469 = vector.load %arg11[%c3_194, %c0_195, %c32_196] : memref<8x8x64xf32, #tpu.memory_space<vmem>>, vector<1x8x32xf32>
    %470 = vector.shape_cast %469 : vector<1x8x32xf32> to vector<8x32xf32>
    %471 = vector.shape_cast %468 : vector<8x32xf32> to vector<1x8x32xf32>
    tpu.vector_store %arg11[%c3_194, %c0_195, %c32_196], %471 {strides = array<i32>} : memref<8x8x64xf32, #tpu.memory_space<vmem>>, vector<1x8x32xf32>,
    %c5_197 = arith.constant 5 : index
    %c0_198 = arith.constant 0 : index
    %c0_199 = arith.constant 0 : index
    %472 = vector.load %arg12[%c5_197, %c0_198, %c0_199] : memref<8x8x256xf32, #tpu.memory_space<vmem>>, vector<1x8x256xf32>
    %473 = vector.shape_cast %472 : vector<1x8x256xf32> to vector<8x256xf32>
    %cst_200 = arith.constant dense<0.000000e+00> : vector<8x256xf32>
    %474 = tpu.matmul %463, %290, %cst_200 {dimension_numbers = #tpu.dot_dimension_numbers<[1], [0], [0], [1], [0, 0, 1, 1], [], []>} : vector<8x64xf32>, vector<64x256xf32>, vector<8x256xf32> -> vector<8x256xf32>
    %475 = arith.addf %473, %474 : vector<8x256xf32>
    %476 = arith.mulf %475, %28 : vector<8x256xf32>
    %477 = math.tanh %476 : vector<8x256xf32>
    %478 = arith.mulf %477, %28 : vector<8x256xf32>
    %479 = arith.addf %478, %31 : vector<8x256xf32>
    %480 = vector.extract_strided_slice %479 {offsets = [0, 0], sizes = [8, 64], strides = [1, 1]} : vector<8x256xf32> to vector<8x64xf32>
    %481 = vector.extract_strided_slice %479 {offsets = [0, 64], sizes = [8, 64], strides = [1, 1]} : vector<8x256xf32> to vector<8x64xf32>
    %482 = vector.extract_strided_slice %479 {offsets = [0, 128], sizes = [8, 64], strides = [1, 1]} : vector<8x256xf32> to vector<8x64xf32>
    %483 = vector.extract_strided_slice %479 {offsets = [0, 192], sizes = [8, 64], strides = [1, 1]} : vector<8x256xf32> to vector<8x64xf32>
    %484 = arith.mulf %481, %461 : vector<8x64xf32>
    %485 = arith.mulf %480, %482 : vector<8x64xf32>
    %486 = arith.addf %484, %485 : vector<8x64xf32>
    %487 = math.tanh %486 : vector<8x64xf32>
    %488 = arith.mulf %483, %487 : vector<8x64xf32>
    %489 = vector.extract_strided_slice %488 {offsets = [0, 0], sizes = [8, 32], strides = [1, 1]} : vector<8x64xf32> to vector<8x32xf32>
    %c5_201 = arith.constant 5 : index
    %c0_202 = arith.constant 0 : index
    %c0_203 = arith.constant 0 : index
    %490 = vector.load %arg11[%c5_201, %c0_202, %c0_203] : memref<8x8x64xf32, #tpu.memory_space<vmem>>, vector<1x8x32xf32>
    %491 = vector.shape_cast %490 : vector<1x8x32xf32> to vector<8x32xf32>
    %492 = vector.shape_cast %489 : vector<8x32xf32> to vector<1x8x32xf32>
    tpu.vector_store %arg11[%c5_201, %c0_202, %c0_203], %492 {strides = array<i32>} : memref<8x8x64xf32, #tpu.memory_space<vmem>>, vector<1x8x32xf32>,
    %493 = vector.extract_strided_slice %488 {offsets = [0, 32], sizes = [8, 32], strides = [1, 1]} : vector<8x64xf32> to vector<8x32xf32>
    %c2_204 = arith.constant 2 : index
    %c0_205 = arith.constant 0 : index
    %c32_206 = arith.constant 32 : index
    %494 = vector.load %arg11[%c2_204, %c0_205, %c32_206] : memref<8x8x64xf32, #tpu.memory_space<vmem>>, vector<1x8x32xf32>
    %495 = vector.shape_cast %494 : vector<1x8x32xf32> to vector<8x32xf32>
    %496 = vector.shape_cast %493 : vector<8x32xf32> to vector<1x8x32xf32>
    tpu.vector_store %arg11[%c2_204, %c0_205, %c32_206], %496 {strides = array<i32>} : memref<8x8x64xf32, #tpu.memory_space<vmem>>, vector<1x8x32xf32>,
    %c6_207 = arith.constant 6 : index
    %c0_208 = arith.constant 0 : index
    %c0_209 = arith.constant 0 : index
    %497 = vector.load %arg12[%c6_207, %c0_208, %c0_209] : memref<8x8x256xf32, #tpu.memory_space<vmem>>, vector<1x8x256xf32>
    %498 = vector.shape_cast %497 : vector<1x8x256xf32> to vector<8x256xf32>
    %cst_210 = arith.constant dense<0.000000e+00> : vector<8x256xf32>
    %499 = tpu.matmul %488, %290, %cst_210 {dimension_numbers = #tpu.dot_dimension_numbers<[1], [0], [0], [1], [0, 0, 1, 1], [], []>} : vector<8x64xf32>, vector<64x256xf32>, vector<8x256xf32> -> vector<8x256xf32>
    %500 = arith.addf %498, %499 : vector<8x256xf32>
    %501 = arith.mulf %500, %28 : vector<8x256xf32>
    %502 = math.tanh %501 : vector<8x256xf32>
    %503 = arith.mulf %502, %28 : vector<8x256xf32>
    %504 = arith.addf %503, %31 : vector<8x256xf32>
    %505 = vector.extract_strided_slice %504 {offsets = [0, 0], sizes = [8, 64], strides = [1, 1]} : vector<8x256xf32> to vector<8x64xf32>
    %506 = vector.extract_strided_slice %504 {offsets = [0, 64], sizes = [8, 64], strides = [1, 1]} : vector<8x256xf32> to vector<8x64xf32>
    %507 = vector.extract_strided_slice %504 {offsets = [0, 128], sizes = [8, 64], strides = [1, 1]} : vector<8x256xf32> to vector<8x64xf32>
    %508 = vector.extract_strided_slice %504 {offsets = [0, 192], sizes = [8, 64], strides = [1, 1]} : vector<8x256xf32> to vector<8x64xf32>
    %509 = arith.mulf %506, %486 : vector<8x64xf32>
    %510 = arith.mulf %505, %507 : vector<8x64xf32>
    %511 = arith.addf %509, %510 : vector<8x64xf32>
    %512 = math.tanh %511 : vector<8x64xf32>
    %513 = arith.mulf %508, %512 : vector<8x64xf32>
    %514 = vector.extract_strided_slice %513 {offsets = [0, 0], sizes = [8, 32], strides = [1, 1]} : vector<8x64xf32> to vector<8x32xf32>
    %c6_211 = arith.constant 6 : index
    %c0_212 = arith.constant 0 : index
    %c0_213 = arith.constant 0 : index
    %515 = vector.load %arg11[%c6_211, %c0_212, %c0_213] : memref<8x8x64xf32, #tpu.memory_space<vmem>>, vector<1x8x32xf32>
    %516 = vector.shape_cast %515 : vector<1x8x32xf32> to vector<8x32xf32>
    %517 = vector.shape_cast %514 : vector<8x32xf32> to vector<1x8x32xf32>
    tpu.vector_store %arg11[%c6_211, %c0_212, %c0_213], %517 {strides = array<i32>} : memref<8x8x64xf32, #tpu.memory_space<vmem>>, vector<1x8x32xf32>,
    %518 = vector.extract_strided_slice %513 {offsets = [0, 32], sizes = [8, 32], strides = [1, 1]} : vector<8x64xf32> to vector<8x32xf32>
    %c1_214 = arith.constant 1 : index
    %c0_215 = arith.constant 0 : index
    %c32_216 = arith.constant 32 : index
    %519 = vector.load %arg11[%c1_214, %c0_215, %c32_216] : memref<8x8x64xf32, #tpu.memory_space<vmem>>, vector<1x8x32xf32>
    %520 = vector.shape_cast %519 : vector<1x8x32xf32> to vector<8x32xf32>
    %521 = vector.shape_cast %518 : vector<8x32xf32> to vector<1x8x32xf32>
    tpu.vector_store %arg11[%c1_214, %c0_215, %c32_216], %521 {strides = array<i32>} : memref<8x8x64xf32, #tpu.memory_space<vmem>>, vector<1x8x32xf32>,
    %c7_217 = arith.constant 7 : index
    %c0_218 = arith.constant 0 : index
    %c0_219 = arith.constant 0 : index
    %522 = vector.load %arg12[%c7_217, %c0_218, %c0_219] : memref<8x8x256xf32, #tpu.memory_space<vmem>>, vector<1x8x256xf32>
    %523 = vector.shape_cast %522 : vector<1x8x256xf32> to vector<8x256xf32>
    %cst_220 = arith.constant dense<0.000000e+00> : vector<8x256xf32>
    %524 = tpu.matmul %513, %290, %cst_220 {dimension_numbers = #tpu.dot_dimension_numbers<[1], [0], [0], [1], [0, 0, 1, 1], [], []>} : vector<8x64xf32>, vector<64x256xf32>, vector<8x256xf32> -> vector<8x256xf32>
    %525 = arith.addf %523, %524 : vector<8x256xf32>
    %526 = arith.mulf %525, %28 : vector<8x256xf32>
    %527 = math.tanh %526 : vector<8x256xf32>
    %528 = arith.mulf %527, %28 : vector<8x256xf32>
    %529 = arith.addf %528, %31 : vector<8x256xf32>
    %530 = vector.extract_strided_slice %529 {offsets = [0, 0], sizes = [8, 64], strides = [1, 1]} : vector<8x256xf32> to vector<8x64xf32>
    %531 = vector.extract_strided_slice %529 {offsets = [0, 64], sizes = [8, 64], strides = [1, 1]} : vector<8x256xf32> to vector<8x64xf32>
    %532 = vector.extract_strided_slice %529 {offsets = [0, 128], sizes = [8, 64], strides = [1, 1]} : vector<8x256xf32> to vector<8x64xf32>
    %533 = vector.extract_strided_slice %529 {offsets = [0, 192], sizes = [8, 64], strides = [1, 1]} : vector<8x256xf32> to vector<8x64xf32>
    %534 = arith.mulf %531, %511 : vector<8x64xf32>
    %535 = arith.mulf %530, %532 : vector<8x64xf32>
    %536 = arith.addf %534, %535 : vector<8x64xf32>
    %537 = math.tanh %536 : vector<8x64xf32>
    %538 = arith.mulf %533, %537 : vector<8x64xf32>
    %539 = vector.extract_strided_slice %538 {offsets = [0, 0], sizes = [8, 32], strides = [1, 1]} : vector<8x64xf32> to vector<8x32xf32>
    %c7_221 = arith.constant 7 : index
    %c0_222 = arith.constant 0 : index
    %c0_223 = arith.constant 0 : index
    %540 = vector.load %arg11[%c7_221, %c0_222, %c0_223] : memref<8x8x64xf32, #tpu.memory_space<vmem>>, vector<1x8x32xf32>
    %541 = vector.shape_cast %540 : vector<1x8x32xf32> to vector<8x32xf32>
    %542 = vector.shape_cast %539 : vector<8x32xf32> to vector<1x8x32xf32>
    tpu.vector_store %arg11[%c7_221, %c0_222, %c0_223], %542 {strides = array<i32>} : memref<8x8x64xf32, #tpu.memory_space<vmem>>, vector<1x8x32xf32>,
    %543 = vector.extract_strided_slice %538 {offsets = [0, 32], sizes = [8, 32], strides = [1, 1]} : vector<8x64xf32> to vector<8x32xf32>
    %c0_224 = arith.constant 0 : index
    %c0_225 = arith.constant 0 : index
    %c32_226 = arith.constant 32 : index
    %544 = vector.load %arg11[%c0_224, %c0_225, %c32_226] : memref<8x8x64xf32, #tpu.memory_space<vmem>>, vector<1x8x32xf32>
    %545 = vector.shape_cast %544 : vector<1x8x32xf32> to vector<8x32xf32>
    %546 = vector.shape_cast %543 : vector<8x32xf32> to vector<1x8x32xf32>
    tpu.vector_store %arg11[%c0_224, %c0_225, %c32_226], %546 {strides = array<i32>} : memref<8x8x64xf32, #tpu.memory_space<vmem>>, vector<1x8x32xf32>,
    %c0_227 = arith.constant 0 : index
    %c0_228 = arith.constant 0 : index
    %c0_229 = arith.constant 0 : index
    %547 = vector.load %arg11[%c0_227, %c0_228, %c0_229] : memref<8x8x64xf32, #tpu.memory_space<vmem>>, vector<8x8x64xf32>
    %548 = vector.shape_cast %547 : vector<8x8x64xf32> to vector<64x64xf32>
    %c0_230 = arith.constant 0 : index
    %c0_231 = arith.constant 0 : index
    %549 = vector.load %arg8[%c0_230, %c0_231] : memref<64x32xf32, #tpu.memory_space<vmem>>, vector<64x32xf32>
    %cst_232 = arith.constant dense<0.000000e+00> : vector<64x32xf32>
    %550 = tpu.matmul %548, %549, %cst_232 {dimension_numbers = #tpu.dot_dimension_numbers<[1], [0], [0], [1], [0, 0, 1, 1], [], []>} : vector<64x64xf32>, vector<64x32xf32>, vector<64x32xf32> -> vector<64x32xf32>
    %c0_233 = arith.constant 0 : index
    %c0_234 = arith.constant 0 : index
    %551 = vector.load %arg9[%c0_233, %c0_234] : memref<1x32xf32, #tpu.memory_space<vmem>>, vector<1x32xf32>
    %552 = vector.broadcast %551 : vector<1x32xf32> to vector<64x32xf32>
    %553 = arith.addf %550, %552 : vector<64x32xf32>
    %c0_235 = arith.constant 0 : index
    %c0_236 = arith.constant 0 : index
    %554 = vector.load %arg10[%c0_235, %c0_236] : memref<64x32xf32, #tpu.memory_space<vmem>>, vector<64x32xf32>
    tpu.vector_store %arg10[%c0_235, %c0_236], %553 {strides = array<i32>} : memref<64x32xf32, #tpu.memory_space<vmem>>, vector<64x32xf32>,
    return
  }
  func.func @transform_0(%arg0: i32) -> (i32, i32) {
    %c0_i32 = arith.constant 0 : i32
    %c0_i32_0 = arith.constant 0 : i32
    %c0_i32_1 = arith.constant 0 : i32
    return %c0_i32, %c0_i32_0 : i32, i32
  }
  func.func @transform_1(%arg0: i32) -> (i32, i32) {
    %c0_i32 = arith.constant 0 : i32
    %c0_i32_0 = arith.constant 0 : i32
    %c0_i32_1 = arith.constant 0 : i32
    return %c0_i32, %c0_i32_0 : i32, i32
  }
  func.func @transform_2(%arg0: i32) -> (i32, i32) {
    %c0_i32 = arith.constant 0 : i32
    %c0_i32_0 = arith.constant 0 : i32
    %c0_i32_1 = arith.constant 0 : i32
    return %c0_i32, %c0_i32_0 : i32, i32
  }
  func.func @transform_3(%arg0: i32) -> (i32, i32) {
    %c0_i32 = arith.constant 0 : i32
    %c0_i32_0 = arith.constant 0 : i32
    %c0_i32_1 = arith.constant 0 : i32
    return %c0_i32, %c0_i32_0 : i32, i32
  }
  func.func @transform_4(%arg0: i32) -> (i32, i32) {
    %c0_i32 = arith.constant 0 : i32
    %c0_i32_0 = arith.constant 0 : i32
    %c0_i32_1 = arith.constant 0 : i32
    return %c0_i32, %c0_i32_0 : i32, i32
  }
  func.func @transform_5(%arg0: i32) -> (i32, i32) {
    %c0_i32 = arith.constant 0 : i32
    %c0_i32_0 = arith.constant 0 : i32
    %c0_i32_1 = arith.constant 0 : i32
    return %c0_i32, %c0_i32_0 : i32, i32
  }
  func.func @transform_6(%arg0: i32) -> (i32, i32) {
    %c0_i32 = arith.constant 0 : i32
    %c0_i32_0 = arith.constant 0 : i32
    %c0_i32_1 = arith.constant 0 : i32
    return %c0_i32, %c0_i32_0 : i32, i32
  }
  func.func @transform_7(%arg0: i32) -> (i32, i32) {
    %c0_i32 = arith.constant 0 : i32
    %c0_i32_0 = arith.constant 0 : i32
    %c0_i32_1 = arith.constant 0 : i32
    return %c0_i32, %c0_i32_0 : i32, i32
  }
  func.func @transform_8(%arg0: i32) -> (i32, i32) {
    %c0_i32 = arith.constant 0 : i32
    %c0_i32_0 = arith.constant 0 : i32
    %c0_i32_1 = arith.constant 0 : i32
    return %c0_i32, %c0_i32_0 : i32, i32
  }
  func.func @transform_9(%arg0: i32) -> (i32, i32) {
    %c0_i32 = arith.constant 0 : i32
    %c0_i32_0 = arith.constant 0 : i32
    %c0_i32_1 = arith.constant 0 : i32
    return %c0_i32, %c0_i32_0 : i32, i32
  }
}

</mosaic_0001>

<llo_original>
// kernel: _lambda_.1
$region0: #{_lambda_.1}
  #allocation0 [shape = 'u32[]', space=smem, size = 0x4, offset = 0x4, fixed_abs, tag = 'smem constant byte address 0x4 - core index']
  #allocation1 [shape = 'u32[72,128]{1,0:T(1,128)}', space=vmem, size = 0x9000, scoped, tag = 'internal scratch']
  #allocation2 [shape = 'f32[8,8,64]{2,1,0:T(8,128)}', space=vmem, size = 0x8000, scoped, tag = 'scratch operand']
  #allocation3 [shape = 'f32[8,8,256]{2,1,0:T(8,128)}', space=vmem, size = 0x10000, scoped, tag = 'scratch operand']
  %s0 = inlined_call_operand.vmem [shape: f32[64,32], index: 0, kind: input, shape index: {}]
  %s1 = inlined_call_operand.vmem [shape: f32[32,256], index: 1, kind: input, shape index: {}]
  %s2 = inlined_call_operand.vmem [shape: f32[64,256], index: 2, kind: input, shape index: {}]
  %s3 = inlined_call_operand.vmem [shape: f32[1,256], index: 3, kind: input, shape index: {}]
  %s4 = inlined_call_operand.vmem [shape: f32[64,256], index: 4, kind: input, shape index: {}]
  %s5 = inlined_call_operand.hbm [shape: f32[64,256], index: 5, kind: input, shape index: {}]
  %s6 = inlined_call_operand.vmem [shape: f32[1,256], index: 6, kind: input, shape index: {}]
  %s7 = inlined_call_operand.vmem [shape: f32[64,32], index: 7, kind: input, shape index: {}]
  %s8 = inlined_call_operand.hbm [shape: f32[1,32], index: 8, kind: input, shape index: {}]
  %s9 = inlined_call_operand.vmem [shape: f32[64,32], index: 9, kind: output, shape index: {}]
  %s10 = sld [smem:[#allocation0]]
  $region54: #{_lambda_.1} parent=0
    _
  %s12 = ssub.s32 1, %s10
  %s13 = scalar_select 0, %s12, %s10
  $region1: #{_lambda_.1} parent=0
    #allocation4 [shape = 'u8[65536]{0}', space=vmem, size = 0x10000, scoped, tag = 'input window, operand 5, single buffered']
    #allocation5 [shape = 's32[1]{0}', space=sflag, size = 0x4, scoped, tag = 'scoped memory for _lambda_.1']
    #allocation6 [shape = 'u8[512]{0}', space=vmem, size = 0x400, scoped, tag = 'input window, operand 8, single buffered']
    #allocation7 [shape = 's32[1]{0}', space=sflag, size = 0x4, scoped, tag = 'scoped memory for _lambda_.1']
    %14 = vsyncpa [#allocation5], 0
    %15 = vsyncpa [#allocation7], 0
    // Predicated region
    $region2: #{_lambda_.1} parent=1 // pred_check
      _
    $region3: #{_lambda_.1} parent=1 // pred_check_branch
      %17 = sbr.rel (0) target = $region5
    $region4: #{_lambda_.1} parent=1 // pred_region
      _
    $region5: #{_lambda_.1} parent=1 // pred_fallthru
      _
    // Predicated region
    $region6: #{_lambda_.1} parent=1 // pred_check
      _
    $region7: #{_lambda_.1} parent=1 // pred_check_branch
      %19 = sbr.rel (0) target = $region9
    $region8: #{_lambda_.1} parent=1 // pred_region
      _
    $region9: #{_lambda_.1} parent=1 // pred_fallthru
      _
    // Predicated region
    $region10: #{_lambda_.1} parent=1 // pred_check
      _
    $region11: #{_lambda_.1} parent=1 // pred_check_branch
      %21 = sbr.rel (0) target = $region13
    $region12: #{_lambda_.1} parent=1 // pred_region
      _
    $region13: #{_lambda_.1} parent=1 // pred_fallthru
      _
    // Predicated region
    $region14: #{_lambda_.1} parent=1 // pred_check
      _
    $region15: #{_lambda_.1} parent=1 // pred_check_branch
      %23 = sbr.rel (0) target = $region17
    $region16: #{_lambda_.1} parent=1 // pred_region
      _
    $region17: #{_lambda_.1} parent=1 // pred_fallthru
      _
    // Predicated region
    $region18: #{_lambda_.1} parent=1 // pred_check
      _
    $region19: #{_lambda_.1} parent=1 // pred_check_branch
      %25 = sbr.rel (0) target = $region21
    $region20: #{_lambda_.1} parent=1 // pred_region
      _
    $region21: #{_lambda_.1} parent=1 // pred_fallthru
      _
    // Predicated region
    $region22: #{_lambda_.1} parent=1 // pred_check
      _
    $region23: #{_lambda_.1} parent=1 // pred_check_branch
      %27 = sbr.rel (0) target = $region25
    $region24: #{_lambda_.1} parent=1 // pred_region
      %29 = vsyncadd [#allocation5], 0
      %s30 = sshll.u32 %s5, 4
      %s31 = int_to_ptr.hbm [resolvable:$true] %s30
      %s32 = sshll.u32 [#allocation4], 4
      %s33 = int_to_ptr.vmem [resolvable:$true] %s32
      %38 = dma.hbm_to_vmem [thread:$0]  %s31, 2048, %s33, [#allocation5], 256, 256, 16
    $region25: #{_lambda_.1} parent=1 // pred_fallthru
      _
    // Predicated region
    $region26: #{_lambda_.1} parent=1 // pred_check
      _
    $region27: #{_lambda_.1} parent=1 // pred_check_branch
      %40 = sbr.rel (0) target = $region29
    $region28: #{_lambda_.1} parent=1 // pred_region
      _
    $region29: #{_lambda_.1} parent=1 // pred_fallthru
      _
    // Predicated region
    $region30: #{_lambda_.1} parent=1 // pred_check
      _
    $region31: #{_lambda_.1} parent=1 // pred_check_branch
      %42 = sbr.rel (0) target = $region33
    $region32: #{_lambda_.1} parent=1 // pred_region
      _
    $region33: #{_lambda_.1} parent=1 // pred_fallthru
      _
    // Predicated region
    $region34: #{_lambda_.1} parent=1 // pred_check
      _
    $region35: #{_lambda_.1} parent=1 // pred_check_branch
      %44 = sbr.rel (0) target = $region37
    $region36: #{_lambda_.1} parent=1 // pred_region
      %46 = vsyncadd [#allocation7], 0
      %s48 = sshll.u32 %s8, 4
      %s49 = int_to_ptr.hbm [resolvable:$true] %s48
      %s50 = sshll.u32 [#allocation6], 4
      %s51 = int_to_ptr.vmem [resolvable:$true] %s50
      %53 = dma.hbm_to_vmem [thread:$0]  %s49, 16, %s51, [#allocation7]
    $region37: #{_lambda_.1} parent=1 // pred_fallthru
      _
    // Predicated region
    $region38: #{_lambda_.1} parent=1 // pred_check
      _
    $region39: #{_lambda_.1} parent=1 // pred_check_branch
      %55 = sbr.rel (0) target = $region41
    $region40: #{_lambda_.1} parent=1 // pred_region
      %57 = dma.done [#allocation5], 2048
    $region41: #{_lambda_.1} parent=1 // pred_fallthru
      _
    // Predicated region
    $region42: #{_lambda_.1} parent=1 // pred_check
      _
    $region43: #{_lambda_.1} parent=1 // pred_check_branch
      %59 = sbr.rel (0) target = $region45
    $region44: #{_lambda_.1} parent=1 // pred_region
      %61 = dma.done [#allocation7], 16
    $region45: #{_lambda_.1} parent=1 // pred_fallthru
      _
    %v62 = vlaneseq
    %v63 = vand.u32 %v62, 127
    %v64 = vadd.s32 %v63, 128
    %vm65 = vcmp.lt.s32.totalorder %v63, 32
    %vm66 = vcmp.lt.s32.totalorder %v64, 32
    %vm67 = vcmp.ge.s32.totalorder %v63, 64
    %vm68 = vcmp.ge.s32.totalorder %v64, 64
    %vm69 = vcmp.lt.s32.totalorder %v63, 96
    %vm70 = vcmp.lt.s32.totalorder %v64, 96
    %vm71 = vmand %vm67, %vm69
    %vm72 = vmand %vm68, %vm70
    %vm73 = vmor %vm65, %vm71
    %vm74 = vmor %vm66, %vm72
    %vm75 = vcmp.ge.s32.totalorder %v63, 128
    %vm76 = vcmp.ge.s32.totalorder %v64, 128
    %vm77 = vcmp.lt.s32.totalorder %v63, 160
    %vm78 = vcmp.lt.s32.totalorder %v64, 160
    %vm79 = vmand %vm75, %vm77
    %vm80 = vmand %vm76, %vm78
    %vm81 = vmor %vm73, %vm79
    %vm82 = vmor %vm74, %vm80
    %vm83 = vcmp.ge.s32.totalorder %v63, 192
    %vm84 = vcmp.ge.s32.totalorder %v64, 192
    %vm85 = vcmp.lt.s32.totalorder %v63, 224
    %vm86 = vcmp.lt.s32.totalorder %v64, 224
    %vm87 = vmand %vm83, %vm85
    %vm88 = vmand %vm84, %vm86
    %vm89 = vmor %vm81, %vm87
    %vm90 = vmor %vm82, %vm88
    %vm91 = vcmp.lt.s32.totalorder %v63, 192
    %vm92 = vcmp.lt.s32.totalorder %v64, 192
    %vm93 = vmand %vm75, %vm91
    %vm94 = vmand %vm76, %vm92
    %v95 = vsel %vm93, 1.0, 0.5
    %v96 = vsel %vm94, 1.0, 0.5
    %v97 = vsel %vm93, 0.0, 0.5
    %v98 = vsel %vm94, 0.0, 0.5
    %v99 = vld [vmem:[%s1] sm:$0xff]
    %v100 = vld [vmem:[%s1 + $0x8] sm:$0xff]
    %v101 = vld [vmem:[%s1 + $0x10] sm:$0xff]
    %v102 = vld [vmem:[%s1 + $0x18] sm:$0xff]
    %v103 = vld [vmem:[%s1 + $0x20] sm:$0xff]
    %v104 = vld [vmem:[%s1 + $0x28] sm:$0xff]
    %v105 = vld [vmem:[%s1 + $0x30] sm:$0xff]
    %v106 = vld [vmem:[%s1 + $0x38] sm:$0xff]
    %v107 = vld [vmem:[%s2] sm:$0xff]
    %v108 = vld [vmem:[%s2 + $0x8] sm:$0xff]
    %v109 = vld [vmem:[%s2 + $0x10] sm:$0xff]
    %v110 = vld [vmem:[%s2 + $0x18] sm:$0xff]
    %v111 = vld [vmem:[%s2 + $0x20] sm:$0xff]
    %v112 = vld [vmem:[%s2 + $0x28] sm:$0xff]
    %v113 = vld [vmem:[%s2 + $0x30] sm:$0xff]
    %v114 = vld [vmem:[%s2 + $0x38] sm:$0xff]
    %v115 = vld [vmem:[%s2 + $0x40] sm:$0xff]
    %v116 = vld [vmem:[%s2 + $0x48] sm:$0xff]
    %v117 = vld [vmem:[%s2 + $0x50] sm:$0xff]
    %v118 = vld [vmem:[%s2 + $0x58] sm:$0xff]
    %v119 = vld [vmem:[%s2 + $0x60] sm:$0xff]
    %v120 = vld [vmem:[%s2 + $0x68] sm:$0xff]
    %v121 = vld [vmem:[%s2 + $0x70] sm:$0xff]
    %v122 = vld [vmem:[%s2 + $0x78] sm:$0xff]
    %v123 = vld [vmem:[%s3] sm:$0x3]
    %v124 = vld [vmem:[%s0] sm:$0xff]
    %v125 = vld [vmem:[%s0 + $0x8] sm:$0xff]
    %v126 = vld [vmem:[%s0 + $0x10] sm:$0xff]
    %v127 = vld [vmem:[%s0 + $0x18] sm:$0xff]
    %v128 = vld [vmem:[%s0 + $0x20] sm:$0xff]
    %v129 = vld [vmem:[%s0 + $0x28] sm:$0xff]
    %v130 = vld [vmem:[%s0 + $0x30] sm:$0xff]
    %v131 = vld [vmem:[%s0 + $0x38] sm:$0xff]
    %v133 = vperm.slane %v123, 0
    %v134 = vperm.slane %v123, 1
    %vm137 = vcmask 261120
    %v139 = vsel %vm137, %v124, 0
    %v142 = vsel %vm137, %v125, 0
    %v145 = vsel %vm137, %v126, 0
    %v148 = vsel %vm137, %v127, 0
    %v151 = vsel %vm137, %v128, 0
    %v154 = vsel %vm137, %v129, 0
    %v157 = vsel %vm137, %v130, 0
    %v160 = vsel %vm137, %v131, 0
    %162 = vmatpush.msra.mxu0 0.0
    %163 = vmatpush.msra.mxu0 0.0
    %164 = vmatpush.msra.mxu0 0.0
    %165 = vmatpush.msra.mxu0 0.0
    %166 = vmatpush.msra.mxu0 0.0
    %167 = vmatpush.msra.mxu0 0.0
    %168 = vmatpush.msra.mxu0 0.0
    %169 = vmatpush.msra.mxu0 0.0
    %170 = vmatpush.msra.mxu0 0.0
    %171 = vmatpush.msra.mxu0 0.0
    %172 = vmatpush.msra.mxu0 0.0
    %173 = vmatpush.msra.mxu0 0.0
    %174 = vmatpush.msra.mxu0 %v105
    %175 = vmatpush.msra.mxu0 %v103
    %176 = vmatpush.msra.mxu0 %v101
    %177 = vmatpush.msra.mxu0 %v99
    %178 = vmatmul.f32.gmra.mxu0 %v139
    %v179 = vpop.f32.mrf.mxu0
    %v180 = vadd.f32 %v133, %v179
    %181 = vmatmul.f32.gmra.mxu0 %v142
    %v182 = vpop.f32.mrf.mxu0
    %v183 = vadd.f32 %v133, %v182
    %184 = vmatmul.f32.gmra.mxu0 %v145
    %v185 = vpop.f32.mrf.mxu0
    %v186 = vadd.f32 %v133, %v185
    %187 = vmatmul.f32.gmra.mxu0 %v148
    %v188 = vpop.f32.mrf.mxu0
    %v189 = vadd.f32 %v133, %v188
    %190 = vmatmul.f32.gmra.mxu0 %v151
    %v191 = vpop.f32.mrf.mxu0
    %v192 = vadd.f32 %v133, %v191
    %193 = vmatmul.f32.gmra.mxu0 %v154
    %v194 = vpop.f32.mrf.mxu0
    %v195 = vadd.f32 %v133, %v194
    %196 = vmatmul.f32.gmra.mxu0 %v157
    %v197 = vpop.f32.mrf.mxu0
    %v198 = vadd.f32 %v133, %v197
    %199 = vmatmul.f32.gmra.mxu0 %v160
    %v200 = vpop.f32.mrf.mxu0
    %v201 = vadd.f32 %v133, %v200
    %202 = vdwg.mxu0
    %203 = vmatpush.msra.mxu0 0.0
    %204 = vmatpush.msra.mxu0 0.0
    %205 = vmatpush.msra.mxu0 0.0
    %206 = vmatpush.msra.mxu0 0.0
    %207 = vmatpush.msra.mxu0 0.0
    %208 = vmatpush.msra.mxu0 0.0
    %209 = vmatpush.msra.mxu0 0.0
    %210 = vmatpush.msra.mxu0 0.0
    %211 = vmatpush.msra.mxu0 0.0
    %212 = vmatpush.msra.mxu0 0.0
    %213 = vmatpush.msra.mxu0 0.0
    %214 = vmatpush.msra.mxu0 0.0
    %215 = vmatpush.msra.mxu0 %v106
    %216 = vmatpush.msra.mxu0 %v104
    %217 = vmatpush.msra.mxu0 %v102
    %218 = vmatpush.msra.mxu0 %v100
    %219 = vmatmul.f32.gmra.mxu0 %v139
    %v220 = vpop.f32.mrf.mxu0
    %v221 = vadd.f32 %v134, %v220
    %222 = vmatmul.f32.gmra.mxu0 %v142
    %v223 = vpop.f32.mrf.mxu0
    %v224 = vadd.f32 %v134, %v223
    %225 = vmatmul.f32.gmra.mxu0 %v145
    %v226 = vpop.f32.mrf.mxu0
    %v227 = vadd.f32 %v134, %v226
    %228 = vmatmul.f32.gmra.mxu0 %v148
    %v229 = vpop.f32.mrf.mxu0
    %v230 = vadd.f32 %v134, %v229
    %231 = vmatmul.f32.gmra.mxu0 %v151
    %v232 = vpop.f32.mrf.mxu0
    %v233 = vadd.f32 %v134, %v232
    %234 = vmatmul.f32.gmra.mxu0 %v154
    %v235 = vpop.f32.mrf.mxu0
    %v236 = vadd.f32 %v134, %v235
    %237 = vmatmul.f32.gmra.mxu0 %v157
    %v238 = vpop.f32.mrf.mxu0
    %v239 = vadd.f32 %v134, %v238
    %240 = vmatmul.f32.gmra.mxu0 %v160
    %v241 = vpop.f32.mrf.mxu0
    %v242 = vadd.f32 %v134, %v241
    %243 = vdwg.mxu0
    %v244 = vsel %vm89, %v180, %v201
    %v245 = vsel %vm90, %v221, %v242
    %246 = vst [vmem:[#allocation3] sm:$0xff] %v244
    %247 = vst [vmem:[#allocation3 + $0x8] sm:$0xff] %v245
    %v248 = vsel %vm89, %v183, %v198
    %v249 = vsel %vm90, %v224, %v239
    %s250 = scalar_lea.vmem [#allocation3], 16
    %251 = vst [vmem:[%s250] sm:$0xff] %v248
    %252 = vst [vmem:[%s250 + $0x8] sm:$0xff] %v249
    %v253 = vsel %vm89, %v186, %v195
    %v254 = vsel %vm90, %v227, %v236
    %s255 = scalar_lea.vmem [#allocation3], 32
    %256 = vst [vmem:[%s255] sm:$0xff] %v253
    %257 = vst [vmem:[%s255 + $0x8] sm:$0xff] %v254
    %v258 = vsel %vm89, %v189, %v192
    %v259 = vsel %vm90, %v230, %v233
    %s260 = scalar_lea.vmem [#allocation3], 48
    %261 = vst [vmem:[%s260] sm:$0xff] %v258
    %262 = vst [vmem:[%s260 + $0x8] sm:$0xff] %v259
    %v263 = vsel %vm89, %v192, %v189
    %v264 = vsel %vm90, %v233, %v230
    %s265 = scalar_lea.vmem [#allocation3], 64
    %266 = vst [vmem:[%s265] sm:$0xff] %v263
    %267 = vst [vmem:[%s265 + $0x8] sm:$0xff] %v264
    %v268 = vsel %vm89, %v195, %v186
    %v269 = vsel %vm90, %v236, %v227
    %s270 = scalar_lea.vmem [#allocation3], 80
    %271 = vst [vmem:[%s270] sm:$0xff] %v268
    %272 = vst [vmem:[%s270 + $0x8] sm:$0xff] %v269
    %v273 = vsel %vm89, %v198, %v183
    %v274 = vsel %vm90, %v239, %v224
    %s275 = scalar_lea.vmem [#allocation3], 96
    %276 = vst [vmem:[%s275] sm:$0xff] %v273
    %277 = vst [vmem:[%s275 + $0x8] sm:$0xff] %v274
    %v278 = vsel %vm89, %v201, %v180
    %v279 = vsel %vm90, %v242, %v221
    %s280 = scalar_lea.vmem [#allocation3], 112
    %281 = vst [vmem:[%s280] sm:$0xff] %v278
    %282 = vst [vmem:[%s280 + $0x8] sm:$0xff] %v279
    %v283 = vld [vmem:[#allocation3] sm:$0xff]
    %v284 = vld [vmem:[#allocation3 + $0x8] sm:$0xff]
    %vm285 = vcmask 523264
    %v287 = vsel %vm285, 0.0, 0
    %289 = vmatpush.msra.mxu0 0.0
    %290 = vmatpush.msra.mxu0 0.0
    %291 = vmatpush.msra.mxu0 0.0
    %292 = vmatpush.msra.mxu0 0.0
    %293 = vmatpush.msra.mxu0 0.0
    %294 = vmatpush.msra.mxu0 0.0
    %295 = vmatpush.msra.mxu0 0.0
    %296 = vmatpush.msra.mxu0 0.0
    %297 = vmatpush.msra.mxu0 %v121
    %298 = vmatpush.msra.mxu0 %v119
    %299 = vmatpush.msra.mxu0 %v117
    %300 = vmatpush.msra.mxu0 %v115
    %301 = vmatpush.msra.mxu0 %v113
    %302 = vmatpush.msra.mxu0 %v111
    %303 = vmatpush.msra.mxu0 %v109
    %304 = vmatpush.msra.mxu0 %v107
    %305 = vmatmul.f32.gmra.mxu0 %v287
    %v306 = vpop.f32.mrf.mxu0
    %v307 = vadd.f32 0.0, %v306
    %308 = vdwg.mxu0
    %309 = vmatpush.msra.mxu0 0.0
    %310 = vmatpush.msra.mxu0 0.0
    %311 = vmatpush.msra.mxu0 0.0
    %312 = vmatpush.msra.mxu0 0.0
    %313 = vmatpush.msra.mxu0 0.0
    %314 = vmatpush.msra.mxu0 0.0
    %315 = vmatpush.msra.mxu0 0.0
    %316 = vmatpush.msra.mxu0 0.0
    %317 = vmatpush.msra.mxu0 %v122
    %318 = vmatpush.msra.mxu0 %v120
    %319 = vmatpush.msra.mxu0 %v118
    %320 = vmatpush.msra.mxu0 %v116
    %321 = vmatpush.msra.mxu0 %v114
    %322 = vmatpush.msra.mxu0 %v112
    %323 = vmatpush.msra.mxu0 %v110
    %324 = vmatpush.msra.mxu0 %v108
    %325 = vmatmul.f32.gmra.mxu0 %v287
    %v326 = vpop.f32.mrf.mxu0
    %v327 = vadd.f32 0.0, %v326
    %328 = vdwg.mxu0
    %v329 = vadd.f32 %v283, %v307
    %v330 = vadd.f32 %v284, %v327
    %v331 = vmul.f32 %v329, %v95
    %v332 = vmul.f32 %v330, %v96
    %v333 = vtanh.pop %v331
    %v334 = vtanh.pop %v332
    %v335 = vmul.f32 %v333, %v95
    %v336 = vmul.f32 %v334, %v96
    %v337 = vadd.f32 %v335, %v97
    %v338 = vadd.f32 %v336, %v98
    %v339 = vmul.f32 %v337, 0.0
    %v340 = vmul.f32 %v337, %v338
    %342 = vrot.lane.b32.xlu0 %v340, 64
    %v343 = vpop.permute.xlu0 %342
    %v345 = vadd.f32 %v339, %v343
    %v346 = vtanh.pop %v345
    %v347 = vmul.f32 %v338, %v346
    %349 = vrot.lane.b32.xlu0 %v347, 64
    %v350 = vpop.permute.xlu0 %349
    %352 = vst.msk [vmem:[#allocation2] sm:$0xff] %vm137, %v350
    %s353 = scalar_lea.vmem [#allocation2], 56
    %vm354 = vcmask 523520
    %355 = vst.msk [vmem:[%s353] sm:$0xff] %vm354, %v350
    %v356 = vld [vmem:[%s250] sm:$0xff]
    %v357 = vld [vmem:[%s250 + $0x8] sm:$0xff]
    %v358 = vsel %vm285, %v350, 0
    %360 = vmatpush.msra.mxu0 0.0
    %361 = vmatpush.msra.mxu0 0.0
    %362 = vmatpush.msra.mxu0 0.0
    %363 = vmatpush.msra.mxu0 0.0
    %364 = vmatpush.msra.mxu0 0.0
    %365 = vmatpush.msra.mxu0 0.0
    %366 = vmatpush.msra.mxu0 0.0
    %367 = vmatpush.msra.mxu0 0.0
    %368 = vmatpush.msra.mxu0 %v121
    %369 = vmatpush.msra.mxu0 %v119
    %370 = vmatpush.msra.mxu0 %v117
    %371 = vmatpush.msra.mxu0 %v115
    %372 = vmatpush.msra.mxu0 %v113
    %373 = vmatpush.msra.mxu0 %v111
    %374 = vmatpush.msra.mxu0 %v109
    %375 = vmatpush.msra.mxu0 %v107
    %376 = vmatmul.f32.gmra.mxu0 %v358
    %v377 = vpop.f32.mrf.mxu0
    %v378 = vadd.f32 0.0, %v377
    %379 = vdwg.mxu0
    %380 = vmatpush.msra.mxu0 0.0
    %381 = vmatpush.msra.mxu0 0.0
    %382 = vmatpush.msra.mxu0 0.0
    %383 = vmatpush.msra.mxu0 0.0
    %384 = vmatpush.msra.mxu0 0.0
    %385 = vmatpush.msra.mxu0 0.0
    %386 = vmatpush.msra.mxu0 0.0
    %387 = vmatpush.msra.mxu0 0.0
    %388 = vmatpush.msra.mxu0 %v122
    %389 = vmatpush.msra.mxu0 %v120
    %390 = vmatpush.msra.mxu0 %v118
    %391 = vmatpush.msra.mxu0 %v116
    %392 = vmatpush.msra.mxu0 %v114
    %393 = vmatpush.msra.mxu0 %v112
    %394 = vmatpush.msra.mxu0 %v110
    %395 = vmatpush.msra.mxu0 %v108
    %396 = vmatmul.f32.gmra.mxu0 %v358
    %v397 = vpop.f32.mrf.mxu0
    %v398 = vadd.f32 0.0, %v397
    %399 = vdwg.mxu0
    %v400 = vadd.f32 %v356, %v378
    %v401 = vadd.f32 %v357, %v398
    %v402 = vmul.f32 %v400, %v95
    %v403 = vmul.f32 %v401, %v96
    %v404 = vtanh.pop %v402
    %v405 = vtanh.pop %v403
    %v406 = vmul.f32 %v404, %v95
    %v407 = vmul.f32 %v405, %v96
    %v408 = vadd.f32 %v406, %v97
    %v409 = vadd.f32 %v407, %v98
    %v410 = vmul.f32 %v408, %v345
    %v411 = vmul.f32 %v408, %v409
    %413 = vrot.lane.b32.xlu0 %v411, 64
    %v414 = vpop.permute.xlu0 %413
    %v416 = vadd.f32 %v410, %v414
    %v417 = vtanh.pop %v416
    %v418 = vmul.f32 %v409, %v417
    %420 = vrot.lane.b32.xlu0 %v418, 64
    %v421 = vpop.permute.xlu0 %420
    %s423 = scalar_lea.vmem [#allocation2], 8
    %424 = vst.msk [vmem:[%s423] sm:$0xff] %vm137, %v421
    %s425 = scalar_lea.vmem [#allocation2], 48
    %426 = vst.msk [vmem:[%s425] sm:$0xff] %vm354, %v421
    %v427 = vld [vmem:[%s255] sm:$0xff]
    %v428 = vld [vmem:[%s255 + $0x8] sm:$0xff]
    %v429 = vsel %vm285, %v421, 0
    %431 = vmatpush.msra.mxu0 0.0
    %432 = vmatpush.msra.mxu0 0.0
    %433 = vmatpush.msra.mxu0 0.0
    %434 = vmatpush.msra.mxu0 0.0
    %435 = vmatpush.msra.mxu0 0.0
    %436 = vmatpush.msra.mxu0 0.0
    %437 = vmatpush.msra.mxu0 0.0
    %438 = vmatpush.msra.mxu0 0.0
    %439 = vmatpush.msra.mxu0 %v121
    %440 = vmatpush.msra.mxu0 %v119
    %441 = vmatpush.msra.mxu0 %v117
    %442 = vmatpush.msra.mxu0 %v115
    %443 = vmatpush.msra.mxu0 %v113
    %444 = vmatpush.msra.mxu0 %v111
    %445 = vmatpush.msra.mxu0 %v109
    %446 = vmatpush.msra.mxu0 %v107
    %447 = vmatmul.f32.gmra.mxu0 %v429
    %v448 = vpop.f32.mrf.mxu0
    %v449 = vadd.f32 0.0, %v448
    %450 = vdwg.mxu0
    %451 = vmatpush.msra.mxu0 0.0
    %452 = vmatpush.msra.mxu0 0.0
    %453 = vmatpush.msra.mxu0 0.0
    %454 = vmatpush.msra.mxu0 0.0
    %455 = vmatpush.msra.mxu0 0.0
    %456 = vmatpush.msra.mxu0 0.0
    %457 = vmatpush.msra.mxu0 0.0
    %458 = vmatpush.msra.mxu0 0.0
    %459 = vmatpush.msra.mxu0 %v122
    %460 = vmatpush.msra.mxu0 %v120
    %461 = vmatpush.msra.mxu0 %v118
    %462 = vmatpush.msra.mxu0 %v116
    %463 = vmatpush.msra.mxu0 %v114
    %464 = vmatpush.msra.mxu0 %v112
    %465 = vmatpush.msra.mxu0 %v110
    %466 = vmatpush.msra.mxu0 %v108
    %467 = vmatmul.f32.gmra.mxu0 %v429
    %v468 = vpop.f32.mrf.mxu0
    %v469 = vadd.f32 0.0, %v468
    %470 = vdwg.mxu0
    %v471 = vadd.f32 %v427, %v449
    %v472 = vadd.f32 %v428, %v469
    %v473 = vmul.f32 %v471, %v95
    %v474 = vmul.f32 %v472, %v96
    %v475 = vtanh.pop %v473
    %v476 = vtanh.pop %v474
    %v477 = vmul.f32 %v475, %v95
    %v478 = vmul.f32 %v476, %v96
    %v479 = vadd.f32 %v477, %v97
    %v480 = vadd.f32 %v478, %v98
    %v481 = vmul.f32 %v479, %v416
    %v482 = vmul.f32 %v479, %v480
    %484 = vrot.lane.b32.xlu0 %v482, 64
    %v485 = vpop.permute.xlu0 %484
    %v487 = vadd.f32 %v481, %v485
    %v488 = vtanh.pop %v487
    %v489 = vmul.f32 %v480, %v488
    %491 = vrot.lane.b32.xlu0 %v489, 64
    %v492 = vpop.permute.xlu0 %491
    %s494 = scalar_lea.vmem [#allocation2], 16
    %495 = vst.msk [vmem:[%s494] sm:$0xff] %vm137, %v492
    %s496 = scalar_lea.vmem [#allocation2], 40
    %497 = vst.msk [vmem:[%s496] sm:$0xff] %vm354, %v492
    %v498 = vld [vmem:[%s260] sm:$0xff]
    %v499 = vld [vmem:[%s260 + $0x8] sm:$0xff]
    %v500 = vsel %vm285, %v492, 0
    %502 = vmatpush.msra.mxu0 0.0
    %503 = vmatpush.msra.mxu0 0.0
    %504 = vmatpush.msra.mxu0 0.0
    %505 = vmatpush.msra.mxu0 0.0
    %506 = vmatpush.msra.mxu0 0.0
    %507 = vmatpush.msra.mxu0 0.0
    %508 = vmatpush.msra.mxu0 0.0
    %509 = vmatpush.msra.mxu0 0.0
    %510 = vmatpush.msra.mxu0 %v121
    %511 = vmatpush.msra.mxu0 %v119
    %512 = vmatpush.msra.mxu0 %v117
    %513 = vmatpush.msra.mxu0 %v115
    %514 = vmatpush.msra.mxu0 %v113
    %515 = vmatpush.msra.mxu0 %v111
    %516 = vmatpush.msra.mxu0 %v109
    %517 = vmatpush.msra.mxu0 %v107
    %518 = vmatmul.f32.gmra.mxu0 %v500
    %v519 = vpop.f32.mrf.mxu0
    %v520 = vadd.f32 0.0, %v519
    %521 = vdwg.mxu0
    %522 = vmatpush.msra.mxu0 0.0
    %523 = vmatpush.msra.mxu0 0.0
    %524 = vmatpush.msra.mxu0 0.0
    %525 = vmatpush.msra.mxu0 0.0
    %526 = vmatpush.msra.mxu0 0.0
    %527 = vmatpush.msra.mxu0 0.0
    %528 = vmatpush.msra.mxu0 0.0
    %529 = vmatpush.msra.mxu0 0.0
    %530 = vmatpush.msra.mxu0 %v122
    %531 = vmatpush.msra.mxu0 %v120
    %532 = vmatpush.msra.mxu0 %v118
    %533 = vmatpush.msra.mxu0 %v116
    %534 = vmatpush.msra.mxu0 %v114
    %535 = vmatpush.msra.mxu0 %v112
    %536 = vmatpush.msra.mxu0 %v110
    %537 = vmatpush.msra.mxu0 %v108
    %538 = vmatmul.f32.gmra.mxu0 %v500
    %v539 = vpop.f32.mrf.mxu0
    %v540 = vadd.f32 0.0, %v539
    %541 = vdwg.mxu0
    %v542 = vadd.f32 %v498, %v520
    %v543 = vadd.f32 %v499, %v540
    %v544 = vmul.f32 %v542, %v95
    %v545 = vmul.f32 %v543, %v96
    %v546 = vtanh.pop %v544
    %v547 = vtanh.pop %v545
    %v548 = vmul.f32 %v546, %v95
    %v549 = vmul.f32 %v547, %v96
    %v550 = vadd.f32 %v548, %v97
    %v551 = vadd.f32 %v549, %v98
    %v552 = vmul.f32 %v550, %v487
    %v553 = vmul.f32 %v550, %v551
    %555 = vrot.lane.b32.xlu0 %v553, 64
    %v556 = vpop.permute.xlu0 %555
    %v558 = vadd.f32 %v552, %v556
    %v559 = vtanh.pop %v558
    %v560 = vmul.f32 %v551, %v559
    %562 = vrot.lane.b32.xlu0 %v560, 64
    %v563 = vpop.permute.xlu0 %562
    %s565 = scalar_lea.vmem [#allocation2], 24
    %566 = vst.msk [vmem:[%s565] sm:$0xff] %vm137, %v563
    %s567 = scalar_lea.vmem [#allocation2], 32
    %568 = vst.msk [vmem:[%s567] sm:$0xff] %vm354, %v563
    %v569 = vld [vmem:[%s265] sm:$0xff]
    %v570 = vld [vmem:[%s265 + $0x8] sm:$0xff]
    %v571 = vsel %vm285, %v563, 0
    %573 = vmatpush.msra.mxu0 0.0
    %574 = vmatpush.msra.mxu0 0.0
    %575 = vmatpush.msra.mxu0 0.0
    %576 = vmatpush.msra.mxu0 0.0
    %577 = vmatpush.msra.mxu0 0.0
    %578 = vmatpush.msra.mxu0 0.0
    %579 = vmatpush.msra.mxu0 0.0
    %580 = vmatpush.msra.mxu0 0.0
    %581 = vmatpush.msra.mxu0 %v121
    %582 = vmatpush.msra.mxu0 %v119
    %583 = vmatpush.msra.mxu0 %v117
    %584 = vmatpush.msra.mxu0 %v115
    %585 = vmatpush.msra.mxu0 %v113
    %586 = vmatpush.msra.mxu0 %v111
    %587 = vmatpush.msra.mxu0 %v109
    %588 = vmatpush.msra.mxu0 %v107
    %589 = vmatmul.f32.gmra.mxu0 %v571
    %v590 = vpop.f32.mrf.mxu0
    %v591 = vadd.f32 0.0, %v590
    %592 = vdwg.mxu0
    %593 = vmatpush.msra.mxu0 0.0
    %594 = vmatpush.msra.mxu0 0.0
    %595 = vmatpush.msra.mxu0 0.0
    %596 = vmatpush.msra.mxu0 0.0
    %597 = vmatpush.msra.mxu0 0.0
    %598 = vmatpush.msra.mxu0 0.0
    %599 = vmatpush.msra.mxu0 0.0
    %600 = vmatpush.msra.mxu0 0.0
    %601 = vmatpush.msra.mxu0 %v122
    %602 = vmatpush.msra.mxu0 %v120
    %603 = vmatpush.msra.mxu0 %v118
    %604 = vmatpush.msra.mxu0 %v116
    %605 = vmatpush.msra.mxu0 %v114
    %606 = vmatpush.msra.mxu0 %v112
    %607 = vmatpush.msra.mxu0 %v110
    %608 = vmatpush.msra.mxu0 %v108
    %609 = vmatmul.f32.gmra.mxu0 %v571
    %v610 = vpop.f32.mrf.mxu0
    %v611 = vadd.f32 0.0, %v610
    %612 = vdwg.mxu0
    %v613 = vadd.f32 %v569, %v591
    %v614 = vadd.f32 %v570, %v611
    %v615 = vmul.f32 %v613, %v95
    %v616 = vmul.f32 %v614, %v96
    %v617 = vtanh.pop %v615
    %v618 = vtanh.pop %v616
    %v619 = vmul.f32 %v617, %v95
    %v620 = vmul.f32 %v618, %v96
    %v621 = vadd.f32 %v619, %v97
    %v622 = vadd.f32 %v620, %v98
    %v623 = vmul.f32 %v621, %v558
    %v624 = vmul.f32 %v621, %v622
    %626 = vrot.lane.b32.xlu0 %v624, 64
    %v627 = vpop.permute.xlu0 %626
    %v629 = vadd.f32 %v623, %v627
    %v630 = vtanh.pop %v629
    %v631 = vmul.f32 %v622, %v630
    %633 = vrot.lane.b32.xlu0 %v631, 64
    %v634 = vpop.permute.xlu0 %633
    %636 = vst.msk [vmem:[%s567] sm:$0xff] %vm137, %v634
    %637 = vst.msk [vmem:[%s565] sm:$0xff] %vm354, %v634
    %v638 = vld [vmem:[%s270] sm:$0xff]
    %v639 = vld [vmem:[%s270 + $0x8] sm:$0xff]
    %v640 = vsel %vm285, %v634, 0
    %642 = vmatpush.msra.mxu0 0.0
    %643 = vmatpush.msra.mxu0 0.0
    %644 = vmatpush.msra.mxu0 0.0
    %645 = vmatpush.msra.mxu0 0.0
    %646 = vmatpush.msra.mxu0 0.0
    %647 = vmatpush.msra.mxu0 0.0
    %648 = vmatpush.msra.mxu0 0.0
    %649 = vmatpush.msra.mxu0 0.0
    %650 = vmatpush.msra.mxu0 %v121
    %651 = vmatpush.msra.mxu0 %v119
    %652 = vmatpush.msra.mxu0 %v117
    %653 = vmatpush.msra.mxu0 %v115
    %654 = vmatpush.msra.mxu0 %v113
    %655 = vmatpush.msra.mxu0 %v111
    %656 = vmatpush.msra.mxu0 %v109
    %657 = vmatpush.msra.mxu0 %v107
    %658 = vmatmul.f32.gmra.mxu0 %v640
    %v659 = vpop.f32.mrf.mxu0
    %v660 = vadd.f32 0.0, %v659
    %661 = vdwg.mxu0
    %662 = vmatpush.msra.mxu0 0.0
    %663 = vmatpush.msra.mxu0 0.0
    %664 = vmatpush.msra.mxu0 0.0
    %665 = vmatpush.msra.mxu0 0.0
    %666 = vmatpush.msra.mxu0 0.0
    %667 = vmatpush.msra.mxu0 0.0
    %668 = vmatpush.msra.mxu0 0.0
    %669 = vmatpush.msra.mxu0 0.0
    %670 = vmatpush.msra.mxu0 %v122
    %671 = vmatpush.msra.mxu0 %v120
    %672 = vmatpush.msra.mxu0 %v118
    %673 = vmatpush.msra.mxu0 %v116
    %674 = vmatpush.msra.mxu0 %v114
    %675 = vmatpush.msra.mxu0 %v112
    %676 = vmatpush.msra.mxu0 %v110
    %677 = vmatpush.msra.mxu0 %v108
    %678 = vmatmul.f32.gmra.mxu0 %v640
    %v679 = vpop.f32.mrf.mxu0
    %v680 = vadd.f32 0.0, %v679
    %681 = vdwg.mxu0
    %v682 = vadd.f32 %v638, %v660
    %v683 = vadd.f32 %v639, %v680
    %v684 = vmul.f32 %v682, %v95
    %v685 = vmul.f32 %v683, %v96
    %v686 = vtanh.pop %v684
    %v687 = vtanh.pop %v685
    %v688 = vmul.f32 %v686, %v95
    %v689 = vmul.f32 %v687, %v96
    %v690 = vadd.f32 %v688, %v97
    %v691 = vadd.f32 %v689, %v98
    %v692 = vmul.f32 %v690, %v629
    %v693 = vmul.f32 %v690, %v691
    %695 = vrot.lane.b32.xlu0 %v693, 64
    %v696 = vpop.permute.xlu0 %695
    %v698 = vadd.f32 %v692, %v696
    %v699 = vtanh.pop %v698
    %v700 = vmul.f32 %v691, %v699
    %702 = vrot.lane.b32.xlu0 %v700, 64
    %v703 = vpop.permute.xlu0 %702
    %705 = vst.msk [vmem:[%s496] sm:$0xff] %vm137, %v703
    %706 = vst.msk [vmem:[%s494] sm:$0xff] %vm354, %v703
    %v707 = vld [vmem:[%s275] sm:$0xff]
    %v708 = vld [vmem:[%s275 + $0x8] sm:$0xff]
    %v709 = vsel %vm285, %v703, 0
    %711 = vmatpush.msra.mxu0 0.0
    %712 = vmatpush.msra.mxu0 0.0
    %713 = vmatpush.msra.mxu0 0.0
    %714 = vmatpush.msra.mxu0 0.0
    %715 = vmatpush.msra.mxu0 0.0
    %716 = vmatpush.msra.mxu0 0.0
    %717 = vmatpush.msra.mxu0 0.0
    %718 = vmatpush.msra.mxu0 0.0
    %719 = vmatpush.msra.mxu0 %v121
    %720 = vmatpush.msra.mxu0 %v119
    %721 = vmatpush.msra.mxu0 %v117
    %722 = vmatpush.msra.mxu0 %v115
    %723 = vmatpush.msra.mxu0 %v113
    %724 = vmatpush.msra.mxu0 %v111
    %725 = vmatpush.msra.mxu0 %v109
    %726 = vmatpush.msra.mxu0 %v107
    %727 = vmatmul.f32.gmra.mxu0 %v709
    %v728 = vpop.f32.mrf.mxu0
    %v729 = vadd.f32 0.0, %v728
    %730 = vdwg.mxu0
    %731 = vmatpush.msra.mxu0 0.0
    %732 = vmatpush.msra.mxu0 0.0
    %733 = vmatpush.msra.mxu0 0.0
    %734 = vmatpush.msra.mxu0 0.0
    %735 = vmatpush.msra.mxu0 0.0
    %736 = vmatpush.msra.mxu0 0.0
    %737 = vmatpush.msra.mxu0 0.0
    %738 = vmatpush.msra.mxu0 0.0
    %739 = vmatpush.msra.mxu0 %v122
    %740 = vmatpush.msra.mxu0 %v120
    %741 = vmatpush.msra.mxu0 %v118
    %742 = vmatpush.msra.mxu0 %v116
    %743 = vmatpush.msra.mxu0 %v114
    %744 = vmatpush.msra.mxu0 %v112
    %745 = vmatpush.msra.mxu0 %v110
    %746 = vmatpush.msra.mxu0 %v108
    %747 = vmatmul.f32.gmra.mxu0 %v709
    %v748 = vpop.f32.mrf.mxu0
    %v749 = vadd.f32 0.0, %v748
    %750 = vdwg.mxu0
    %v751 = vadd.f32 %v707, %v729
    %v752 = vadd.f32 %v708, %v749
    %v753 = vmul.f32 %v751, %v95
    %v754 = vmul.f32 %v752, %v96
    %v755 = vtanh.pop %v753
    %v756 = vtanh.pop %v754
    %v757 = vmul.f32 %v755, %v95
    %v758 = vmul.f32 %v756, %v96
    %v759 = vadd.f32 %v757, %v97
    %v760 = vadd.f32 %v758, %v98
    %v761 = vmul.f32 %v759, %v698
    %v762 = vmul.f32 %v759, %v760
    %764 = vrot.lane.b32.xlu0 %v762, 64
    %v765 = vpop.permute.xlu0 %764
    %v767 = vadd.f32 %v761, %v765
    %v768 = vtanh.pop %v767
    %v769 = vmul.f32 %v760, %v768
    %771 = vrot.lane.b32.xlu0 %v769, 64
    %v772 = vpop.permute.xlu0 %771
    %774 = vst.msk [vmem:[%s425] sm:$0xff] %vm137, %v772
    %775 = vst.msk [vmem:[%s423] sm:$0xff] %vm354, %v772
    %v776 = vld [vmem:[%s280] sm:$0xff]
    %v777 = vld [vmem:[%s280 + $0x8] sm:$0xff]
    %v778 = vsel %vm285, %v772, 0
    %780 = vmatpush.msra.mxu0 0.0
    %781 = vmatpush.msra.mxu0 0.0
    %782 = vmatpush.msra.mxu0 0.0
    %783 = vmatpush.msra.mxu0 0.0
    %784 = vmatpush.msra.mxu0 0.0
    %785 = vmatpush.msra.mxu0 0.0
    %786 = vmatpush.msra.mxu0 0.0
    %787 = vmatpush.msra.mxu0 0.0
    %788 = vmatpush.msra.mxu0 %v121
    %789 = vmatpush.msra.mxu0 %v119
    %790 = vmatpush.msra.mxu0 %v117
    %791 = vmatpush.msra.mxu0 %v115
    %792 = vmatpush.msra.mxu0 %v113
    %793 = vmatpush.msra.mxu0 %v111
    %794 = vmatpush.msra.mxu0 %v109
    %795 = vmatpush.msra.mxu0 %v107
    %796 = vmatmul.f32.gmra.mxu0 %v778
    %v797 = vpop.f32.mrf.mxu0
    %v798 = vadd.f32 0.0, %v797
    %799 = vdwg.mxu0
    %800 = vmatpush.msra.mxu0 0.0
    %801 = vmatpush.msra.mxu0 0.0
    %802 = vmatpush.msra.mxu0 0.0
    %803 = vmatpush.msra.mxu0 0.0
    %804 = vmatpush.msra.mxu0 0.0
    %805 = vmatpush.msra.mxu0 0.0
    %806 = vmatpush.msra.mxu0 0.0
    %807 = vmatpush.msra.mxu0 0.0
    %808 = vmatpush.msra.mxu0 %v122
    %809 = vmatpush.msra.mxu0 %v120
    %810 = vmatpush.msra.mxu0 %v118
    %811 = vmatpush.msra.mxu0 %v116
    %812 = vmatpush.msra.mxu0 %v114
    %813 = vmatpush.msra.mxu0 %v112
    %814 = vmatpush.msra.mxu0 %v110
    %815 = vmatpush.msra.mxu0 %v108
    %816 = vmatmul.f32.gmra.mxu0 %v778
    %v817 = vpop.f32.mrf.mxu0
    %v818 = vadd.f32 0.0, %v817
    %819 = vdwg.mxu0
    %v820 = vadd.f32 %v776, %v798
    %v821 = vadd.f32 %v777, %v818
    %v822 = vmul.f32 %v820, %v95
    %v823 = vmul.f32 %v821, %v96
    %v824 = vtanh.pop %v822
    %v825 = vtanh.pop %v823
    %v826 = vmul.f32 %v824, %v95
    %v827 = vmul.f32 %v825, %v96
    %v828 = vadd.f32 %v826, %v97
    %v829 = vadd.f32 %v827, %v98
    %v830 = vmul.f32 %v828, %v767
    %v831 = vmul.f32 %v828, %v829
    %833 = vrot.lane.b32.xlu0 %v831, 64
    %v834 = vpop.permute.xlu0 %833
    %v836 = vadd.f32 %v830, %v834
    %v837 = vtanh.pop %v836
    %v838 = vmul.f32 %v829, %v837
    %840 = vrot.lane.b32.xlu0 %v838, 64
    %v841 = vpop.permute.xlu0 %840
    %843 = vst.msk [vmem:[%s353] sm:$0xff] %vm137, %v841
    %844 = vst.msk [vmem:[#allocation2] sm:$0xff] %vm354, %v841
    %v845 = vld [vmem:[%s4] sm:$0xff]
    %v846 = vld [vmem:[%s4 + $0x8] sm:$0xff]
    %v847 = vld [vmem:[%s4 + $0x10] sm:$0xff]
    %v848 = vld [vmem:[%s4 + $0x18] sm:$0xff]
    %v849 = vld [vmem:[%s4 + $0x20] sm:$0xff]
    %v850 = vld [vmem:[%s4 + $0x28] sm:$0xff]
    %v851 = vld [vmem:[%s4 + $0x30] sm:$0xff]
    %v852 = vld [vmem:[%s4 + $0x38] sm:$0xff]
    %v853 = vld [vmem:[%s4 + $0x40] sm:$0xff]
    %v854 = vld [vmem:[%s4 + $0x48] sm:$0xff]
    %v855 = vld [vmem:[%s4 + $0x50] sm:$0xff]
    %v856 = vld [vmem:[%s4 + $0x58] sm:$0xff]
    %v857 = vld [vmem:[%s4 + $0x60] sm:$0xff]
    %v858 = vld [vmem:[%s4 + $0x68] sm:$0xff]
    %v859 = vld [vmem:[%s4 + $0x70] sm:$0xff]
    %v860 = vld [vmem:[%s4 + $0x78] sm:$0xff]
    %v861 = vld [vmem:[#allocation4] sm:$0xff]
    %v862 = vld [vmem:[#allocation4 + $0x8] sm:$0xff]
    %v863 = vld [vmem:[#allocation4 + $0x10] sm:$0xff]
    %v864 = vld [vmem:[#allocation4 + $0x18] sm:$0xff]
    %v865 = vld [vmem:[#allocation4 + $0x20] sm:$0xff]
    %v866 = vld [vmem:[#allocation4 + $0x28] sm:$0xff]
    %v867 = vld [vmem:[#allocation4 + $0x30] sm:$0xff]
    %v868 = vld [vmem:[#allocation4 + $0x38] sm:$0xff]
    %v869 = vld [vmem:[#allocation4 + $0x40] sm:$0xff]
    %v870 = vld [vmem:[#allocation4 + $0x48] sm:$0xff]
    %v871 = vld [vmem:[#allocation4 + $0x50] sm:$0xff]
    %v872 = vld [vmem:[#allocation4 + $0x58] sm:$0xff]
    %v873 = vld [vmem:[#allocation4 + $0x60] sm:$0xff]
    %v874 = vld [vmem:[#allocation4 + $0x68] sm:$0xff]
    %v875 = vld [vmem:[#allocation4 + $0x70] sm:$0xff]
    %v876 = vld [vmem:[#allocation4 + $0x78] sm:$0xff]
    %v877 = vld [vmem:[%s6] sm:$0x3]
    %v878 = vld [vmem:[#allocation2] sm:$0xff]
    %v879 = vld [vmem:[#allocation2 + $0x8] sm:$0xff]
    %v880 = vld [vmem:[#allocation2 + $0x10] sm:$0xff]
    %v881 = vld [vmem:[#allocation2 + $0x18] sm:$0xff]
    %v882 = vld [vmem:[#allocation2 + $0x20] sm:$0xff]
    %v883 = vld [vmem:[#allocation2 + $0x28] sm:$0xff]
    %v884 = vld [vmem:[#allocation2 + $0x30] sm:$0xff]
    %v885 = vld [vmem:[#allocation2 + $0x38] sm:$0xff]
    %v887 = vperm.slane %v877, 0
    %v888 = vperm.slane %v877, 1
    %v892 = vsel %vm285, %v878, 0
    %v895 = vsel %vm285, %v879, 0
    %v898 = vsel %vm285, %v880, 0
    %v901 = vsel %vm285, %v881, 0
    %v904 = vsel %vm285, %v882, 0
    %v907 = vsel %vm285, %v883, 0
    %v910 = vsel %vm285, %v884, 0
    %v913 = vsel %vm285, %v885, 0
    %915 = vmatpush.msra.mxu0 0.0
    %916 = vmatpush.msra.mxu0 0.0
    %917 = vmatpush.msra.mxu0 0.0
    %918 = vmatpush.msra.mxu0 0.0
    %919 = vmatpush.msra.mxu0 0.0
    %920 = vmatpush.msra.mxu0 0.0
    %921 = vmatpush.msra.mxu0 0.0
    %922 = vmatpush.msra.mxu0 0.0
    %923 = vmatpush.msra.mxu0 %v859
    %924 = vmatpush.msra.mxu0 %v857
    %925 = vmatpush.msra.mxu0 %v855
    %926 = vmatpush.msra.mxu0 %v853
    %927 = vmatpush.msra.mxu0 %v851
    %928 = vmatpush.msra.mxu0 %v849
    %929 = vmatpush.msra.mxu0 %v847
    %930 = vmatpush.msra.mxu0 %v845
    %931 = vmatmul.f32.gmra.mxu0 %v892
    %v932 = vpop.f32.mrf.mxu0
    %v933 = vadd.f32 %v887, %v932
    %934 = vmatmul.f32.gmra.mxu0 %v895
    %v935 = vpop.f32.mrf.mxu0
    %v936 = vadd.f32 %v887, %v935
    %937 = vmatmul.f32.gmra.mxu0 %v898
    %v938 = vpop.f32.mrf.mxu0
    %v939 = vadd.f32 %v887, %v938
    %940 = vmatmul.f32.gmra.mxu0 %v901
    %v941 = vpop.f32.mrf.mxu0
    %v942 = vadd.f32 %v887, %v941
    %943 = vmatmul.f32.gmra.mxu0 %v904
    %v944 = vpop.f32.mrf.mxu0
    %v945 = vadd.f32 %v887, %v944
    %946 = vmatmul.f32.gmra.mxu0 %v907
    %v947 = vpop.f32.mrf.mxu0
    %v948 = vadd.f32 %v887, %v947
    %949 = vmatmul.f32.gmra.mxu0 %v910
    %v950 = vpop.f32.mrf.mxu0
    %v951 = vadd.f32 %v887, %v950
    %952 = vmatmul.f32.gmra.mxu0 %v913
    %v953 = vpop.f32.mrf.mxu0
    %v954 = vadd.f32 %v887, %v953
    %955 = vdwg.mxu0
    %956 = vmatpush.msra.mxu0 0.0
    %957 = vmatpush.msra.mxu0 0.0
    %958 = vmatpush.msra.mxu0 0.0
    %959 = vmatpush.msra.mxu0 0.0
    %960 = vmatpush.msra.mxu0 0.0
    %961 = vmatpush.msra.mxu0 0.0
    %962 = vmatpush.msra.mxu0 0.0
    %963 = vmatpush.msra.mxu0 0.0
    %964 = vmatpush.msra.mxu0 %v860
    %965 = vmatpush.msra.mxu0 %v858
    %966 = vmatpush.msra.mxu0 %v856
    %967 = vmatpush.msra.mxu0 %v854
    %968 = vmatpush.msra.mxu0 %v852
    %969 = vmatpush.msra.mxu0 %v850
    %970 = vmatpush.msra.mxu0 %v848
    %971 = vmatpush.msra.mxu0 %v846
    %972 = vmatmul.f32.gmra.mxu0 %v892
    %v973 = vpop.f32.mrf.mxu0
    %v974 = vadd.f32 %v888, %v973
    %975 = vmatmul.f32.gmra.mxu0 %v895
    %v976 = vpop.f32.mrf.mxu0
    %v977 = vadd.f32 %v888, %v976
    %978 = vmatmul.f32.gmra.mxu0 %v898
    %v979 = vpop.f32.mrf.mxu0
    %v980 = vadd.f32 %v888, %v979
    %981 = vmatmul.f32.gmra.mxu0 %v901
    %v982 = vpop.f32.mrf.mxu0
    %v983 = vadd.f32 %v888, %v982
    %984 = vmatmul.f32.gmra.mxu0 %v904
    %v985 = vpop.f32.mrf.mxu0
    %v986 = vadd.f32 %v888, %v985
    %987 = vmatmul.f32.gmra.mxu0 %v907
    %v988 = vpop.f32.mrf.mxu0
    %v989 = vadd.f32 %v888, %v988
    %990 = vmatmul.f32.gmra.mxu0 %v910
    %v991 = vpop.f32.mrf.mxu0
    %v992 = vadd.f32 %v888, %v991
    %993 = vmatmul.f32.gmra.mxu0 %v913
    %v994 = vpop.f32.mrf.mxu0
    %v995 = vadd.f32 %v888, %v994
    %996 = vdwg.mxu0
    %v997 = vsel %vm89, %v933, %v954
    %v998 = vsel %vm90, %v974, %v995
    %999 = vst [vmem:[#allocation3] sm:$0xff] %v997
    %1000 = vst [vmem:[#allocation3 + $0x8] sm:$0xff] %v998
    %v1001 = vsel %vm89, %v936, %v951
    %v1002 = vsel %vm90, %v977, %v992
    %1003 = vst [vmem:[%s250] sm:$0xff] %v1001
    %1004 = vst [vmem:[%s250 + $0x8] sm:$0xff] %v1002
    %v1005 = vsel %vm89, %v939, %v948
    %v1006 = vsel %vm90, %v980, %v989
    %1007 = vst [vmem:[%s255] sm:$0xff] %v1005
    %1008 = vst [vmem:[%s255 + $0x8] sm:$0xff] %v1006
    %v1009 = vsel %vm89, %v942, %v945
    %v1010 = vsel %vm90, %v983, %v986
    %1011 = vst [vmem:[%s260] sm:$0xff] %v1009
    %1012 = vst [vmem:[%s260 + $0x8] sm:$0xff] %v1010
    %v1013 = vsel %vm89, %v945, %v942
    %v1014 = vsel %vm90, %v986, %v983
    %1015 = vst [vmem:[%s265] sm:$0xff] %v1013
    %1016 = vst [vmem:[%s265 + $0x8] sm:$0xff] %v1014
    %v1017 = vsel %vm89, %v948, %v939
    %v1018 = vsel %vm90, %v989, %v980
    %1019 = vst [vmem:[%s270] sm:$0xff] %v1017
    %1020 = vst [vmem:[%s270 + $0x8] sm:$0xff] %v1018
    %v1021 = vsel %vm89, %v951, %v936
    %v1022 = vsel %vm90, %v992, %v977
    %1023 = vst [vmem:[%s275] sm:$0xff] %v1021
    %1024 = vst [vmem:[%s275 + $0x8] sm:$0xff] %v1022
    %v1025 = vsel %vm89, %v954, %v933
    %v1026 = vsel %vm90, %v995, %v974
    %1027 = vst [vmem:[%s280] sm:$0xff] %v1025
    %1028 = vst [vmem:[%s280 + $0x8] sm:$0xff] %v1026
    %v1029 = vld [vmem:[#allocation3] sm:$0xff]
    %v1030 = vld [vmem:[#allocation3 + $0x8] sm:$0xff]
    %1031 = vmatpush.msra.mxu0 0.0
    %1032 = vmatpush.msra.mxu0 0.0
    %1033 = vmatpush.msra.mxu0 0.0
    %1034 = vmatpush.msra.mxu0 0.0
    %1035 = vmatpush.msra.mxu0 0.0
    %1036 = vmatpush.msra.mxu0 0.0
    %1037 = vmatpush.msra.mxu0 0.0
    %1038 = vmatpush.msra.mxu0 0.0
    %1039 = vmatpush.msra.mxu0 %v875
    %1040 = vmatpush.msra.mxu0 %v873
    %1041 = vmatpush.msra.mxu0 %v871
    %1042 = vmatpush.msra.mxu0 %v869
    %1043 = vmatpush.msra.mxu0 %v867
    %1044 = vmatpush.msra.mxu0 %v865
    %1045 = vmatpush.msra.mxu0 %v863
    %1046 = vmatpush.msra.mxu0 %v861
    %1047 = vmatmul.f32.gmra.mxu0 %v287
    %v1048 = vpop.f32.mrf.mxu0
    %v1049 = vadd.f32 0.0, %v1048
    %1050 = vdwg.mxu0
    %1051 = vmatpush.msra.mxu0 0.0
    %1052 = vmatpush.msra.mxu0 0.0
    %1053 = vmatpush.msra.mxu0 0.0
    %1054 = vmatpush.msra.mxu0 0.0
    %1055 = vmatpush.msra.mxu0 0.0
    %1056 = vmatpush.msra.mxu0 0.0
    %1057 = vmatpush.msra.mxu0 0.0
    %1058 = vmatpush.msra.mxu0 0.0
    %1059 = vmatpush.msra.mxu0 %v876
    %1060 = vmatpush.msra.mxu0 %v874
    %1061 = vmatpush.msra.mxu0 %v872
    %1062 = vmatpush.msra.mxu0 %v870
    %1063 = vmatpush.msra.mxu0 %v868
    %1064 = vmatpush.msra.mxu0 %v866
    %1065 = vmatpush.msra.mxu0 %v864
    %1066 = vmatpush.msra.mxu0 %v862
    %1067 = vmatmul.f32.gmra.mxu0 %v287
    %v1068 = vpop.f32.mrf.mxu0
    %v1069 = vadd.f32 0.0, %v1068
    %1070 = vdwg.mxu0
    %v1071 = vadd.f32 %v1029, %v1049
    %v1072 = vadd.f32 %v1030, %v1069
    %v1073 = vmul.f32 %v1071, %v95
    %v1074 = vmul.f32 %v1072, %v96
    %v1075 = vtanh.pop %v1073
    %v1076 = vtanh.pop %v1074
    %v1077 = vmul.f32 %v1075, %v95
    %v1078 = vmul.f32 %v1076, %v96
    %v1079 = vadd.f32 %v1077, %v97
    %v1080 = vadd.f32 %v1078, %v98
    %v1081 = vmul.f32 %v1079, 0.0
    %v1082 = vmul.f32 %v1079, %v1080
    %1084 = vrot.lane.b32.xlu0 %v1082, 64
    %v1085 = vpop.permute.xlu0 %1084
    %v1087 = vadd.f32 %v1081, %v1085
    %v1088 = vtanh.pop %v1087
    %v1089 = vmul.f32 %v1080, %v1088
    %1091 = vrot.lane.b32.xlu0 %v1089, 64
    %v1092 = vpop.permute.xlu0 %1091
    %1094 = vst.msk [vmem:[#allocation2] sm:$0xff] %vm137, %v1092
    %1095 = vst.msk [vmem:[%s353] sm:$0xff] %vm354, %v1092
    %v1096 = vld [vmem:[%s250] sm:$0xff]
    %v1097 = vld [vmem:[%s250 + $0x8] sm:$0xff]
    %v1098 = vsel %vm285, %v1092, 0
    %1100 = vmatpush.msra.mxu0 0.0
    %1101 = vmatpush.msra.mxu0 0.0
    %1102 = vmatpush.msra.mxu0 0.0
    %1103 = vmatpush.msra.mxu0 0.0
    %1104 = vmatpush.msra.mxu0 0.0
    %1105 = vmatpush.msra.mxu0 0.0
    %1106 = vmatpush.msra.mxu0 0.0
    %1107 = vmatpush.msra.mxu0 0.0
    %1108 = vmatpush.msra.mxu0 %v875
    %1109 = vmatpush.msra.mxu0 %v873
    %1110 = vmatpush.msra.mxu0 %v871
    %1111 = vmatpush.msra.mxu0 %v869
    %1112 = vmatpush.msra.mxu0 %v867
    %1113 = vmatpush.msra.mxu0 %v865
    %1114 = vmatpush.msra.mxu0 %v863
    %1115 = vmatpush.msra.mxu0 %v861
    %1116 = vmatmul.f32.gmra.mxu0 %v1098
    %v1117 = vpop.f32.mrf.mxu0
    %v1118 = vadd.f32 0.0, %v1117
    %1119 = vdwg.mxu0
    %1120 = vmatpush.msra.mxu0 0.0
    %1121 = vmatpush.msra.mxu0 0.0
    %1122 = vmatpush.msra.mxu0 0.0
    %1123 = vmatpush.msra.mxu0 0.0
    %1124 = vmatpush.msra.mxu0 0.0
    %1125 = vmatpush.msra.mxu0 0.0
    %1126 = vmatpush.msra.mxu0 0.0
    %1127 = vmatpush.msra.mxu0 0.0
    %1128 = vmatpush.msra.mxu0 %v876
    %1129 = vmatpush.msra.mxu0 %v874
    %1130 = vmatpush.msra.mxu0 %v872
    %1131 = vmatpush.msra.mxu0 %v870
    %1132 = vmatpush.msra.mxu0 %v868
    %1133 = vmatpush.msra.mxu0 %v866
    %1134 = vmatpush.msra.mxu0 %v864
    %1135 = vmatpush.msra.mxu0 %v862
    %1136 = vmatmul.f32.gmra.mxu0 %v1098
    %v1137 = vpop.f32.mrf.mxu0
    %v1138 = vadd.f32 0.0, %v1137
    %1139 = vdwg.mxu0
    %v1140 = vadd.f32 %v1096, %v1118
    %v1141 = vadd.f32 %v1097, %v1138
    %v1142 = vmul.f32 %v1140, %v95
    %v1143 = vmul.f32 %v1141, %v96
    %v1144 = vtanh.pop %v1142
    %v1145 = vtanh.pop %v1143
    %v1146 = vmul.f32 %v1144, %v95
    %v1147 = vmul.f32 %v1145, %v96
    %v1148 = vadd.f32 %v1146, %v97
    %v1149 = vadd.f32 %v1147, %v98
    %v1150 = vmul.f32 %v1148, %v1087
    %v1151 = vmul.f32 %v1148, %v1149
    %1153 = vrot.lane.b32.xlu0 %v1151, 64
    %v1154 = vpop.permute.xlu0 %1153
    %v1156 = vadd.f32 %v1150, %v1154
    %v1157 = vtanh.pop %v1156
    %v1158 = vmul.f32 %v1149, %v1157
    %1160 = vrot.lane.b32.xlu0 %v1158, 64
    %v1161 = vpop.permute.xlu0 %1160
    %1163 = vst.msk [vmem:[%s423] sm:$0xff] %vm137, %v1161
    %1164 = vst.msk [vmem:[%s425] sm:$0xff] %vm354, %v1161
    %v1165 = vld [vmem:[%s255] sm:$0xff]
    %v1166 = vld [vmem:[%s255 + $0x8] sm:$0xff]
    %v1167 = vsel %vm285, %v1161, 0
    %1169 = vmatpush.msra.mxu0 0.0
    %1170 = vmatpush.msra.mxu0 0.0
    %1171 = vmatpush.msra.mxu0 0.0
    %1172 = vmatpush.msra.mxu0 0.0
    %1173 = vmatpush.msra.mxu0 0.0
    %1174 = vmatpush.msra.mxu0 0.0
    %1175 = vmatpush.msra.mxu0 0.0
    %1176 = vmatpush.msra.mxu0 0.0
    %1177 = vmatpush.msra.mxu0 %v875
    %1178 = vmatpush.msra.mxu0 %v873
    %1179 = vmatpush.msra.mxu0 %v871
    %1180 = vmatpush.msra.mxu0 %v869
    %1181 = vmatpush.msra.mxu0 %v867
    %1182 = vmatpush.msra.mxu0 %v865
    %1183 = vmatpush.msra.mxu0 %v863
    %1184 = vmatpush.msra.mxu0 %v861
    %1185 = vmatmul.f32.gmra.mxu0 %v1167
    %v1186 = vpop.f32.mrf.mxu0
    %v1187 = vadd.f32 0.0, %v1186
    %1188 = vdwg.mxu0
    %1189 = vmatpush.msra.mxu0 0.0
    %1190 = vmatpush.msra.mxu0 0.0
    %1191 = vmatpush.msra.mxu0 0.0
    %1192 = vmatpush.msra.mxu0 0.0
    %1193 = vmatpush.msra.mxu0 0.0
    %1194 = vmatpush.msra.mxu0 0.0
    %1195 = vmatpush.msra.mxu0 0.0
    %1196 = vmatpush.msra.mxu0 0.0
    %1197 = vmatpush.msra.mxu0 %v876
    %1198 = vmatpush.msra.mxu0 %v874
    %1199 = vmatpush.msra.mxu0 %v872
    %1200 = vmatpush.msra.mxu0 %v870
    %1201 = vmatpush.msra.mxu0 %v868
    %1202 = vmatpush.msra.mxu0 %v866
    %1203 = vmatpush.msra.mxu0 %v864
    %1204 = vmatpush.msra.mxu0 %v862
    %1205 = vmatmul.f32.gmra.mxu0 %v1167
    %v1206 = vpop.f32.mrf.mxu0
    %v1207 = vadd.f32 0.0, %v1206
    %1208 = vdwg.mxu0
    %v1209 = vadd.f32 %v1165, %v1187
    %v1210 = vadd.f32 %v1166, %v1207
    %v1211 = vmul.f32 %v1209, %v95
    %v1212 = vmul.f32 %v1210, %v96
    %v1213 = vtanh.pop %v1211
    %v1214 = vtanh.pop %v1212
    %v1215 = vmul.f32 %v1213, %v95
    %v1216 = vmul.f32 %v1214, %v96
    %v1217 = vadd.f32 %v1215, %v97
    %v1218 = vadd.f32 %v1216, %v98
    %v1219 = vmul.f32 %v1217, %v1156
    %v1220 = vmul.f32 %v1217, %v1218
    %1222 = vrot.lane.b32.xlu0 %v1220, 64
    %v1223 = vpop.permute.xlu0 %1222
    %v1225 = vadd.f32 %v1219, %v1223
    %v1226 = vtanh.pop %v1225
    %v1227 = vmul.f32 %v1218, %v1226
    %1229 = vrot.lane.b32.xlu0 %v1227, 64
    %v1230 = vpop.permute.xlu0 %1229
    %1232 = vst.msk [vmem:[%s494] sm:$0xff] %vm137, %v1230
    %1233 = vst.msk [vmem:[%s496] sm:$0xff] %vm354, %v1230
    %v1234 = vld [vmem:[%s260] sm:$0xff]
    %v1235 = vld [vmem:[%s260 + $0x8] sm:$0xff]
    %v1236 = vsel %vm285, %v1230, 0
    %1238 = vmatpush.msra.mxu0 0.0
    %1239 = vmatpush.msra.mxu0 0.0
    %1240 = vmatpush.msra.mxu0 0.0
    %1241 = vmatpush.msra.mxu0 0.0
    %1242 = vmatpush.msra.mxu0 0.0
    %1243 = vmatpush.msra.mxu0 0.0
    %1244 = vmatpush.msra.mxu0 0.0
    %1245 = vmatpush.msra.mxu0 0.0
    %1246 = vmatpush.msra.mxu0 %v875
    %1247 = vmatpush.msra.mxu0 %v873
    %1248 = vmatpush.msra.mxu0 %v871
    %1249 = vmatpush.msra.mxu0 %v869
    %1250 = vmatpush.msra.mxu0 %v867
    %1251 = vmatpush.msra.mxu0 %v865
    %1252 = vmatpush.msra.mxu0 %v863
    %1253 = vmatpush.msra.mxu0 %v861
    %1254 = vmatmul.f32.gmra.mxu0 %v1236
    %v1255 = vpop.f32.mrf.mxu0
    %v1256 = vadd.f32 0.0, %v1255
    %1257 = vdwg.mxu0
    %1258 = vmatpush.msra.mxu0 0.0
    %1259 = vmatpush.msra.mxu0 0.0
    %1260 = vmatpush.msra.mxu0 0.0
    %1261 = vmatpush.msra.mxu0 0.0
    %1262 = vmatpush.msra.mxu0 0.0
    %1263 = vmatpush.msra.mxu0 0.0
    %1264 = vmatpush.msra.mxu0 0.0
    %1265 = vmatpush.msra.mxu0 0.0
    %1266 = vmatpush.msra.mxu0 %v876
    %1267 = vmatpush.msra.mxu0 %v874
    %1268 = vmatpush.msra.mxu0 %v872
    %1269 = vmatpush.msra.mxu0 %v870
    %1270 = vmatpush.msra.mxu0 %v868
    %1271 = vmatpush.msra.mxu0 %v866
    %1272 = vmatpush.msra.mxu0 %v864
    %1273 = vmatpush.msra.mxu0 %v862
    %1274 = vmatmul.f32.gmra.mxu0 %v1236
    %v1275 = vpop.f32.mrf.mxu0
    %v1276 = vadd.f32 0.0, %v1275
    %1277 = vdwg.mxu0
    %v1278 = vadd.f32 %v1234, %v1256
    %v1279 = vadd.f32 %v1235, %v1276
    %v1280 = vmul.f32 %v1278, %v95
    %v1281 = vmul.f32 %v1279, %v96
    %v1282 = vtanh.pop %v1280
    %v1283 = vtanh.pop %v1281
    %v1284 = vmul.f32 %v1282, %v95
    %v1285 = vmul.f32 %v1283, %v96
    %v1286 = vadd.f32 %v1284, %v97
    %v1287 = vadd.f32 %v1285, %v98
    %v1288 = vmul.f32 %v1286, %v1225
    %v1289 = vmul.f32 %v1286, %v1287
    %1291 = vrot.lane.b32.xlu0 %v1289, 64
    %v1292 = vpop.permute.xlu0 %1291
    %v1294 = vadd.f32 %v1288, %v1292
    %v1295 = vtanh.pop %v1294
    %v1296 = vmul.f32 %v1287, %v1295
    %1298 = vrot.lane.b32.xlu0 %v1296, 64
    %v1299 = vpop.permute.xlu0 %1298
    %1301 = vst.msk [vmem:[%s565] sm:$0xff] %vm137, %v1299
    %1302 = vst.msk [vmem:[%s567] sm:$0xff] %vm354, %v1299
    %v1303 = vld [vmem:[%s265] sm:$0xff]
    %v1304 = vld [vmem:[%s265 + $0x8] sm:$0xff]
    %v1305 = vsel %vm285, %v1299, 0
    %1307 = vmatpush.msra.mxu0 0.0
    %1308 = vmatpush.msra.mxu0 0.0
    %1309 = vmatpush.msra.mxu0 0.0
    %1310 = vmatpush.msra.mxu0 0.0
    %1311 = vmatpush.msra.mxu0 0.0
    %1312 = vmatpush.msra.mxu0 0.0
    %1313 = vmatpush.msra.mxu0 0.0
    %1314 = vmatpush.msra.mxu0 0.0
    %1315 = vmatpush.msra.mxu0 %v875
    %1316 = vmatpush.msra.mxu0 %v873
    %1317 = vmatpush.msra.mxu0 %v871
    %1318 = vmatpush.msra.mxu0 %v869
    %1319 = vmatpush.msra.mxu0 %v867
    %1320 = vmatpush.msra.mxu0 %v865
    %1321 = vmatpush.msra.mxu0 %v863
    %1322 = vmatpush.msra.mxu0 %v861
    %1323 = vmatmul.f32.gmra.mxu0 %v1305
    %v1324 = vpop.f32.mrf.mxu0
    %v1325 = vadd.f32 0.0, %v1324
    %1326 = vdwg.mxu0
    %1327 = vmatpush.msra.mxu0 0.0
    %1328 = vmatpush.msra.mxu0 0.0
    %1329 = vmatpush.msra.mxu0 0.0
    %1330 = vmatpush.msra.mxu0 0.0
    %1331 = vmatpush.msra.mxu0 0.0
    %1332 = vmatpush.msra.mxu0 0.0
    %1333 = vmatpush.msra.mxu0 0.0
    %1334 = vmatpush.msra.mxu0 0.0
    %1335 = vmatpush.msra.mxu0 %v876
    %1336 = vmatpush.msra.mxu0 %v874
    %1337 = vmatpush.msra.mxu0 %v872
    %1338 = vmatpush.msra.mxu0 %v870
    %1339 = vmatpush.msra.mxu0 %v868
    %1340 = vmatpush.msra.mxu0 %v866
    %1341 = vmatpush.msra.mxu0 %v864
    %1342 = vmatpush.msra.mxu0 %v862
    %1343 = vmatmul.f32.gmra.mxu0 %v1305
    %v1344 = vpop.f32.mrf.mxu0
    %v1345 = vadd.f32 0.0, %v1344
    %1346 = vdwg.mxu0
    %v1347 = vadd.f32 %v1303, %v1325
    %v1348 = vadd.f32 %v1304, %v1345
    %v1349 = vmul.f32 %v1347, %v95
    %v1350 = vmul.f32 %v1348, %v96
    %v1351 = vtanh.pop %v1349
    %v1352 = vtanh.pop %v1350
    %v1353 = vmul.f32 %v1351, %v95
    %v1354 = vmul.f32 %v1352, %v96
    %v1355 = vadd.f32 %v1353, %v97
    %v1356 = vadd.f32 %v1354, %v98
    %v1357 = vmul.f32 %v1355, %v1294
    %v1358 = vmul.f32 %v1355, %v1356
    %1360 = vrot.lane.b32.xlu0 %v1358, 64
    %v1361 = vpop.permute.xlu0 %1360
    %v1363 = vadd.f32 %v1357, %v1361
    %v1364 = vtanh.pop %v1363
    %v1365 = vmul.f32 %v1356, %v1364
    %1367 = vrot.lane.b32.xlu0 %v1365, 64
    %v1368 = vpop.permute.xlu0 %1367
    %1370 = vst.msk [vmem:[%s567] sm:$0xff] %vm137, %v1368
    %1371 = vst.msk [vmem:[%s565] sm:$0xff] %vm354, %v1368
    %v1372 = vld [vmem:[%s270] sm:$0xff]
    %v1373 = vld [vmem:[%s270 + $0x8] sm:$0xff]
    %v1374 = vsel %vm285, %v1368, 0
    %1376 = vmatpush.msra.mxu0 0.0
    %1377 = vmatpush.msra.mxu0 0.0
    %1378 = vmatpush.msra.mxu0 0.0
    %1379 = vmatpush.msra.mxu0 0.0
    %1380 = vmatpush.msra.mxu0 0.0
    %1381 = vmatpush.msra.mxu0 0.0
    %1382 = vmatpush.msra.mxu0 0.0
    %1383 = vmatpush.msra.mxu0 0.0
    %1384 = vmatpush.msra.mxu0 %v875
    %1385 = vmatpush.msra.mxu0 %v873
    %1386 = vmatpush.msra.mxu0 %v871
    %1387 = vmatpush.msra.mxu0 %v869
    %1388 = vmatpush.msra.mxu0 %v867
    %1389 = vmatpush.msra.mxu0 %v865
    %1390 = vmatpush.msra.mxu0 %v863
    %1391 = vmatpush.msra.mxu0 %v861
    %1392 = vmatmul.f32.gmra.mxu0 %v1374
    %v1393 = vpop.f32.mrf.mxu0
    %v1394 = vadd.f32 0.0, %v1393
    %1395 = vdwg.mxu0
    %1396 = vmatpush.msra.mxu0 0.0
    %1397 = vmatpush.msra.mxu0 0.0
    %1398 = vmatpush.msra.mxu0 0.0
    %1399 = vmatpush.msra.mxu0 0.0
    %1400 = vmatpush.msra.mxu0 0.0
    %1401 = vmatpush.msra.mxu0 0.0
    %1402 = vmatpush.msra.mxu0 0.0
    %1403 = vmatpush.msra.mxu0 0.0
    %1404 = vmatpush.msra.mxu0 %v876
    %1405 = vmatpush.msra.mxu0 %v874
    %1406 = vmatpush.msra.mxu0 %v872
    %1407 = vmatpush.msra.mxu0 %v870
    %1408 = vmatpush.msra.mxu0 %v868
    %1409 = vmatpush.msra.mxu0 %v866
    %1410 = vmatpush.msra.mxu0 %v864
    %1411 = vmatpush.msra.mxu0 %v862
    %1412 = vmatmul.f32.gmra.mxu0 %v1374
    %v1413 = vpop.f32.mrf.mxu0
    %v1414 = vadd.f32 0.0, %v1413
    %1415 = vdwg.mxu0
    %v1416 = vadd.f32 %v1372, %v1394
    %v1417 = vadd.f32 %v1373, %v1414
    %v1418 = vmul.f32 %v1416, %v95
    %v1419 = vmul.f32 %v1417, %v96
    %v1420 = vtanh.pop %v1418
    %v1421 = vtanh.pop %v1419
    %v1422 = vmul.f32 %v1420, %v95
    %v1423 = vmul.f32 %v1421, %v96
    %v1424 = vadd.f32 %v1422, %v97
    %v1425 = vadd.f32 %v1423, %v98
    %v1426 = vmul.f32 %v1424, %v1363
    %v1427 = vmul.f32 %v1424, %v1425
    %1429 = vrot.lane.b32.xlu0 %v1427, 64
    %v1430 = vpop.permute.xlu0 %1429
    %v1432 = vadd.f32 %v1426, %v1430
    %v1433 = vtanh.pop %v1432
    %v1434 = vmul.f32 %v1425, %v1433
    %1436 = vrot.lane.b32.xlu0 %v1434, 64
    %v1437 = vpop.permute.xlu0 %1436
    %1439 = vst.msk [vmem:[%s496] sm:$0xff] %vm137, %v1437
    %1440 = vst.msk [vmem:[%s494] sm:$0xff] %vm354, %v1437
    %v1441 = vld [vmem:[%s275] sm:$0xff]
    %v1442 = vld [vmem:[%s275 + $0x8] sm:$0xff]
    %v1443 = vsel %vm285, %v1437, 0
    %1445 = vmatpush.msra.mxu0 0.0
    %1446 = vmatpush.msra.mxu0 0.0
    %1447 = vmatpush.msra.mxu0 0.0
    %1448 = vmatpush.msra.mxu0 0.0
    %1449 = vmatpush.msra.mxu0 0.0
    %1450 = vmatpush.msra.mxu0 0.0
    %1451 = vmatpush.msra.mxu0 0.0
    %1452 = vmatpush.msra.mxu0 0.0
    %1453 = vmatpush.msra.mxu0 %v875
    %1454 = vmatpush.msra.mxu0 %v873
    %1455 = vmatpush.msra.mxu0 %v871
    %1456 = vmatpush.msra.mxu0 %v869
    %1457 = vmatpush.msra.mxu0 %v867
    %1458 = vmatpush.msra.mxu0 %v865
    %1459 = vmatpush.msra.mxu0 %v863
    %1460 = vmatpush.msra.mxu0 %v861
    %1461 = vmatmul.f32.gmra.mxu0 %v1443
    %v1462 = vpop.f32.mrf.mxu0
    %v1463 = vadd.f32 0.0, %v1462
    %1464 = vdwg.mxu0
    %1465 = vmatpush.msra.mxu0 0.0
    %1466 = vmatpush.msra.mxu0 0.0
    %1467 = vmatpush.msra.mxu0 0.0
    %1468 = vmatpush.msra.mxu0 0.0
    %1469 = vmatpush.msra.mxu0 0.0
    %1470 = vmatpush.msra.mxu0 0.0
    %1471 = vmatpush.msra.mxu0 0.0
    %1472 = vmatpush.msra.mxu0 0.0
    %1473 = vmatpush.msra.mxu0 %v876
    %1474 = vmatpush.msra.mxu0 %v874
    %1475 = vmatpush.msra.mxu0 %v872
    %1476 = vmatpush.msra.mxu0 %v870
    %1477 = vmatpush.msra.mxu0 %v868
    %1478 = vmatpush.msra.mxu0 %v866
    %1479 = vmatpush.msra.mxu0 %v864
    %1480 = vmatpush.msra.mxu0 %v862
    %1481 = vmatmul.f32.gmra.mxu0 %v1443
    %v1482 = vpop.f32.mrf.mxu0
    %v1483 = vadd.f32 0.0, %v1482
    %1484 = vdwg.mxu0
    %v1485 = vadd.f32 %v1441, %v1463
    %v1486 = vadd.f32 %v1442, %v1483
    %v1487 = vmul.f32 %v1485, %v95
    %v1488 = vmul.f32 %v1486, %v96
    %v1489 = vtanh.pop %v1487
    %v1490 = vtanh.pop %v1488
    %v1491 = vmul.f32 %v1489, %v95
    %v1492 = vmul.f32 %v1490, %v96
    %v1493 = vadd.f32 %v1491, %v97
    %v1494 = vadd.f32 %v1492, %v98
    %v1495 = vmul.f32 %v1493, %v1432
    %v1496 = vmul.f32 %v1493, %v1494
    %1498 = vrot.lane.b32.xlu0 %v1496, 64
    %v1499 = vpop.permute.xlu0 %1498
    %v1501 = vadd.f32 %v1495, %v1499
    %v1502 = vtanh.pop %v1501
    %v1503 = vmul.f32 %v1494, %v1502
    %1505 = vrot.lane.b32.xlu0 %v1503, 64
    %v1506 = vpop.permute.xlu0 %1505
    %1508 = vst.msk [vmem:[%s425] sm:$0xff] %vm137, %v1506
    %1509 = vst.msk [vmem:[%s423] sm:$0xff] %vm354, %v1506
    %v1510 = vld [vmem:[%s280] sm:$0xff]
    %v1511 = vld [vmem:[%s280 + $0x8] sm:$0xff]
    %v1512 = vsel %vm285, %v1506, 0
    %1514 = vmatpush.msra.mxu0 0.0
    %1515 = vmatpush.msra.mxu0 0.0
    %1516 = vmatpush.msra.mxu0 0.0
    %1517 = vmatpush.msra.mxu0 0.0
    %1518 = vmatpush.msra.mxu0 0.0
    %1519 = vmatpush.msra.mxu0 0.0
    %1520 = vmatpush.msra.mxu0 0.0
    %1521 = vmatpush.msra.mxu0 0.0
    %1522 = vmatpush.msra.mxu0 %v875
    %1523 = vmatpush.msra.mxu0 %v873
    %1524 = vmatpush.msra.mxu0 %v871
    %1525 = vmatpush.msra.mxu0 %v869
    %1526 = vmatpush.msra.mxu0 %v867
    %1527 = vmatpush.msra.mxu0 %v865
    %1528 = vmatpush.msra.mxu0 %v863
    %1529 = vmatpush.msra.mxu0 %v861
    %1530 = vmatmul.f32.gmra.mxu0 %v1512
    %v1531 = vpop.f32.mrf.mxu0
    %v1532 = vadd.f32 0.0, %v1531
    %1533 = vdwg.mxu0
    %1534 = vmatpush.msra.mxu0 0.0
    %1535 = vmatpush.msra.mxu0 0.0
    %1536 = vmatpush.msra.mxu0 0.0
    %1537 = vmatpush.msra.mxu0 0.0
    %1538 = vmatpush.msra.mxu0 0.0
    %1539 = vmatpush.msra.mxu0 0.0
    %1540 = vmatpush.msra.mxu0 0.0
    %1541 = vmatpush.msra.mxu0 0.0
    %1542 = vmatpush.msra.mxu0 %v876
    %1543 = vmatpush.msra.mxu0 %v874
    %1544 = vmatpush.msra.mxu0 %v872
    %1545 = vmatpush.msra.mxu0 %v870
    %1546 = vmatpush.msra.mxu0 %v868
    %1547 = vmatpush.msra.mxu0 %v866
    %1548 = vmatpush.msra.mxu0 %v864
    %1549 = vmatpush.msra.mxu0 %v862
    %1550 = vmatmul.f32.gmra.mxu0 %v1512
    %v1551 = vpop.f32.mrf.mxu0
    %v1552 = vadd.f32 0.0, %v1551
    %1553 = vdwg.mxu0
    %v1554 = vadd.f32 %v1510, %v1532
    %v1555 = vadd.f32 %v1511, %v1552
    %v1556 = vmul.f32 %v1554, %v95
    %v1557 = vmul.f32 %v1555, %v96
    %v1558 = vtanh.pop %v1556
    %v1559 = vtanh.pop %v1557
    %v1560 = vmul.f32 %v1558, %v95
    %v1561 = vmul.f32 %v1559, %v96
    %v1562 = vadd.f32 %v1560, %v97
    %v1563 = vadd.f32 %v1561, %v98
    %v1564 = vmul.f32 %v1562, %v1501
    %v1565 = vmul.f32 %v1562, %v1563
    %1567 = vrot.lane.b32.xlu0 %v1565, 64
    %v1568 = vpop.permute.xlu0 %1567
    %v1570 = vadd.f32 %v1564, %v1568
    %v1571 = vtanh.pop %v1570
    %v1572 = vmul.f32 %v1563, %v1571
    %1574 = vrot.lane.b32.xlu0 %v1572, 64
    %v1575 = vpop.permute.xlu0 %1574
    %1577 = vst.msk [vmem:[%s353] sm:$0xff] %vm137, %v1575
    %1578 = vst.msk [vmem:[#allocation2] sm:$0xff] %vm354, %v1575
    %v1579 = vld [vmem:[#allocation2] sm:$0xff]
    %v1580 = vld [vmem:[#allocation2 + $0x8] sm:$0xff]
    %v1581 = vld [vmem:[#allocation2 + $0x10] sm:$0xff]
    %v1582 = vld [vmem:[#allocation2 + $0x18] sm:$0xff]
    %v1583 = vld [vmem:[#allocation2 + $0x20] sm:$0xff]
    %v1584 = vld [vmem:[#allocation2 + $0x28] sm:$0xff]
    %v1585 = vld [vmem:[#allocation2 + $0x30] sm:$0xff]
    %v1586 = vld [vmem:[#allocation2 + $0x38] sm:$0xff]
    %v1587 = vld [vmem:[%s7] sm:$0xff]
    %v1588 = vld [vmem:[%s7 + $0x8] sm:$0xff]
    %v1589 = vld [vmem:[%s7 + $0x10] sm:$0xff]
    %v1590 = vld [vmem:[%s7 + $0x18] sm:$0xff]
    %v1591 = vld [vmem:[%s7 + $0x20] sm:$0xff]
    %v1592 = vld [vmem:[%s7 + $0x28] sm:$0xff]
    %v1593 = vld [vmem:[%s7 + $0x30] sm:$0xff]
    %v1594 = vld [vmem:[%s7 + $0x38] sm:$0xff]
    %v1595 = vld [vmem:[#allocation6] sm:$0x1]
    %v1597 = vperm.slane %v1595, 0
    %v1600 = vsel %vm285, %v1579, 0
    %v1603 = vsel %vm285, %v1580, 0
    %v1606 = vsel %vm285, %v1581, 0
    %v1609 = vsel %vm285, %v1582, 0
    %v1612 = vsel %vm285, %v1583, 0
    %v1615 = vsel %vm285, %v1584, 0
    %v1618 = vsel %vm285, %v1585, 0
    %v1621 = vsel %vm285, %v1586, 0
    %1623 = vmatpush.msra.mxu0 0.0
    %1624 = vmatpush.msra.mxu0 0.0
    %1625 = vmatpush.msra.mxu0 0.0
    %1626 = vmatpush.msra.mxu0 0.0
    %1627 = vmatpush.msra.mxu0 0.0
    %1628 = vmatpush.msra.mxu0 0.0
    %1629 = vmatpush.msra.mxu0 0.0
    %1630 = vmatpush.msra.mxu0 0.0
    %1631 = vmatpush.msra.mxu0 %v1594
    %1632 = vmatpush.msra.mxu0 %v1593
    %1633 = vmatpush.msra.mxu0 %v1592
    %1634 = vmatpush.msra.mxu0 %v1591
    %1635 = vmatpush.msra.mxu0 %v1590
    %1636 = vmatpush.msra.mxu0 %v1589
    %1637 = vmatpush.msra.mxu0 %v1588
    %1638 = vmatpush.msra.mxu0 %v1587
    %1639 = vmatmul.f32.gmra.mxu0 %v1600
    %v1640 = vpop.f32.mrf.mxu0
    %v1641 = vadd.f32 %v1597, %v1640
    %1642 = vmatmul.f32.gmra.mxu0 %v1603
    %v1643 = vpop.f32.mrf.mxu0
    %v1644 = vadd.f32 %v1597, %v1643
    %1645 = vmatmul.f32.gmra.mxu0 %v1606
    %v1646 = vpop.f32.mrf.mxu0
    %v1647 = vadd.f32 %v1597, %v1646
    %1648 = vmatmul.f32.gmra.mxu0 %v1609
    %v1649 = vpop.f32.mrf.mxu0
    %v1650 = vadd.f32 %v1597, %v1649
    %1651 = vmatmul.f32.gmra.mxu0 %v1612
    %v1652 = vpop.f32.mrf.mxu0
    %v1653 = vadd.f32 %v1597, %v1652
    %1654 = vmatmul.f32.gmra.mxu0 %v1615
    %v1655 = vpop.f32.mrf.mxu0
    %v1656 = vadd.f32 %v1597, %v1655
    %1657 = vmatmul.f32.gmra.mxu0 %v1618
    %v1658 = vpop.f32.mrf.mxu0
    %v1659 = vadd.f32 %v1597, %v1658
    %1660 = vmatmul.f32.gmra.mxu0 %v1621
    %v1661 = vpop.f32.mrf.mxu0
    %v1662 = vadd.f32 %v1597, %v1661
    %1663 = vdwg.mxu0
    %1664 = vst.msk [vmem:[%s9] sm:$0xff] %vm137, %v1641
    %1665 = vst.msk [vmem:[%s9 + $0x8] sm:$0xff] %vm137, %v1644
    %1666 = vst.msk [vmem:[%s9 + $0x10] sm:$0xff] %vm137, %v1647
    %1667 = vst.msk [vmem:[%s9 + $0x18] sm:$0xff] %vm137, %v1650
    %1668 = vst.msk [vmem:[%s9 + $0x20] sm:$0xff] %vm137, %v1653
    %1669 = vst.msk [vmem:[%s9 + $0x28] sm:$0xff] %vm137, %v1656
    %1670 = vst.msk [vmem:[%s9 + $0x30] sm:$0xff] %vm137, %v1659
    %1671 = vst.msk [vmem:[%s9 + $0x38] sm:$0xff] %vm137, %v1662
    // Predicated region
    $region46: #{_lambda_.1} parent=1 // pred_check
      _
    $region47: #{_lambda_.1} parent=1 // pred_check_branch
      %1673 = sbr.rel (0) target = $region49
    $region48: #{_lambda_.1} parent=1 // pred_region
      _
    $region49: #{_lambda_.1} parent=1 // pred_fallthru
      _
    // Predicated region
    $region50: #{_lambda_.1} parent=1 // pred_check
      _
    $region51: #{_lambda_.1} parent=1 // pred_check_branch
      %1675 = sbr.rel (0) target = $region53
    $region52: #{_lambda_.1} parent=1 // pred_region
      _
    $region53: #{_lambda_.1} parent=1 // pred_fallthru
      _
    %1676 = vsyncpa [#allocation5], 1
    %1677 = vsyncpa [#allocation7], 1

</llo_original>
